<compile_context>
chip_gen: v7x
topology: tpu7x:2x2x1
jax: 0.10.0
libtpu: 0.0.40
codegen_flags: <defaults>
</compile_context>

<pallas_src>
from functools import partial

import jax
import jax.numpy as jnp
from jax.experimental import pallas as pl
from jax.experimental.pallas import tpu as pltpu


# ----------------------------- Pallas kernel --------------------------------
def _cls_kernel(hid_ref,                        # (TB, S, H) last encoder layer
                masks_ref,                      # (4, TB, S) stacked span masks
                w0_ref, b0_ref,                 # hidden_layer_0: (3H, H), (1, H)
                w1_ref, b1_ref,                 # hidden_layer_1: (2H, H), (1, H)
                w2_ref, b2_ref,                 # hidden_layer_2: (H, H),  (1, H)
                wd_ref, bd_ref,                 # head.dense:     (H, H),  (1, H)
                wo_ref, bo_ref,                 # head.out_proj:  (H, LP), (1, LP)
                out_ref,                        # (TB, LP)
                *, pool_on_mxu: bool):
    H = hid_ref.shape[-1]
    cdt = w0_ref.dtype                          # matmul input dtype (bf16)

    hid = hid_ref[...]                          # native dtype, feeds MXU/VPU

    if pool_on_mxu:
        # All four masked span sums as one batched MXU contraction over S.
        reps = jnp.einsum('kbs,bsh->bkh', masks_ref[...], hid,
                          preferred_element_type=jnp.float32)  # (TB,4,H) f32
        a_rep, b_rep = reps[:, 0, :], reps[:, 1, :]
        a_rep2, b_rep2 = reps[:, 2, :], reps[:, 3, :]
    else:
        # VPU path (review suggestion: benchmark vs the MXU path on v7x).
        hid32 = hid.astype(jnp.float32)

        def pool(k):
            m = masks_ref[k].astype(jnp.float32)          # (TB, S)
            return jnp.sum(hid32 * m[:, :, None], axis=1)  # (TB, H) f32

        a_rep, b_rep, a_rep2, b_rep2 = pool(0), pool(1), pool(2), pool(3)

    def mlp0(xa, xb):
        # concat([xa, xb, xa*xb], -1) @ w0
        #   == xa @ w0[:H] + xb @ w0[H:2H] + (xa*xb) @ w0[2H:3H]
        acc = jnp.dot(xa.astype(cdt), w0_ref[0:H, :],
                      preferred_element_type=jnp.float32)
        acc = acc + jnp.dot(xb.astype(cdt), w0_ref[H:2 * H, :],
                            preferred_element_type=jnp.float32)
        acc = acc + jnp.dot((xa * xb).astype(cdt), w0_ref[2 * H:3 * H, :],
                            preferred_element_type=jnp.float32)
        return jnp.tanh(acc + b0_ref[...])

    v1 = mlp0(a_rep, b_rep)                                # (TB, H) f32
    v2 = mlp0(a_rep2, b_rep2)                              # (TB, H) f32

    # concat([v1, v2], -1) @ w1 == v1 @ w1[:H] + v2 @ w1[H:2H]
    h = jnp.tanh(jnp.dot(v1.astype(cdt), w1_ref[0:H, :],
                         preferred_element_type=jnp.float32)
                 + jnp.dot(v2.astype(cdt), w1_ref[H:2 * H, :],
                           preferred_element_type=jnp.float32)
                 + b1_ref[...])
    h = jnp.tanh(jnp.dot(h.astype(cdt), w2_ref[...],
                         preferred_element_type=jnp.float32) + b2_ref[...])

    # RobertaClassificationHead (dropout = identity in eval mode).
    d = jnp.tanh(jnp.dot(h.astype(cdt), wd_ref[...],
                         preferred_element_type=jnp.float32) + bd_ref[...])
    score = jnp.dot(d.astype(cdt), wo_ref[...],
                    preferred_element_type=jnp.float32) + bo_ref[...]
    out_ref[...] = score.astype(out_ref.dtype)


# --------------------------- sizing helpers ----------------------------------
def _tpu_vmem_capacity_bytes():
    """Per-core VMEM capacity, generation-aware (v7x = 64 MiB)."""
    try:
        return int(pltpu.get_tpu_info().vmem_capacity_bytes)
    except Exception:
        pass
    try:
        kind = jax.devices()[0].device_kind.lower()
        if "v7" in kind:
            return 64 << 20
    except Exception:
        pass
    return 128 << 20            # v5e / v6e


def _pick_batch_tile(B, per_row_bytes, budget_bytes):
    """Largest batch tile (multiple of 8) whose double-buffered tiles fit the
    VMEM budget, preferring a divisor of B (no padding of the big activation)
    and guaranteeing >=2 grid steps for megacore sharding when B >= 16."""
    if B <= 8:
        return B
    cap = int(budget_bytes // max(per_row_bytes, 1))
    cap = max(8, (cap // 8) * 8)
    cap = min(cap, (B // 8) * 8)
    if B >= 16:                               # >=2 grid steps (v7x: 2 TCs/chip)
        cap = min(cap, max(8, ((B // 2) // 8) * 8))
    for tb in range(cap, 7, -8):              # prefer a tile dividing B
        if B % tb == 0:
            return tb
    return cap


# ------------------------------ wrapper --------------------------------------
def roberta_cls_forward(hidden, span_a, span_b, span_a_v2, span_b_v2, params,
                        *, batch_tile=None, span_pool_unit="mxu"):
    """Everything downstream of the encoder, as one gridded Pallas kernel."""
    B, S, H = hidden.shape
    L = params["wo"].shape[1]
    LP = 128 * pl.cdiv(L, 128)                 # lane-dense padded label dim

    wdt = jnp.bfloat16                          # weight dtype (bf16 MXU path)

    # Stack the 4 span masks k-leading -> (4, B, S), in the hidden dtype.
    masks = jnp.stack([span_a, span_b, span_a_v2, span_b_v2],
                      axis=0).astype(hidden.dtype)

    # Lane-dense output: zero-pad out_proj to LP (=128k) columns.
    wo, bo = params["wo"], params["bo"]
    wo_p = jnp.zeros((H, LP), wdt).at[:, :L].set(wo.astype(wdt))
    bo_p = jnp.zeros((1, LP), jnp.float32).at[:, :L].set(bo.astype(jnp.float32))

    weights = (params["w0"].astype(wdt), params["b0"].astype(jnp.float32),
               params["w1"].astype(wdt), params["b1"].astype(jnp.float32),
               params["w2"].astype(wdt), params["b2"].astype(jnp.float32),
               params["wd"].astype(wdt), params["bd"].astype(jnp.float32),
               wo_p, bo_p)

    # -------------------- VMEM budgeting & batch tile ------------------------
    hid_isz = hidden.dtype.itemsize
    mask_isz = masks.dtype.itemsize
    weight_bytes = int(sum(int(w.size) * w.dtype.itemsize for w in weights))
    row_bytes = S * H * hid_isz + 4 * S * mask_isz + LP * 4   # one batch row

    vmem_cap = _tpu_vmem_capacity_bytes()
    tile_budget = vmem_cap - (8 << 20) - weight_bytes - (4 << 20)

    if batch_tile is None:
        batch_tile = _pick_batch_tile(B, 2 * row_bytes, tile_budget)
    TB = int(batch_tile)
    Bp = TB * pl.cdiv(B, TB)

    if Bp != B:                                 # ragged tail only if unavoidable
        hidden = jnp.pad(hidden, ((0, Bp - B), (0, 0), (0, 0)))
        masks = jnp.pad(masks, ((0, 0), (0, Bp - B), (0, 0)))

    tile_bytes = TB * row_bytes
    # Limit: conservative enough to cover double-buffered weights (fallback
    # path), never above physical capacity minus headroom.
    vmem_limit = int(min(vmem_cap - (4 << 20),
                         2 * weight_bytes + 2 * tile_bytes + (8 << 20)))
    vmem_limit = int(max(vmem_limit, 16 << 20))
    vmem_limit = int(min(vmem_limit, vmem_cap - (4 << 20)))

    pool_on_mxu = (span_pool_unit != "vpu")

    # ------------------------------ specs ------------------------------------
    grid = (Bp // TB,)
    hid_spec = pl.BlockSpec((TB, S, H), lambda i: (i, 0, 0))
    mask_spec = pl.BlockSpec((4, TB, S), lambda i: (0, i, 0))
    out_spec = pl.BlockSpec((TB, LP), lambda i: (i, 0))

    def _resident_spec(arr, mode):
        nd = arr.ndim
        if mode is None:
            return pl.BlockSpec(arr.shape, lambda i: (0,) * nd)
        return pl.BlockSpec(arr.shape, lambda i: (0,) * nd, pipeline_mode=mode)

    flops = int(2 * Bp * (4 * S * H          # span pooling
                          + 6 * H * H        # hidden_layer_0 (x2)
                          + 2 * H * H        # hidden_layer_1
                          + H * H            # hidden_layer_2
                          + H * H            # head.dense
                          + H * LP))         # head.out_proj
    cost = pl.CostEstimate(
        flops=flops,
        transcendentals=int(5 * Bp * H),
        bytes_accessed=int(hidden.size * hid_isz + masks.size * mask_isz
                           + weight_bytes + Bp * LP * 4))

    def _run(weight_mode):
        in_specs = [hid_spec, mask_spec] + [_resident_spec(w, weight_mode)
                                            for w in weights]
        fn = pl.pallas_call(
            partial(_cls_kernel, pool_on_mxu=pool_on_mxu),
            out_shape=jax.ShapeDtypeStruct((Bp, LP), jnp.float32),
            grid_spec=pltpu.PrefetchScalarGridSpec(
                num_scalar_prefetch=0,
                grid=grid,
                in_specs=in_specs,
                out_specs=out_spec),
            compiler_params=pltpu.CompilerParams(
                dimension_semantics=("parallel",),
                vmem_limit_bytes=vmem_limit),
            cost_estimate=cost,
        )
        return fn(hidden, masks, *weights)

    try:
        # Single-buffer the resident weights (index_map is constant, so the
        # second pipeline buffer is pure waste).
        out = _run(pl.Buffered(1))
    except Exception:
        # Fallback for jax versions without BlockSpec pipeline_mode support.
        out = _run(None)
    return out[:B, :L]


# ------------------------------ glue / setup --------------------------------
def init_params(key, hidden_dim, num_labels, vocab_size):
    ks = jax.random.split(key, 12)
    s = 0.02

    def w(k, shape):
        return (s * jax.random.normal(k, shape)).astype(jnp.float32)

    return {
        # TODO(synk): full pretrained roberta-large encoder (24-layer
        # transformer) is not implemented; a deterministic embedding table
        # stands in as the producer of the last-layer hidden states.
        "emb": w(ks[0], (vocab_size, hidden_dim)),
        "w0": w(ks[1], (3 * hidden_dim, hidden_dim)),
        "b0": w(ks[2], (1, hidden_dim)),
        "w1": w(ks[3], (2 * hidden_dim, hidden_dim)),
        "b1": w(ks[4], (1, hidden_dim)),
        "w2": w(ks[5], (hidden_dim, hidden_dim)),
        "b2": w(ks[6], (1, hidden_dim)),
        "wd": w(ks[7], (hidden_dim, hidden_dim)),
        "bd": w(ks[8], (1, hidden_dim)),
        "wo": w(ks[9], (hidden_dim, num_labels)),
        "bo": w(ks[10], (1, num_labels)),
    }


def reference_forward(hidden, ma, mb, ma2, mb2, p):
    def span(m):
        return jnp.sum(hidden * m[:, :, None], axis=1)

    a, b, a2, b2 = span(ma), span(mb), span(ma2), span(mb2)

    def mlp0(xa, xb):
        c = jnp.concatenate([xa, xb, xa * xb], axis=1)
        return jnp.tanh(c @ p["w0"] + p["b0"])

    mlp_in = jnp.concatenate([mlp0(a, b), mlp0(a2, b2)], axis=1)
    h = jnp.tanh(jnp.tanh(mlp_in @ p["w1"] + p["b1"]) @ p["w2"] + p["b2"])
    d = jnp.tanh(h @ p["wd"] + p["bd"])
    return d @ p["wo"] + p["bo"]


if __name__ == "__main__":
    B, S, H = 16, 16, 128          # small shapes: batch, seq, hidden
    NUM_LABELS = 8
    VOCAB = 100

    key = jax.random.PRNGKey(0)
    k_ids, k_mask, k_params, ka, kb, ka2, kb2 = jax.random.split(key, 7)

    params = init_params(k_params, H, NUM_LABELS, VOCAB)

    input_ids = jax.random.randint(k_ids, (B, S), 0, VOCAB, dtype=jnp.int32)
    input_mask = jnp.ones((B, S), jnp.float32)
    span_a_mask = (jax.random.uniform(ka, (B, S)) < 0.3).astype(jnp.float32)
    span_b_mask = (jax.random.uniform(kb, (B, S)) < 0.3).astype(jnp.float32)
    span_a_mask_v2 = (jax.random.uniform(ka2, (B, S)) < 0.3).astype(jnp.float32)
    span_b_mask_v2 = (jax.random.uniform(kb2, (B, S)) < 0.3).astype(jnp.float32)

    # Encoder stand-in (plain JAX glue): embedding lookup masked by input_mask.
    output_last_layer_tensor3 = (params["emb"][input_ids]
                                 * input_mask[:, :, None]).astype(jnp.float32)

    # Auto-derived batch tile (budget-based) -> TB=8, 2 grid steps here.
    score = roberta_cls_forward(output_last_layer_tensor3,
                                span_a_mask, span_b_mask,
                                span_a_mask_v2, span_b_mask_v2, params)
    score = jax.block_until_ready(score)

    # Reference uses the same bf16-quantized weights (upcast to f32) so the
    # check isolates kernel math rather than weight quantization.
    p_ref = dict(params)
    for name in ("w0", "w1", "w2", "wd", "wo"):
        p_ref[name] = params[name].astype(jnp.bfloat16).astype(jnp.float32)
    ref = reference_forward(output_last_layer_tensor3,
                            span_a_mask, span_b_mask,
                            span_a_mask_v2, span_b_mask_v2, p_ref)

    assert score.shape == (B, NUM_LABELS)
    assert jnp.allclose(score, ref, atol=3e-3, rtol=3e-2), (
        float(jnp.max(jnp.abs(score - ref))))
    print("KERNEL_OK")
</pallas_src>

<mosaic_0001>
module attributes {stable_mosaic.version = 11 : i64} {
  func.func @_cls_kernel(%arg0: i32, %arg1: memref<8x16x128xf32, #tpu.memory_space<vmem>>, %arg2: memref<4x8x16xf32, #tpu.memory_space<vmem>>, %arg3: memref<384x128xbf16, #tpu.memory_space<vmem>>, %arg4: memref<1x128xf32, #tpu.memory_space<vmem>>, %arg5: memref<256x128xbf16, #tpu.memory_space<vmem>>, %arg6: memref<1x128xf32, #tpu.memory_space<vmem>>, %arg7: memref<128x128xbf16, #tpu.memory_space<vmem>>, %arg8: memref<1x128xf32, #tpu.memory_space<vmem>>, %arg9: memref<128x128xbf16, #tpu.memory_space<vmem>>, %arg10: memref<1x128xf32, #tpu.memory_space<vmem>>, %arg11: memref<128x128xbf16, #tpu.memory_space<vmem>>, %arg12: memref<1x128xf32, #tpu.memory_space<vmem>>, %arg13: memref<8x128xf32, #tpu.memory_space<vmem>>) attributes {dimension_semantics = [#tpu.dimension_semantics<parallel>], iteration_bounds = array<i64: 2>, scalar_prefetch = 0 : i64, scratch_operands = 0 : i64, tpu.core_type = #tpu.core_type<tc>, window_params = [{transform_indices = @transform_0, window_bounds = array<i64: 8, 16, 128>}, {transform_indices = @transform_1, window_bounds = array<i64: 4, 8, 16>}, {pipeline_mode = #tpu.pipeline_mode<synchronous>, transform_indices = @transform_2, window_bounds = array<i64: 384, 128>}, {pipeline_mode = #tpu.pipeline_mode<synchronous>, transform_indices = @transform_3, window_bounds = array<i64: 1, 128>}, {pipeline_mode = #tpu.pipeline_mode<synchronous>, transform_indices = @transform_4, window_bounds = array<i64: 256, 128>}, {pipeline_mode = #tpu.pipeline_mode<synchronous>, transform_indices = @transform_5, window_bounds = array<i64: 1, 128>}, {pipeline_mode = #tpu.pipeline_mode<synchronous>, transform_indices = @transform_6, window_bounds = array<i64: 128, 128>}, {pipeline_mode = #tpu.pipeline_mode<synchronous>, transform_indices = @transform_7, window_bounds = array<i64: 1, 128>}, {pipeline_mode = #tpu.pipeline_mode<synchronous>, transform_indices = @transform_8, window_bounds = array<i64: 128, 128>}, {pipeline_mode = #tpu.pipeline_mode<synchronous>, transform_indices = @transform_9, window_bounds = array<i64: 1, 128>}, {pipeline_mode = #tpu.pipeline_mode<synchronous>, transform_indices = @transform_10, window_bounds = array<i64: 128, 128>}, {pipeline_mode = #tpu.pipeline_mode<synchronous>, transform_indices = @transform_11, window_bounds = array<i64: 1, 128>}, {transform_indices = @transform_12, window_bounds = array<i64: 8, 128>}]} {
    %c0 = arith.constant 0 : index
    %c0_0 = arith.constant 0 : index
    %c0_1 = arith.constant 0 : index
    %0 = vector.load %arg1[%c0, %c0_0, %c0_1] : memref<8x16x128xf32, #tpu.memory_space<vmem>>, vector<8x16x128xf32>
    %c0_2 = arith.constant 0 : index
    %c0_3 = arith.constant 0 : index
    %c0_4 = arith.constant 0 : index
    %1 = vector.load %arg2[%c0_2, %c0_3, %c0_4] : memref<4x8x16xf32, #tpu.memory_space<vmem>>, vector<4x8x16xf32>
    "tpu.trace_start"() <{level = 10 : i32, message = "kbs,bsh->bkh"}> : () -> ()
    %cst = arith.constant dense<0.000000e+00> : vector<8x4x128xf32>
    %2 = tpu.matmul %1, %0, %cst {dimension_numbers = #tpu.dot_dimension_numbers<[2], [1], [0], [2], [0, 1, 0, 0, 1, 2], [1], [0]>} : vector<4x8x16xf32>, vector<8x16x128xf32>, vector<8x4x128xf32> -> vector<8x4x128xf32>
    "tpu.trace_stop"() : () -> ()
    %3 = vector.extract_strided_slice %2 {offsets = [0, 0, 0], sizes = [8, 1, 128], strides = [1, 1, 1]} : vector<8x4x128xf32> to vector<8x1x128xf32>
    %4 = vector.shape_cast %3 : vector<8x1x128xf32> to vector<8x128xf32>
    %5 = vector.extract_strided_slice %2 {offsets = [0, 1, 0], sizes = [8, 1, 128], strides = [1, 1, 1]} : vector<8x4x128xf32> to vector<8x1x128xf32>
    %6 = vector.shape_cast %5 : vector<8x1x128xf32> to vector<8x128xf32>
    %7 = vector.extract_strided_slice %2 {offsets = [0, 2, 0], sizes = [8, 1, 128], strides = [1, 1, 1]} : vector<8x4x128xf32> to vector<8x1x128xf32>
    %8 = vector.shape_cast %7 : vector<8x1x128xf32> to vector<8x128xf32>
    %9 = vector.extract_strided_slice %2 {offsets = [0, 3, 0], sizes = [8, 1, 128], strides = [1, 1, 1]} : vector<8x4x128xf32> to vector<8x1x128xf32>
    %10 = vector.shape_cast %9 : vector<8x1x128xf32> to vector<8x128xf32>
    %11 = arith.truncf %4 : vector<8x128xf32> to vector<8x128xbf16>
    %c0_5 = arith.constant 0 : index
    %c0_6 = arith.constant 0 : index
    %12 = vector.load %arg3[%c0_5, %c0_6] : memref<384x128xbf16, #tpu.memory_space<vmem>>, vector<128x128xbf16>
    %cst_7 = arith.constant dense<0.000000e+00> : vector<8x128xf32>
    %13 = tpu.matmul %11, %12, %cst_7 {dimension_numbers = #tpu.dot_dimension_numbers<[1], [0], [0], [1], [0, 0, 1, 1], [], []>} : vector<8x128xbf16>, vector<128x128xbf16>, vector<8x128xf32> -> vector<8x128xf32>
    %14 = arith.truncf %6 : vector<8x128xf32> to vector<8x128xbf16>
    %c128 = arith.constant 128 : index
    %c0_8 = arith.constant 0 : index
    %15 = vector.load %arg3[%c128, %c0_8] : memref<384x128xbf16, #tpu.memory_space<vmem>>, vector<128x128xbf16>
    %cst_9 = arith.constant dense<0.000000e+00> : vector<8x128xf32>
    %16 = tpu.matmul %14, %15, %cst_9 {dimension_numbers = #tpu.dot_dimension_numbers<[1], [0], [0], [1], [0, 0, 1, 1], [], []>} : vector<8x128xbf16>, vector<128x128xbf16>, vector<8x128xf32> -> vector<8x128xf32>
    %17 = arith.addf %13, %16 : vector<8x128xf32>
    %18 = arith.mulf %4, %6 : vector<8x128xf32>
    %19 = arith.truncf %18 : vector<8x128xf32> to vector<8x128xbf16>
    %c256 = arith.constant 256 : index
    %c0_10 = arith.constant 0 : index
    %20 = vector.load %arg3[%c256, %c0_10] : memref<384x128xbf16, #tpu.memory_space<vmem>>, vector<128x128xbf16>
    %cst_11 = arith.constant dense<0.000000e+00> : vector<8x128xf32>
    %21 = tpu.matmul %19, %20, %cst_11 {dimension_numbers = #tpu.dot_dimension_numbers<[1], [0], [0], [1], [0, 0, 1, 1], [], []>} : vector<8x128xbf16>, vector<128x128xbf16>, vector<8x128xf32> -> vector<8x128xf32>
    %22 = arith.addf %17, %21 : vector<8x128xf32>
    %c0_12 = arith.constant 0 : index
    %c0_13 = arith.constant 0 : index
    %23 = vector.load %arg4[%c0_12, %c0_13] : memref<1x128xf32, #tpu.memory_space<vmem>>, vector<1x128xf32>
    %24 = vector.broadcast %23 : vector<1x128xf32> to vector<8x128xf32>
    %25 = arith.addf %22, %24 : vector<8x128xf32>
    %26 = math.tanh %25 : vector<8x128xf32>
    %27 = arith.truncf %8 : vector<8x128xf32> to vector<8x128xbf16>
    %c0_14 = arith.constant 0 : index
    %c0_15 = arith.constant 0 : index
    %28 = vector.load %arg3[%c0_14, %c0_15] : memref<384x128xbf16, #tpu.memory_space<vmem>>, vector<128x128xbf16>
    %cst_16 = arith.constant dense<0.000000e+00> : vector<8x128xf32>
    %29 = tpu.matmul %27, %28, %cst_16 {dimension_numbers = #tpu.dot_dimension_numbers<[1], [0], [0], [1], [0, 0, 1, 1], [], []>} : vector<8x128xbf16>, vector<128x128xbf16>, vector<8x128xf32> -> vector<8x128xf32>
    %30 = arith.truncf %10 : vector<8x128xf32> to vector<8x128xbf16>
    %c128_17 = arith.constant 128 : index
    %c0_18 = arith.constant 0 : index
    %31 = vector.load %arg3[%c128_17, %c0_18] : memref<384x128xbf16, #tpu.memory_space<vmem>>, vector<128x128xbf16>
    %cst_19 = arith.constant dense<0.000000e+00> : vector<8x128xf32>
    %32 = tpu.matmul %30, %31, %cst_19 {dimension_numbers = #tpu.dot_dimension_numbers<[1], [0], [0], [1], [0, 0, 1, 1], [], []>} : vector<8x128xbf16>, vector<128x128xbf16>, vector<8x128xf32> -> vector<8x128xf32>
    %33 = arith.addf %29, %32 : vector<8x128xf32>
    %34 = arith.mulf %8, %10 : vector<8x128xf32>
    %35 = arith.truncf %34 : vector<8x128xf32> to vector<8x128xbf16>
    %c256_20 = arith.constant 256 : index
    %c0_21 = arith.constant 0 : index
    %36 = vector.load %arg3[%c256_20, %c0_21] : memref<384x128xbf16, #tpu.memory_space<vmem>>, vector<128x128xbf16>
    %cst_22 = arith.constant dense<0.000000e+00> : vector<8x128xf32>
    %37 = tpu.matmul %35, %36, %cst_22 {dimension_numbers = #tpu.dot_dimension_numbers<[1], [0], [0], [1], [0, 0, 1, 1], [], []>} : vector<8x128xbf16>, vector<128x128xbf16>, vector<8x128xf32> -> vector<8x128xf32>
    %38 = arith.addf %33, %37 : vector<8x128xf32>
    %c0_23 = arith.constant 0 : index
    %c0_24 = arith.constant 0 : index
    %39 = vector.load %arg4[%c0_23, %c0_24] : memref<1x128xf32, #tpu.memory_space<vmem>>, vector<1x128xf32>
    %40 = vector.broadcast %39 : vector<1x128xf32> to vector<8x128xf32>
    %41 = arith.addf %38, %40 : vector<8x128xf32>
    %42 = math.tanh %41 : vector<8x128xf32>
    %43 = arith.truncf %26 : vector<8x128xf32> to vector<8x128xbf16>
    %c0_25 = arith.constant 0 : index
    %c0_26 = arith.constant 0 : index
    %44 = vector.load %arg5[%c0_25, %c0_26] : memref<256x128xbf16, #tpu.memory_space<vmem>>, vector<128x128xbf16>
    %cst_27 = arith.constant dense<0.000000e+00> : vector<8x128xf32>
    %45 = tpu.matmul %43, %44, %cst_27 {dimension_numbers = #tpu.dot_dimension_numbers<[1], [0], [0], [1], [0, 0, 1, 1], [], []>} : vector<8x128xbf16>, vector<128x128xbf16>, vector<8x128xf32> -> vector<8x128xf32>
    %46 = arith.truncf %42 : vector<8x128xf32> to vector<8x128xbf16>
    %c128_28 = arith.constant 128 : index
    %c0_29 = arith.constant 0 : index
    %47 = vector.load %arg5[%c128_28, %c0_29] : memref<256x128xbf16, #tpu.memory_space<vmem>>, vector<128x128xbf16>
    %cst_30 = arith.constant dense<0.000000e+00> : vector<8x128xf32>
    %48 = tpu.matmul %46, %47, %cst_30 {dimension_numbers = #tpu.dot_dimension_numbers<[1], [0], [0], [1], [0, 0, 1, 1], [], []>} : vector<8x128xbf16>, vector<128x128xbf16>, vector<8x128xf32> -> vector<8x128xf32>
    %49 = arith.addf %45, %48 : vector<8x128xf32>
    %c0_31 = arith.constant 0 : index
    %c0_32 = arith.constant 0 : index
    %50 = vector.load %arg6[%c0_31, %c0_32] : memref<1x128xf32, #tpu.memory_space<vmem>>, vector<1x128xf32>
    %51 = vector.broadcast %50 : vector<1x128xf32> to vector<8x128xf32>
    %52 = arith.addf %49, %51 : vector<8x128xf32>
    %53 = math.tanh %52 : vector<8x128xf32>
    %54 = arith.truncf %53 : vector<8x128xf32> to vector<8x128xbf16>
    %c0_33 = arith.constant 0 : index
    %c0_34 = arith.constant 0 : index
    %55 = vector.load %arg7[%c0_33, %c0_34] : memref<128x128xbf16, #tpu.memory_space<vmem>>, vector<128x128xbf16>
    %cst_35 = arith.constant dense<0.000000e+00> : vector<8x128xf32>
    %56 = tpu.matmul %54, %55, %cst_35 {dimension_numbers = #tpu.dot_dimension_numbers<[1], [0], [0], [1], [0, 0, 1, 1], [], []>} : vector<8x128xbf16>, vector<128x128xbf16>, vector<8x128xf32> -> vector<8x128xf32>
    %c0_36 = arith.constant 0 : index
    %c0_37 = arith.constant 0 : index
    %57 = vector.load %arg8[%c0_36, %c0_37] : memref<1x128xf32, #tpu.memory_space<vmem>>, vector<1x128xf32>
    %58 = vector.broadcast %57 : vector<1x128xf32> to vector<8x128xf32>
    %59 = arith.addf %56, %58 : vector<8x128xf32>
    %60 = math.tanh %59 : vector<8x128xf32>
    %61 = arith.truncf %60 : vector<8x128xf32> to vector<8x128xbf16>
    %c0_38 = arith.constant 0 : index
    %c0_39 = arith.constant 0 : index
    %62 = vector.load %arg9[%c0_38, %c0_39] : memref<128x128xbf16, #tpu.memory_space<vmem>>, vector<128x128xbf16>
    %cst_40 = arith.constant dense<0.000000e+00> : vector<8x128xf32>
    %63 = tpu.matmul %61, %62, %cst_40 {dimension_numbers = #tpu.dot_dimension_numbers<[1], [0], [0], [1], [0, 0, 1, 1], [], []>} : vector<8x128xbf16>, vector<128x128xbf16>, vector<8x128xf32> -> vector<8x128xf32>
    %c0_41 = arith.constant 0 : index
    %c0_42 = arith.constant 0 : index
    %64 = vector.load %arg10[%c0_41, %c0_42] : memref<1x128xf32, #tpu.memory_space<vmem>>, vector<1x128xf32>
    %65 = vector.broadcast %64 : vector<1x128xf32> to vector<8x128xf32>
    %66 = arith.addf %63, %65 : vector<8x128xf32>
    %67 = math.tanh %66 : vector<8x128xf32>
    %68 = arith.truncf %67 : vector<8x128xf32> to vector<8x128xbf16>
    %c0_43 = arith.constant 0 : index
    %c0_44 = arith.constant 0 : index
    %69 = vector.load %arg11[%c0_43, %c0_44] : memref<128x128xbf16, #tpu.memory_space<vmem>>, vector<128x128xbf16>
    %cst_45 = arith.constant dense<0.000000e+00> : vector<8x128xf32>
    %70 = tpu.matmul %68, %69, %cst_45 {dimension_numbers = #tpu.dot_dimension_numbers<[1], [0], [0], [1], [0, 0, 1, 1], [], []>} : vector<8x128xbf16>, vector<128x128xbf16>, vector<8x128xf32> -> vector<8x128xf32>
    %c0_46 = arith.constant 0 : index
    %c0_47 = arith.constant 0 : index
    %71 = vector.load %arg12[%c0_46, %c0_47] : memref<1x128xf32, #tpu.memory_space<vmem>>, vector<1x128xf32>
    %72 = vector.broadcast %71 : vector<1x128xf32> to vector<8x128xf32>
    %73 = arith.addf %70, %72 : vector<8x128xf32>
    %c0_48 = arith.constant 0 : index
    %c0_49 = arith.constant 0 : index
    %74 = vector.load %arg13[%c0_48, %c0_49] : memref<8x128xf32, #tpu.memory_space<vmem>>, vector<8x128xf32>
    tpu.vector_store %arg13[%c0_48, %c0_49], %73 {strides = array<i32>} : memref<8x128xf32, #tpu.memory_space<vmem>>, vector<8x128xf32>,
    return
  }
  func.func @transform_0(%arg0: i32) -> (i32, i32, i32) {
    %c0_i32 = arith.constant 0 : i32
    %c0_i32_0 = arith.constant 0 : i32
    %c0_i32_1 = arith.constant 0 : i32
    return %arg0, %c0_i32, %c0_i32_0 : i32, i32, i32
  }
  func.func @transform_1(%arg0: i32) -> (i32, i32, i32) {
    %c0_i32 = arith.constant 0 : i32
    %c0_i32_0 = arith.constant 0 : i32
    %c0_i32_1 = arith.constant 0 : i32
    return %c0_i32, %arg0, %c0_i32_0 : i32, i32, i32
  }
  func.func @transform_2(%arg0: i32) -> (i32, i32) {
    %c0_i32 = arith.constant 0 : i32
    %c0_i32_0 = arith.constant 0 : i32
    %c0_i32_1 = arith.constant 0 : i32
    return %c0_i32, %c0_i32_0 : i32, i32
  }
  func.func @transform_3(%arg0: i32) -> (i32, i32) {
    %c0_i32 = arith.constant 0 : i32
    %c0_i32_0 = arith.constant 0 : i32
    %c0_i32_1 = arith.constant 0 : i32
    return %c0_i32, %c0_i32_0 : i32, i32
  }
  func.func @transform_4(%arg0: i32) -> (i32, i32) {
    %c0_i32 = arith.constant 0 : i32
    %c0_i32_0 = arith.constant 0 : i32
    %c0_i32_1 = arith.constant 0 : i32
    return %c0_i32, %c0_i32_0 : i32, i32
  }
  func.func @transform_5(%arg0: i32) -> (i32, i32) {
    %c0_i32 = arith.constant 0 : i32
    %c0_i32_0 = arith.constant 0 : i32
    %c0_i32_1 = arith.constant 0 : i32
    return %c0_i32, %c0_i32_0 : i32, i32
  }
  func.func @transform_6(%arg0: i32) -> (i32, i32) {
    %c0_i32 = arith.constant 0 : i32
    %c0_i32_0 = arith.constant 0 : i32
    %c0_i32_1 = arith.constant 0 : i32
    return %c0_i32, %c0_i32_0 : i32, i32
  }
  func.func @transform_7(%arg0: i32) -> (i32, i32) {
    %c0_i32 = arith.constant 0 : i32
    %c0_i32_0 = arith.constant 0 : i32
    %c0_i32_1 = arith.constant 0 : i32
    return %c0_i32, %c0_i32_0 : i32, i32
  }
  func.func @transform_8(%arg0: i32) -> (i32, i32) {
    %c0_i32 = arith.constant 0 : i32
    %c0_i32_0 = arith.constant 0 : i32
    %c0_i32_1 = arith.constant 0 : i32
    return %c0_i32, %c0_i32_0 : i32, i32
  }
  func.func @transform_9(%arg0: i32) -> (i32, i32) {
    %c0_i32 = arith.constant 0 : i32
    %c0_i32_0 = arith.constant 0 : i32
    %c0_i32_1 = arith.constant 0 : i32
    return %c0_i32, %c0_i32_0 : i32, i32
  }
  func.func @transform_10(%arg0: i32) -> (i32, i32) {
    %c0_i32 = arith.constant 0 : i32
    %c0_i32_0 = arith.constant 0 : i32
    %c0_i32_1 = arith.constant 0 : i32
    return %c0_i32, %c0_i32_0 : i32, i32
  }
  func.func @transform_11(%arg0: i32) -> (i32, i32) {
    %c0_i32 = arith.constant 0 : i32
    %c0_i32_0 = arith.constant 0 : i32
    %c0_i32_1 = arith.constant 0 : i32
    return %c0_i32, %c0_i32_0 : i32, i32
  }
  func.func @transform_12(%arg0: i32) -> (i32, i32) {
    %c0_i32 = arith.constant 0 : i32
    %c0_i32_0 = arith.constant 0 : i32
    return %arg0, %c0_i32 : i32, i32
  }
}

module attributes {stable_mosaic.version = 11 : i64} {
  func.func @_cls_kernel(%arg0: i32, %arg1: memref<8x16x128xf32, #tpu.memory_space<vmem>>, %arg2: memref<4x8x16xf32, #tpu.memory_space<vmem>>, %arg3: memref<384x128xbf16, #tpu.memory_space<vmem>>, %arg4: memref<1x128xf32, #tpu.memory_space<vmem>>, %arg5: memref<256x128xbf16, #tpu.memory_space<vmem>>, %arg6: memref<1x128xf32, #tpu.memory_space<vmem>>, %arg7: memref<128x128xbf16, #tpu.memory_space<vmem>>, %arg8: memref<1x128xf32, #tpu.memory_space<vmem>>, %arg9: memref<128x128xbf16, #tpu.memory_space<vmem>>, %arg10: memref<1x128xf32, #tpu.memory_space<vmem>>, %arg11: memref<128x128xbf16, #tpu.memory_space<vmem>>, %arg12: memref<1x128xf32, #tpu.memory_space<vmem>>, %arg13: memref<8x128xf32, #tpu.memory_space<vmem>>) attributes {dimension_semantics = [#tpu.dimension_semantics<parallel>], iteration_bounds = array<i64: 2>, scalar_prefetch = 0 : i64, scratch_operands = 0 : i64, tpu.core_type = #tpu.core_type<tc>, window_params = [{transform_indices = @transform_0, window_bounds = array<i64: 8, 16, 128>}, {transform_indices = @transform_1, window_bounds = array<i64: 4, 8, 16>}, {pipeline_mode = #tpu.pipeline_mode<synchronous>, transform_indices = @transform_2, window_bounds = array<i64: 384, 128>}, {pipeline_mode = #tpu.pipeline_mode<synchronous>, transform_indices = @transform_3, window_bounds = array<i64: 1, 128>}, {pipeline_mode = #tpu.pipeline_mode<synchronous>, transform_indices = @transform_4, window_bounds = array<i64: 256, 128>}, {pipeline_mode = #tpu.pipeline_mode<synchronous>, transform_indices = @transform_5, window_bounds = array<i64: 1, 128>}, {pipeline_mode = #tpu.pipeline_mode<synchronous>, transform_indices = @transform_6, window_bounds = array<i64: 128, 128>}, {pipeline_mode = #tpu.pipeline_mode<synchronous>, transform_indices = @transform_7, window_bounds = array<i64: 1, 128>}, {pipeline_mode = #tpu.pipeline_mode<synchronous>, transform_indices = @transform_8, window_bounds = array<i64: 128, 128>}, {pipeline_mode = #tpu.pipeline_mode<synchronous>, transform_indices = @transform_9, window_bounds = array<i64: 1, 128>}, {pipeline_mode = #tpu.pipeline_mode<synchronous>, transform_indices = @transform_10, window_bounds = array<i64: 128, 128>}, {pipeline_mode = #tpu.pipeline_mode<synchronous>, transform_indices = @transform_11, window_bounds = array<i64: 1, 128>}, {transform_indices = @transform_12, window_bounds = array<i64: 8, 128>}]} {
    %c0 = arith.constant 0 : index
    %c0_0 = arith.constant 0 : index
    %c0_1 = arith.constant 0 : index
    %0 = vector.load %arg1[%c0, %c0_0, %c0_1] : memref<8x16x128xf32, #tpu.memory_space<vmem>>, vector<8x16x128xf32>
    %c0_2 = arith.constant 0 : index
    %c0_3 = arith.constant 0 : index
    %c0_4 = arith.constant 0 : index
    %1 = vector.load %arg2[%c0_2, %c0_3, %c0_4] : memref<4x8x16xf32, #tpu.memory_space<vmem>>, vector<4x8x16xf32>
    "tpu.trace_start"() <{level = 10 : i32, message = "kbs,bsh->bkh"}> : () -> ()
    %cst = arith.constant dense<0.000000e+00> : vector<8x4x128xf32>
    %2 = tpu.matmul %1, %0, %cst {dimension_numbers = #tpu.dot_dimension_numbers<[2], [1], [0], [2], [0, 1, 0, 0, 1, 2], [1], [0]>} : vector<4x8x16xf32>, vector<8x16x128xf32>, vector<8x4x128xf32> -> vector<8x4x128xf32>
    "tpu.trace_stop"() : () -> ()
    %3 = vector.extract_strided_slice %2 {offsets = [0, 0, 0], sizes = [8, 1, 128], strides = [1, 1, 1]} : vector<8x4x128xf32> to vector<8x1x128xf32>
    %4 = vector.shape_cast %3 : vector<8x1x128xf32> to vector<8x128xf32>
    %5 = vector.extract_strided_slice %2 {offsets = [0, 1, 0], sizes = [8, 1, 128], strides = [1, 1, 1]} : vector<8x4x128xf32> to vector<8x1x128xf32>
    %6 = vector.shape_cast %5 : vector<8x1x128xf32> to vector<8x128xf32>
    %7 = vector.extract_strided_slice %2 {offsets = [0, 2, 0], sizes = [8, 1, 128], strides = [1, 1, 1]} : vector<8x4x128xf32> to vector<8x1x128xf32>
    %8 = vector.shape_cast %7 : vector<8x1x128xf32> to vector<8x128xf32>
    %9 = vector.extract_strided_slice %2 {offsets = [0, 3, 0], sizes = [8, 1, 128], strides = [1, 1, 1]} : vector<8x4x128xf32> to vector<8x1x128xf32>
    %10 = vector.shape_cast %9 : vector<8x1x128xf32> to vector<8x128xf32>
    %11 = arith.truncf %4 : vector<8x128xf32> to vector<8x128xbf16>
    %c0_5 = arith.constant 0 : index
    %c0_6 = arith.constant 0 : index
    %12 = vector.load %arg3[%c0_5, %c0_6] : memref<384x128xbf16, #tpu.memory_space<vmem>>, vector<128x128xbf16>
    %cst_7 = arith.constant dense<0.000000e+00> : vector<8x128xf32>
    %13 = tpu.matmul %11, %12, %cst_7 {dimension_numbers = #tpu.dot_dimension_numbers<[1], [0], [0], [1], [0, 0, 1, 1], [], []>} : vector<8x128xbf16>, vector<128x128xbf16>, vector<8x128xf32> -> vector<8x128xf32>
    %14 = arith.truncf %6 : vector<8x128xf32> to vector<8x128xbf16>
    %c128 = arith.constant 128 : index
    %c0_8 = arith.constant 0 : index
    %15 = vector.load %arg3[%c128, %c0_8] : memref<384x128xbf16, #tpu.memory_space<vmem>>, vector<128x128xbf16>
    %cst_9 = arith.constant dense<0.000000e+00> : vector<8x128xf32>
    %16 = tpu.matmul %14, %15, %cst_9 {dimension_numbers = #tpu.dot_dimension_numbers<[1], [0], [0], [1], [0, 0, 1, 1], [], []>} : vector<8x128xbf16>, vector<128x128xbf16>, vector<8x128xf32> -> vector<8x128xf32>
    %17 = arith.addf %13, %16 : vector<8x128xf32>
    %18 = arith.mulf %4, %6 : vector<8x128xf32>
    %19 = arith.truncf %18 : vector<8x128xf32> to vector<8x128xbf16>
    %c256 = arith.constant 256 : index
    %c0_10 = arith.constant 0 : index
    %20 = vector.load %arg3[%c256, %c0_10] : memref<384x128xbf16, #tpu.memory_space<vmem>>, vector<128x128xbf16>
    %cst_11 = arith.constant dense<0.000000e+00> : vector<8x128xf32>
    %21 = tpu.matmul %19, %20, %cst_11 {dimension_numbers = #tpu.dot_dimension_numbers<[1], [0], [0], [1], [0, 0, 1, 1], [], []>} : vector<8x128xbf16>, vector<128x128xbf16>, vector<8x128xf32> -> vector<8x128xf32>
    %22 = arith.addf %17, %21 : vector<8x128xf32>
    %c0_12 = arith.constant 0 : index
    %c0_13 = arith.constant 0 : index
    %23 = vector.load %arg4[%c0_12, %c0_13] : memref<1x128xf32, #tpu.memory_space<vmem>>, vector<1x128xf32>
    %24 = vector.broadcast %23 : vector<1x128xf32> to vector<8x128xf32>
    %25 = arith.addf %22, %24 : vector<8x128xf32>
    %26 = math.tanh %25 : vector<8x128xf32>
    %27 = arith.truncf %8 : vector<8x128xf32> to vector<8x128xbf16>
    %c0_14 = arith.constant 0 : index
    %c0_15 = arith.constant 0 : index
    %28 = vector.load %arg3[%c0_14, %c0_15] : memref<384x128xbf16, #tpu.memory_space<vmem>>, vector<128x128xbf16>
    %cst_16 = arith.constant dense<0.000000e+00> : vector<8x128xf32>
    %29 = tpu.matmul %27, %28, %cst_16 {dimension_numbers = #tpu.dot_dimension_numbers<[1], [0], [0], [1], [0, 0, 1, 1], [], []>} : vector<8x128xbf16>, vector<128x128xbf16>, vector<8x128xf32> -> vector<8x128xf32>
    %30 = arith.truncf %10 : vector<8x128xf32> to vector<8x128xbf16>
    %c128_17 = arith.constant 128 : index
    %c0_18 = arith.constant 0 : index
    %31 = vector.load %arg3[%c128_17, %c0_18] : memref<384x128xbf16, #tpu.memory_space<vmem>>, vector<128x128xbf16>
    %cst_19 = arith.constant dense<0.000000e+00> : vector<8x128xf32>
    %32 = tpu.matmul %30, %31, %cst_19 {dimension_numbers = #tpu.dot_dimension_numbers<[1], [0], [0], [1], [0, 0, 1, 1], [], []>} : vector<8x128xbf16>, vector<128x128xbf16>, vector<8x128xf32> -> vector<8x128xf32>
    %33 = arith.addf %29, %32 : vector<8x128xf32>
    %34 = arith.mulf %8, %10 : vector<8x128xf32>
    %35 = arith.truncf %34 : vector<8x128xf32> to vector<8x128xbf16>
    %c256_20 = arith.constant 256 : index
    %c0_21 = arith.constant 0 : index
    %36 = vector.load %arg3[%c256_20, %c0_21] : memref<384x128xbf16, #tpu.memory_space<vmem>>, vector<128x128xbf16>
    %cst_22 = arith.constant dense<0.000000e+00> : vector<8x128xf32>
    %37 = tpu.matmul %35, %36, %cst_22 {dimension_numbers = #tpu.dot_dimension_numbers<[1], [0], [0], [1], [0, 0, 1, 1], [], []>} : vector<8x128xbf16>, vector<128x128xbf16>, vector<8x128xf32> -> vector<8x128xf32>
    %38 = arith.addf %33, %37 : vector<8x128xf32>
    %c0_23 = arith.constant 0 : index
    %c0_24 = arith.constant 0 : index
    %39 = vector.load %arg4[%c0_23, %c0_24] : memref<1x128xf32, #tpu.memory_space<vmem>>, vector<1x128xf32>
    %40 = vector.broadcast %39 : vector<1x128xf32> to vector<8x128xf32>
    %41 = arith.addf %38, %40 : vector<8x128xf32>
    %42 = math.tanh %41 : vector<8x128xf32>
    %43 = arith.truncf %26 : vector<8x128xf32> to vector<8x128xbf16>
    %c0_25 = arith.constant 0 : index
    %c0_26 = arith.constant 0 : index
    %44 = vector.load %arg5[%c0_25, %c0_26] : memref<256x128xbf16, #tpu.memory_space<vmem>>, vector<128x128xbf16>
    %cst_27 = arith.constant dense<0.000000e+00> : vector<8x128xf32>
    %45 = tpu.matmul %43, %44, %cst_27 {dimension_numbers = #tpu.dot_dimension_numbers<[1], [0], [0], [1], [0, 0, 1, 1], [], []>} : vector<8x128xbf16>, vector<128x128xbf16>, vector<8x128xf32> -> vector<8x128xf32>
    %46 = arith.truncf %42 : vector<8x128xf32> to vector<8x128xbf16>
    %c128_28 = arith.constant 128 : index
    %c0_29 = arith.constant 0 : index
    %47 = vector.load %arg5[%c128_28, %c0_29] : memref<256x128xbf16, #tpu.memory_space<vmem>>, vector<128x128xbf16>
    %cst_30 = arith.constant dense<0.000000e+00> : vector<8x128xf32>
    %48 = tpu.matmul %46, %47, %cst_30 {dimension_numbers = #tpu.dot_dimension_numbers<[1], [0], [0], [1], [0, 0, 1, 1], [], []>} : vector<8x128xbf16>, vector<128x128xbf16>, vector<8x128xf32> -> vector<8x128xf32>
    %49 = arith.addf %45, %48 : vector<8x128xf32>
    %c0_31 = arith.constant 0 : index
    %c0_32 = arith.constant 0 : index
    %50 = vector.load %arg6[%c0_31, %c0_32] : memref<1x128xf32, #tpu.memory_space<vmem>>, vector<1x128xf32>
    %51 = vector.broadcast %50 : vector<1x128xf32> to vector<8x128xf32>
    %52 = arith.addf %49, %51 : vector<8x128xf32>
    %53 = math.tanh %52 : vector<8x128xf32>
    %54 = arith.truncf %53 : vector<8x128xf32> to vector<8x128xbf16>
    %c0_33 = arith.constant 0 : index
    %c0_34 = arith.constant 0 : index
    %55 = vector.load %arg7[%c0_33, %c0_34] : memref<128x128xbf16, #tpu.memory_space<vmem>>, vector<128x128xbf16>
    %cst_35 = arith.constant dense<0.000000e+00> : vector<8x128xf32>
    %56 = tpu.matmul %54, %55, %cst_35 {dimension_numbers = #tpu.dot_dimension_numbers<[1], [0], [0], [1], [0, 0, 1, 1], [], []>} : vector<8x128xbf16>, vector<128x128xbf16>, vector<8x128xf32> -> vector<8x128xf32>
    %c0_36 = arith.constant 0 : index
    %c0_37 = arith.constant 0 : index
    %57 = vector.load %arg8[%c0_36, %c0_37] : memref<1x128xf32, #tpu.memory_space<vmem>>, vector<1x128xf32>
    %58 = vector.broadcast %57 : vector<1x128xf32> to vector<8x128xf32>
    %59 = arith.addf %56, %58 : vector<8x128xf32>
    %60 = math.tanh %59 : vector<8x128xf32>
    %61 = arith.truncf %60 : vector<8x128xf32> to vector<8x128xbf16>
    %c0_38 = arith.constant 0 : index
    %c0_39 = arith.constant 0 : index
    %62 = vector.load %arg9[%c0_38, %c0_39] : memref<128x128xbf16, #tpu.memory_space<vmem>>, vector<128x128xbf16>
    %cst_40 = arith.constant dense<0.000000e+00> : vector<8x128xf32>
    %63 = tpu.matmul %61, %62, %cst_40 {dimension_numbers = #tpu.dot_dimension_numbers<[1], [0], [0], [1], [0, 0, 1, 1], [], []>} : vector<8x128xbf16>, vector<128x128xbf16>, vector<8x128xf32> -> vector<8x128xf32>
    %c0_41 = arith.constant 0 : index
    %c0_42 = arith.constant 0 : index
    %64 = vector.load %arg10[%c0_41, %c0_42] : memref<1x128xf32, #tpu.memory_space<vmem>>, vector<1x128xf32>
    %65 = vector.broadcast %64 : vector<1x128xf32> to vector<8x128xf32>
    %66 = arith.addf %63, %65 : vector<8x128xf32>
    %67 = math.tanh %66 : vector<8x128xf32>
    %68 = arith.truncf %67 : vector<8x128xf32> to vector<8x128xbf16>
    %c0_43 = arith.constant 0 : index
    %c0_44 = arith.constant 0 : index
    %69 = vector.load %arg11[%c0_43, %c0_44] : memref<128x128xbf16, #tpu.memory_space<vmem>>, vector<128x128xbf16>
    %cst_45 = arith.constant dense<0.000000e+00> : vector<8x128xf32>
    %70 = tpu.matmul %68, %69, %cst_45 {dimension_numbers = #tpu.dot_dimension_numbers<[1], [0], [0], [1], [0, 0, 1, 1], [], []>} : vector<8x128xbf16>, vector<128x128xbf16>, vector<8x128xf32> -> vector<8x128xf32>
    %c0_46 = arith.constant 0 : index
    %c0_47 = arith.constant 0 : index
    %71 = vector.load %arg12[%c0_46, %c0_47] : memref<1x128xf32, #tpu.memory_space<vmem>>, vector<1x128xf32>
    %72 = vector.broadcast %71 : vector<1x128xf32> to vector<8x128xf32>
    %73 = arith.addf %70, %72 : vector<8x128xf32>
    %c0_48 = arith.constant 0 : index
    %c0_49 = arith.constant 0 : index
    %74 = vector.load %arg13[%c0_48, %c0_49] : memref<8x128xf32, #tpu.memory_space<vmem>>, vector<8x128xf32>
    tpu.vector_store %arg13[%c0_48, %c0_49], %73 {strides = array<i32>} : memref<8x128xf32, #tpu.memory_space<vmem>>, vector<8x128xf32>,
    return
  }
  func.func @transform_0(%arg0: i32) -> (i32, i32, i32) {
    %c0_i32 = arith.constant 0 : i32
    %c0_i32_0 = arith.constant 0 : i32
    %c0_i32_1 = arith.constant 0 : i32
    return %arg0, %c0_i32, %c0_i32_0 : i32, i32, i32
  }
  func.func @transform_1(%arg0: i32) -> (i32, i32, i32) {
    %c0_i32 = arith.constant 0 : i32
    %c0_i32_0 = arith.constant 0 : i32
    %c0_i32_1 = arith.constant 0 : i32
    return %c0_i32, %arg0, %c0_i32_0 : i32, i32, i32
  }
  func.func @transform_2(%arg0: i32) -> (i32, i32) {
    %c0_i32 = arith.constant 0 : i32
    %c0_i32_0 = arith.constant 0 : i32
    %c0_i32_1 = arith.constant 0 : i32
    return %c0_i32, %c0_i32_0 : i32, i32
  }
  func.func @transform_3(%arg0: i32) -> (i32, i32) {
    %c0_i32 = arith.constant 0 : i32
    %c0_i32_0 = arith.constant 0 : i32
    %c0_i32_1 = arith.constant 0 : i32
    return %c0_i32, %c0_i32_0 : i32, i32
  }
  func.func @transform_4(%arg0: i32) -> (i32, i32) {
    %c0_i32 = arith.constant 0 : i32
    %c0_i32_0 = arith.constant 0 : i32
    %c0_i32_1 = arith.constant 0 : i32
    return %c0_i32, %c0_i32_0 : i32, i32
  }
  func.func @transform_5(%arg0: i32) -> (i32, i32) {
    %c0_i32 = arith.constant 0 : i32
    %c0_i32_0 = arith.constant 0 : i32
    %c0_i32_1 = arith.constant 0 : i32
    return %c0_i32, %c0_i32_0 : i32, i32
  }
  func.func @transform_6(%arg0: i32) -> (i32, i32) {
    %c0_i32 = arith.constant 0 : i32
    %c0_i32_0 = arith.constant 0 : i32
    %c0_i32_1 = arith.constant 0 : i32
    return %c0_i32, %c0_i32_0 : i32, i32
  }
  func.func @transform_7(%arg0: i32) -> (i32, i32) {
    %c0_i32 = arith.constant 0 : i32
    %c0_i32_0 = arith.constant 0 : i32
    %c0_i32_1 = arith.constant 0 : i32
    return %c0_i32, %c0_i32_0 : i32, i32
  }
  func.func @transform_8(%arg0: i32) -> (i32, i32) {
    %c0_i32 = arith.constant 0 : i32
    %c0_i32_0 = arith.constant 0 : i32
    %c0_i32_1 = arith.constant 0 : i32
    return %c0_i32, %c0_i32_0 : i32, i32
  }
  func.func @transform_9(%arg0: i32) -> (i32, i32) {
    %c0_i32 = arith.constant 0 : i32
    %c0_i32_0 = arith.constant 0 : i32
    %c0_i32_1 = arith.constant 0 : i32
    return %c0_i32, %c0_i32_0 : i32, i32
  }
  func.func @transform_10(%arg0: i32) -> (i32, i32) {
    %c0_i32 = arith.constant 0 : i32
    %c0_i32_0 = arith.constant 0 : i32
    %c0_i32_1 = arith.constant 0 : i32
    return %c0_i32, %c0_i32_0 : i32, i32
  }
  func.func @transform_11(%arg0: i32) -> (i32, i32) {
    %c0_i32 = arith.constant 0 : i32
    %c0_i32_0 = arith.constant 0 : i32
    %c0_i32_1 = arith.constant 0 : i32
    return %c0_i32, %c0_i32_0 : i32, i32
  }
  func.func @transform_12(%arg0: i32) -> (i32, i32) {
    %c0_i32 = arith.constant 0 : i32
    %c0_i32_0 = arith.constant 0 : i32
    return %arg0, %c0_i32 : i32, i32
  }
}

</mosaic_0001>

<llo_original>
// kernel: tpu_custom_call.1
$region0: #{tpu_custom_call.1}
  #allocation0 [shape = 'u32[]', space=smem, size = 0x4, offset = 0x4, fixed_abs, tag = 'smem constant byte address 0x4 - core index']
  #allocation1 [shape = 'u32[144,128]{1,0:T(1,128)}', space=vmem, size = 0x12000, scoped, tag = 'internal scratch']
  %s0 = inlined_call_operand.hbm [shape: f32[16,16,128], index: 0, kind: input, shape index: {}]
  %s1 = inlined_call_operand.hbm [shape: f32[4,16,16], index: 1, kind: input, shape index: {}]
  %s2 = inlined_call_operand.hbm [shape: bf16[384,128], index: 2, kind: input, shape index: {}]
  %s3 = inlined_call_operand.vmem [shape: f32[1,128], index: 3, kind: input, shape index: {}]
  %s4 = inlined_call_operand.hbm [shape: bf16[256,128], index: 4, kind: input, shape index: {}]
  %s5 = inlined_call_operand.vmem [shape: f32[1,128], index: 5, kind: input, shape index: {}]
  %s6 = inlined_call_operand.hbm [shape: bf16[128,128], index: 6, kind: input, shape index: {}]
  %s7 = inlined_call_operand.vmem [shape: f32[1,128], index: 7, kind: input, shape index: {}]
  %s8 = inlined_call_operand.hbm [shape: bf16[128,128], index: 8, kind: input, shape index: {}]
  %s9 = inlined_call_operand.vmem [shape: f32[1,128], index: 9, kind: input, shape index: {}]
  %s10 = inlined_call_operand.hbm [shape: bf16[128,128], index: 10, kind: input, shape index: {}]
  %s11 = inlined_call_operand.vmem [shape: f32[1,128], index: 11, kind: input, shape index: {}]
  %s12 = inlined_call_operand.hbm [shape: f32[16,128], index: 12, kind: output, shape index: {}]
  %s13 = sld [smem:[#allocation0]]
  $region109: #{tpu_custom_call.1} parent=0
    _
  %s15 = ssub.s32 1, %s13
  %s16 = scalar_select 0, %s15, %s13
  $region1: #{tpu_custom_call.1} parent=0
    #allocation2 [shape = 'u8[131072]{0}', space=vmem, size = 0x20000, scoped, tag = 'input window, operand 0']
    #allocation3 [shape = 's32[2]{0}', space=sflag, size = 0x8, scoped, tag = 'scoped memory for tpu_custom_call.1']
    #allocation4 [shape = 's32[2]{0}', space=sflag, size = 0x8, scoped, tag = 'scoped memory for tpu_custom_call.1']
    #allocation5 [shape = 'u8[32768]{0}', space=vmem, size = 0x8000, scoped, tag = 'input window, operand 1']
    #allocation6 [shape = 's32[2]{0}', space=sflag, size = 0x8, scoped, tag = 'scoped memory for tpu_custom_call.1']
    #allocation7 [shape = 'u8[98304]{0}', space=vmem, size = 0x18000, scoped, tag = 'input window, operand 2, single buffered']
    #allocation8 [shape = 'u8[65536]{0}', space=vmem, size = 0x10000, scoped, tag = 'input window, operand 4, single buffered']
    #allocation9 [shape = 's32[1]{0}', space=sflag, size = 0x4, scoped, tag = 'scoped memory for tpu_custom_call.1']
    #allocation10 [shape = 'u8[32768]{0}', space=vmem, size = 0x8000, scoped, tag = 'input window, operand 6, single buffered']
    #allocation11 [shape = 'u8[32768]{0}', space=vmem, size = 0x8000, scoped, tag = 'input window, operand 8, single buffered']
    #allocation12 [shape = 's32[1]{0}', space=sflag, size = 0x4, scoped, tag = 'scoped memory for tpu_custom_call.1']
    #allocation13 [shape = 'u8[32768]{0}', space=vmem, size = 0x8000, scoped, tag = 'input window, operand 10, single buffered']
    #allocation14 [shape = 'u8[8192]{0}', space=vmem, size = 0x2000, scoped, tag = 'output window, operand 0']
    %17 = vsyncpa [#allocation3], 0
    %s18 = scalar_lea.sflag [#allocation3], 1
    %19 = vsyncpa %s18, 0
    %20 = vsyncpa [#allocation6], 0
    %s21 = scalar_lea.sflag [#allocation6], 1
    %22 = vsyncpa %s21, 0
    %23 = vsyncpa [#allocation9], 0
    %24 = vsyncpa [#allocation12], 0
    %25 = vsyncpa [#allocation4], 0
    %s26 = scalar_lea.sflag [#allocation4], 1
    %27 = vsyncpa %s26, 0
    loop: start=0, step=1, limit=4
    $region2: #{tpu_custom_call.1} parent=1 // loop_pre_header
      _
    $region3: #{tpu_custom_call.1} parent=1 // loop_header
      %s29 = sphi 0, %s33
      %p30 = scmp.ge.s32.totalorder %s29, 4
      %s39 = sphi 0, %s41
      %s42 = sphi 0, %s39
      %s43 = sphi 0, %s42
      %s59 = sphi 0, %s43
      %s65 = sphi 0, %s67
      %s68 = sphi 0, %s65
      %s69 = sphi 0, %s68
      %s85 = sphi 0, %s69
      %s89 = sphi 0, %s89
      %s91 = sphi 0, %s89
      %s92 = sphi 0, %s91
      %s106 = sphi 0, %s92
      %s110 = sphi 0, %s110
      %s112 = sphi 0, %s110
      %s113 = sphi 0, %s112
      %s127 = sphi 0, %s113
      %s131 = sphi 0, %s131
      %s133 = sphi 0, %s131
      %s134 = sphi 0, %s133
      %s148 = sphi 0, %s134
      %s152 = sphi 0, %s152
      %s154 = sphi 0, %s152
      %s155 = sphi 0, %s154
      %s169 = sphi 0, %s155
      %s173 = sphi 0, %s173
      %s175 = sphi 0, %s173
      %s176 = sphi 0, %s175
      %s190 = sphi 0, %s176
      %s194 = sphi 0, %s194
      %s196 = sphi 0, %s194
      %s197 = sphi 0, %s196
      %s211 = sphi 0, %s197
      %s215 = sphi 0, %s215
      %s217 = sphi 0, %s215
      %s218 = sphi 0, %s217
      %s232 = sphi 0, %s218
      %s236 = sphi 0, %s236
      %s238 = sphi 0, %s236
      %s239 = sphi 0, %s238
      %s253 = sphi 0, %s239
      %s257 = sphi 0, %s257
      %s259 = sphi 0, %s257
      %s260 = sphi 0, %s259
      %s274 = sphi 0, %s260
      %s278 = sphi 0, %s278
      %s280 = sphi 0, %s278
      %s281 = sphi 0, %s280
      %s295 = sphi 0, %s281
      %s301 = sphi 0, %s303
      %s304 = sphi 0, %s301
      %s305 = sphi 0, %s304
      %s321 = sphi 0, %s305
    $region4: #{tpu_custom_call.1} parent=1 // loop_header_branch
      %32 = sbr.rel (%p30) target = $region8
    $region5: #{tpu_custom_call.1} parent=1 // loop_body
      %s34 = ssub.s32 %s29, 1
      %s35 = ssub.s32 %s29, 2
      %s36 = sadd.s32 %s29, 1
      %s37 = ssub.s32 %s29, %s36
      %p38 = scmp.eq.s32.totalorder %s37, 0
      %s40 = sadd.s32 %s39, 1
      %s41 = scalar_select %p38, %s39, %s40
      %p44 = pneg %p38
      %p45 = scmp.eq.s32.totalorder %s29, 1
      %p46 = por %p44, %p45
      %p47 = scmp.ne.s32.totalorder %s39, %s42
      %p48 = scmp.eq.s32.totalorder %s29, 0
      %p49 = por %p47, %p48
      %p50 = scmp.ne.s32.totalorder %s39, %s42
      %p51 = scmp.eq.s32.totalorder %s34, 1
      %p52 = por %p50, %p51
      %p53 = scmp.ne.s32.totalorder %s42, %s43
      %p54 = scmp.eq.s32.totalorder %s34, 0
      %p55 = por %p53, %p54
      %p56 = scmp.ne.s32.totalorder %s42, %s43
      %p57 = scmp.eq.s32.totalorder %s35, 1
      %p58 = por %p56, %p57
      %p60 = scmp.ne.s32.totalorder %s43, %s59
      %p61 = scmp.eq.s32.totalorder %s35, 0
      %p62 = por %p60, %p61
      %s63 = ssub.s32 %s29, %s36
      %p64 = scmp.eq.s32.totalorder %s63, 0
      %s66 = sadd.s32 %s65, 1
      %s67 = scalar_select %p64, %s65, %s66
      %p70 = pneg %p64
      %p71 = scmp.eq.s32.totalorder %s29, 1
      %p72 = por %p70, %p71
      %p73 = scmp.ne.s32.totalorder %s65, %s68
      %p74 = scmp.eq.s32.totalorder %s29, 0
      %p75 = por %p73, %p74
      %p76 = scmp.ne.s32.totalorder %s65, %s68
      %p77 = scmp.eq.s32.totalorder %s34, 1
      %p78 = por %p76, %p77
      %p79 = scmp.ne.s32.totalorder %s68, %s69
      %p80 = scmp.eq.s32.totalorder %s34, 0
      %p81 = por %p79, %p80
      %p82 = scmp.ne.s32.totalorder %s68, %s69
      %p83 = scmp.eq.s32.totalorder %s35, 1
      %p84 = por %p82, %p83
      %p86 = scmp.ne.s32.totalorder %s69, %s85
      %p87 = scmp.eq.s32.totalorder %s35, 0
      %p88 = por %p86, %p87
      %s90 = sadd.s32 %s89, 1
      %p93 = scmp.eq.s32.totalorder %s29, 1
      %p94 = scmp.ne.s32.totalorder %s89, %s91
      %p95 = scmp.eq.s32.totalorder %s29, 0
      %p96 = por %p94, %p95
      %p97 = scmp.ne.s32.totalorder %s89, %s91
      %p98 = scmp.eq.s32.totalorder %s34, 1
      %p99 = por %p97, %p98
      %p100 = scmp.ne.s32.totalorder %s91, %s92
      %p101 = scmp.eq.s32.totalorder %s34, 0
      %p102 = por %p100, %p101
      %p103 = scmp.ne.s32.totalorder %s91, %s92
      %p104 = scmp.eq.s32.totalorder %s35, 1
      %p105 = por %p103, %p104
      %p107 = scmp.ne.s32.totalorder %s92, %s106
      %p108 = scmp.eq.s32.totalorder %s35, 0
      %p109 = por %p107, %p108
      %s111 = sadd.s32 %s110, 1
      %p114 = scmp.eq.s32.totalorder %s29, 1
      %p115 = scmp.ne.s32.totalorder %s110, %s112
      %p116 = scmp.eq.s32.totalorder %s29, 0
      %p117 = por %p115, %p116
      %p118 = scmp.ne.s32.totalorder %s110, %s112
      %p119 = scmp.eq.s32.totalorder %s34, 1
      %p120 = por %p118, %p119
      %p121 = scmp.ne.s32.totalorder %s112, %s113
      %p122 = scmp.eq.s32.totalorder %s34, 0
      %p123 = por %p121, %p122
      %p124 = scmp.ne.s32.totalorder %s112, %s113
      %p125 = scmp.eq.s32.totalorder %s35, 1
      %p126 = por %p124, %p125
      %p128 = scmp.ne.s32.totalorder %s113, %s127
      %p129 = scmp.eq.s32.totalorder %s35, 0
      %p130 = por %p128, %p129
      %s132 = sadd.s32 %s131, 1
      %p135 = scmp.eq.s32.totalorder %s29, 1
      %p136 = scmp.ne.s32.totalorder %s131, %s133
      %p137 = scmp.eq.s32.totalorder %s29, 0
      %p138 = por %p136, %p137
      %p139 = scmp.ne.s32.totalorder %s131, %s133
      %p140 = scmp.eq.s32.totalorder %s34, 1
      %p141 = por %p139, %p140
      %p142 = scmp.ne.s32.totalorder %s133, %s134
      %p143 = scmp.eq.s32.totalorder %s34, 0
      %p144 = por %p142, %p143
      %p145 = scmp.ne.s32.totalorder %s133, %s134
      %p146 = scmp.eq.s32.totalorder %s35, 1
      %p147 = por %p145, %p146
      %p149 = scmp.ne.s32.totalorder %s134, %s148
      %p150 = scmp.eq.s32.totalorder %s35, 0
      %p151 = por %p149, %p150
      %s153 = sadd.s32 %s152, 1
      %p156 = scmp.eq.s32.totalorder %s29, 1
      %p157 = scmp.ne.s32.totalorder %s152, %s154
      %p158 = scmp.eq.s32.totalorder %s29, 0
      %p159 = por %p157, %p158
      %p160 = scmp.ne.s32.totalorder %s152, %s154
      %p161 = scmp.eq.s32.totalorder %s34, 1
      %p162 = por %p160, %p161
      %p163 = scmp.ne.s32.totalorder %s154, %s155
      %p164 = scmp.eq.s32.totalorder %s34, 0
      %p165 = por %p163, %p164
      %p166 = scmp.ne.s32.totalorder %s154, %s155
      %p167 = scmp.eq.s32.totalorder %s35, 1
      %p168 = por %p166, %p167
      %p170 = scmp.ne.s32.totalorder %s155, %s169
      %p171 = scmp.eq.s32.totalorder %s35, 0
      %p172 = por %p170, %p171
      %s174 = sadd.s32 %s173, 1
      %p177 = scmp.eq.s32.totalorder %s29, 1
      %p178 = scmp.ne.s32.totalorder %s173, %s175
      %p179 = scmp.eq.s32.totalorder %s29, 0
      %p180 = por %p178, %p179
      %p181 = scmp.ne.s32.totalorder %s173, %s175
      %p182 = scmp.eq.s32.totalorder %s34, 1
      %p183 = por %p181, %p182
      %p184 = scmp.ne.s32.totalorder %s175, %s176
      %p185 = scmp.eq.s32.totalorder %s34, 0
      %p186 = por %p184, %p185
      %p187 = scmp.ne.s32.totalorder %s175, %s176
      %p188 = scmp.eq.s32.totalorder %s35, 1
      %p189 = por %p187, %p188
      %p191 = scmp.ne.s32.totalorder %s176, %s190
      %p192 = scmp.eq.s32.totalorder %s35, 0
      %p193 = por %p191, %p192
      %s195 = sadd.s32 %s194, 1
      %p198 = scmp.eq.s32.totalorder %s29, 1
      %p199 = scmp.ne.s32.totalorder %s194, %s196
      %p200 = scmp.eq.s32.totalorder %s29, 0
      %p201 = por %p199, %p200
      %p202 = scmp.ne.s32.totalorder %s194, %s196
      %p203 = scmp.eq.s32.totalorder %s34, 1
      %p204 = por %p202, %p203
      %p205 = scmp.ne.s32.totalorder %s196, %s197
      %p206 = scmp.eq.s32.totalorder %s34, 0
      %p207 = por %p205, %p206
      %p208 = scmp.ne.s32.totalorder %s196, %s197
      %p209 = scmp.eq.s32.totalorder %s35, 1
      %p210 = por %p208, %p209
      %p212 = scmp.ne.s32.totalorder %s197, %s211
      %p213 = scmp.eq.s32.totalorder %s35, 0
      %p214 = por %p212, %p213
      %s216 = sadd.s32 %s215, 1
      %p219 = scmp.eq.s32.totalorder %s29, 1
      %p220 = scmp.ne.s32.totalorder %s215, %s217
      %p221 = scmp.eq.s32.totalorder %s29, 0
      %p222 = por %p220, %p221
      %p223 = scmp.ne.s32.totalorder %s215, %s217
      %p224 = scmp.eq.s32.totalorder %s34, 1
      %p225 = por %p223, %p224
      %p226 = scmp.ne.s32.totalorder %s217, %s218
      %p227 = scmp.eq.s32.totalorder %s34, 0
      %p228 = por %p226, %p227
      %p229 = scmp.ne.s32.totalorder %s217, %s218
      %p230 = scmp.eq.s32.totalorder %s35, 1
      %p231 = por %p229, %p230
      %p233 = scmp.ne.s32.totalorder %s218, %s232
      %p234 = scmp.eq.s32.totalorder %s35, 0
      %p235 = por %p233, %p234
      %s237 = sadd.s32 %s236, 1
      %p240 = scmp.eq.s32.totalorder %s29, 1
      %p241 = scmp.ne.s32.totalorder %s236, %s238
      %p242 = scmp.eq.s32.totalorder %s29, 0
      %p243 = por %p241, %p242
      %p244 = scmp.ne.s32.totalorder %s236, %s238
      %p245 = scmp.eq.s32.totalorder %s34, 1
      %p246 = por %p244, %p245
      %p247 = scmp.ne.s32.totalorder %s238, %s239
      %p248 = scmp.eq.s32.totalorder %s34, 0
      %p249 = por %p247, %p248
      %p250 = scmp.ne.s32.totalorder %s238, %s239
      %p251 = scmp.eq.s32.totalorder %s35, 1
      %p252 = por %p250, %p251
      %p254 = scmp.ne.s32.totalorder %s239, %s253
      %p255 = scmp.eq.s32.totalorder %s35, 0
      %p256 = por %p254, %p255
      %s258 = sadd.s32 %s257, 1
      %p261 = scmp.eq.s32.totalorder %s29, 1
      %p262 = scmp.ne.s32.totalorder %s257, %s259
      %p263 = scmp.eq.s32.totalorder %s29, 0
      %p264 = por %p262, %p263
      %p265 = scmp.ne.s32.totalorder %s257, %s259
      %p266 = scmp.eq.s32.totalorder %s34, 1
      %p267 = por %p265, %p266
      %p268 = scmp.ne.s32.totalorder %s259, %s260
      %p269 = scmp.eq.s32.totalorder %s34, 0
      %p270 = por %p268, %p269
      %p271 = scmp.ne.s32.totalorder %s259, %s260
      %p272 = scmp.eq.s32.totalorder %s35, 1
      %p273 = por %p271, %p272
      %p275 = scmp.ne.s32.totalorder %s260, %s274
      %p276 = scmp.eq.s32.totalorder %s35, 0
      %p277 = por %p275, %p276
      %s279 = sadd.s32 %s278, 1
      %p282 = scmp.eq.s32.totalorder %s29, 1
      %p283 = scmp.ne.s32.totalorder %s278, %s280
      %p284 = scmp.eq.s32.totalorder %s29, 0
      %p285 = por %p283, %p284
      %p286 = scmp.ne.s32.totalorder %s278, %s280
      %p287 = scmp.eq.s32.totalorder %s34, 1
      %p288 = por %p286, %p287
      %p289 = scmp.ne.s32.totalorder %s280, %s281
      %p290 = scmp.eq.s32.totalorder %s34, 0
      %p291 = por %p289, %p290
      %p292 = scmp.ne.s32.totalorder %s280, %s281
      %p293 = scmp.eq.s32.totalorder %s35, 1
      %p294 = por %p292, %p293
      %p296 = scmp.ne.s32.totalorder %s281, %s295
      %p297 = scmp.eq.s32.totalorder %s35, 0
      %p298 = por %p296, %p297
      %s299 = ssub.s32 %s29, %s36
      %p300 = scmp.eq.s32.totalorder %s299, 0
      %s302 = sadd.s32 %s301, 1
      %s303 = scalar_select %p300, %s301, %s302
      %p306 = pneg %p300
      %p307 = scmp.eq.s32.totalorder %s29, 1
      %p308 = por %p306, %p307
      %p309 = scmp.ne.s32.totalorder %s301, %s304
      %p310 = scmp.eq.s32.totalorder %s29, 0
      %p311 = por %p309, %p310
      %p312 = scmp.ne.s32.totalorder %s301, %s304
      %p313 = scmp.eq.s32.totalorder %s34, 1
      %p314 = por %p312, %p313
      %p315 = scmp.ne.s32.totalorder %s304, %s305
      %p316 = scmp.eq.s32.totalorder %s34, 0
      %p317 = por %p315, %p316
      %p318 = scmp.ne.s32.totalorder %s304, %s305
      %p319 = scmp.eq.s32.totalorder %s35, 1
      %p320 = por %p318, %p319
      %p322 = scmp.ne.s32.totalorder %s305, %s321
      %p323 = scmp.eq.s32.totalorder %s35, 0
      %p324 = por %p322, %p323
      %p325 = scmp.le.s32.totalorder 1, %s29
      %p326 = scmp.lt.s32.totalorder %s29, 3
      %p327 = pnand %p325, %p326
      %p328 = pneg %p327
      // Predicated region
      $region9: #{tpu_custom_call.1} parent=5 // pred_check
        _
      $region10: #{tpu_custom_call.1} parent=5 // pred_check_branch
        %330 = sbr.rel (%p327) target = $region12
      $region11: #{tpu_custom_call.1} parent=5 // pred_region
        %s331 = ssub.s32 %s29, 1
        // Predicated region
        $region13: #{tpu_custom_call.1} parent=11 // pred_check
          %p332 = pneg %p102
        $region14: #{tpu_custom_call.1} parent=11 // pred_check_branch
          %334 = sbr.rel (%p332) target = $region16
        $region15: #{tpu_custom_call.1} parent=11 // pred_region
          %s336 = ssub.s32 3072, 3072
          %337 = vsyncadd [#allocation6], %s336
          %s338 = sshll.u32 [#allocation7], 4
          %s339 = int_to_ptr.vmem [resolvable:$true] %s338
          %344 = dma.hbm_to_vmem [thread:$0]  %s2, 3072, %s339, [#allocation6], 64, 64, 4
        $region16: #{tpu_custom_call.1} parent=11 // pred_fallthru
          _
        // Predicated region
        $region17: #{tpu_custom_call.1} parent=11 // pred_check
          %p345 = pneg %p123
        $region18: #{tpu_custom_call.1} parent=11 // pred_check_branch
          %347 = sbr.rel (%p345) target = $region20
        $region19: #{tpu_custom_call.1} parent=11 // pred_region
          _
        $region20: #{tpu_custom_call.1} parent=11 // pred_fallthru
          _
        // Predicated region
        $region21: #{tpu_custom_call.1} parent=11 // pred_check
          %p348 = pneg %p144
        $region22: #{tpu_custom_call.1} parent=11 // pred_check_branch
          %350 = sbr.rel (%p348) target = $region24
        $region23: #{tpu_custom_call.1} parent=11 // pred_region
          %s352 = ssub.s32 2048, 2048
          %353 = vsyncadd [#allocation9], %s352
          %s354 = sshll.u32 [#allocation8], 4
          %s355 = int_to_ptr.vmem [resolvable:$true] %s354
          %360 = dma.hbm_to_vmem [thread:$0]  %s4, 2048, %s355, [#allocation9], 64, 64, 4
        $region24: #{tpu_custom_call.1} parent=11 // pred_fallthru
          _
        // Predicated region
        $region25: #{tpu_custom_call.1} parent=11 // pred_check
          %p361 = pneg %p165
        $region26: #{tpu_custom_call.1} parent=11 // pred_check_branch
          %363 = sbr.rel (%p361) target = $region28
        $region27: #{tpu_custom_call.1} parent=11 // pred_region
          _
        $region28: #{tpu_custom_call.1} parent=11 // pred_fallthru
          _
        // Predicated region
        $region29: #{tpu_custom_call.1} parent=11 // pred_check
          %p364 = pneg %p186
        $region30: #{tpu_custom_call.1} parent=11 // pred_check_branch
          %366 = sbr.rel (%p364) target = $region32
        $region31: #{tpu_custom_call.1} parent=11 // pred_region
          %s368 = ssub.s32 1024, 1024
          %369 = vsyncadd [#allocation9], %s368
          %s370 = sshll.u32 [#allocation10], 4
          %s371 = int_to_ptr.vmem [resolvable:$true] %s370
          %376 = dma.hbm_to_vmem [thread:$0]  %s6, 1024, %s371, [#allocation9], 64, 64, 4
        $region32: #{tpu_custom_call.1} parent=11 // pred_fallthru
          _
        // Predicated region
        $region33: #{tpu_custom_call.1} parent=11 // pred_check
          %p377 = pneg %p207
        $region34: #{tpu_custom_call.1} parent=11 // pred_check_branch
          %379 = sbr.rel (%p377) target = $region36
        $region35: #{tpu_custom_call.1} parent=11 // pred_region
          _
        $region36: #{tpu_custom_call.1} parent=11 // pred_fallthru
          _
        // Predicated region
        $region37: #{tpu_custom_call.1} parent=11 // pred_check
          %p380 = pneg %p228
        $region38: #{tpu_custom_call.1} parent=11 // pred_check_branch
          %382 = sbr.rel (%p380) target = $region40
        $region39: #{tpu_custom_call.1} parent=11 // pred_region
          %s384 = ssub.s32 1024, 1024
          %385 = vsyncadd [#allocation12], %s384
          %s386 = sshll.u32 [#allocation11], 4
          %s387 = int_to_ptr.vmem [resolvable:$true] %s386
          %392 = dma.hbm_to_vmem [thread:$0]  %s8, 1024, %s387, [#allocation12], 64, 64, 4
        $region40: #{tpu_custom_call.1} parent=11 // pred_fallthru
          _
        // Predicated region
        $region41: #{tpu_custom_call.1} parent=11 // pred_check
          %p393 = pneg %p249
        $region42: #{tpu_custom_call.1} parent=11 // pred_check_branch
          %395 = sbr.rel (%p393) target = $region44
        $region43: #{tpu_custom_call.1} parent=11 // pred_region
          _
        $region44: #{tpu_custom_call.1} parent=11 // pred_fallthru
          _
        // Predicated region
        $region45: #{tpu_custom_call.1} parent=11 // pred_check
          %p396 = pneg %p270
        $region46: #{tpu_custom_call.1} parent=11 // pred_check_branch
          %398 = sbr.rel (%p396) target = $region48
        $region47: #{tpu_custom_call.1} parent=11 // pred_region
          %s400 = ssub.s32 1024, 1024
          %401 = vsyncadd [#allocation12], %s400
          %s402 = sshll.u32 [#allocation13], 4
          %s403 = int_to_ptr.vmem [resolvable:$true] %s402
          %408 = dma.hbm_to_vmem [thread:$0]  %s10, 1024, %s403, [#allocation12], 64, 64, 4
        $region48: #{tpu_custom_call.1} parent=11 // pred_fallthru
          _
        // Predicated region
        $region49: #{tpu_custom_call.1} parent=11 // pred_check
          %p409 = pneg %p291
        $region50: #{tpu_custom_call.1} parent=11 // pred_check_branch
          %411 = sbr.rel (%p409) target = $region52
        $region51: #{tpu_custom_call.1} parent=11 // pred_region
          _
        $region52: #{tpu_custom_call.1} parent=11 // pred_fallthru
          _
      $region12: #{tpu_custom_call.1} parent=5 // pred_fallthru
        _
      %p412 = scmp.lt.s32.totalorder %s29, 2
      // Predicated region
      $region53: #{tpu_custom_call.1} parent=5 // pred_check
        %p413 = pneg %p412
      $region54: #{tpu_custom_call.1} parent=5 // pred_check_branch
        %415 = sbr.rel (%p413) target = $region56
      $region55: #{tpu_custom_call.1} parent=5 // pred_region
        // Predicated region
        $region57: #{tpu_custom_call.1} parent=55 // pred_check
          %p416 = pneg %p49
        $region58: #{tpu_custom_call.1} parent=55 // pred_check_branch
          %418 = sbr.rel (%p416) target = $region60
        $region59: #{tpu_custom_call.1} parent=55 // pred_region
          %s419 = sand.u32 %s39, 1
          %s420 = scalar_lea.sflag [#allocation3], %s419
          %s421 = sand.u32 %s39, 1
          %s422 = smul.addr %s421, 128
          %s423 = scalar_lea.vmem [#allocation2], %s422
          %s424 = smul.u32 8, %s29
          %s426 = ssub.s32 2048, 2048
          %427 = vsyncadd %s420, %s426
          %s428 = smul.addr %s424, 2
          %s429 = smul.addr %s428, 128
          %s430 = scalar_lea.hbm %s0, %s429
          %s431 = sshll.u32 %s423, 4
          %s432 = int_to_ptr.vmem [resolvable:$true] %s431
          %437 = dma.hbm_to_vmem [thread:$0]  %s430, 2048, %s432, %s420, 128, 128, 8
        $region60: #{tpu_custom_call.1} parent=55 // pred_fallthru
          _
        // Predicated region
        $region61: #{tpu_custom_call.1} parent=55 // pred_check
          %p438 = pneg %p75
        $region62: #{tpu_custom_call.1} parent=55 // pred_check_branch
          %440 = sbr.rel (%p438) target = $region64
        $region63: #{tpu_custom_call.1} parent=55 // pred_region
          %s441 = sand.u32 %s29, 1
          %s442 = scalar_lea.sflag [#allocation6], %s441
          %s443 = sand.u32 %s65, 1
          %s444 = smul.addr %s443, 32
          %s445 = scalar_lea.vmem [#allocation5], %s444
          %s447 = ssub.s32 512, 512
          %448 = vsyncadd %s442, %s447
          %s449 = smul.addr %s29, 128
          %s450 = scalar_lea.hbm %s1, %s449
          %s451 = sshll.u32 %s445, 4
          %s452 = int_to_ptr.vmem [resolvable:$true] %s451
          %457 = dma.hbm_to_vmem [thread:$0]  %s450, 512, %s452, %s442, 256, 128, 8
        $region64: #{tpu_custom_call.1} parent=55 // pred_fallthru
          _
      $region56: #{tpu_custom_call.1} parent=5 // pred_fallthru
        _
      %p458 = scmp.le.s32.totalorder 1, %s29
      %p459 = scmp.lt.s32.totalorder %s29, 3
      %p460 = pnand %p458, %p459
      %p461 = pneg %p460
      // Predicated region
      $region65: #{tpu_custom_call.1} parent=5 // pred_check
        _
      $region66: #{tpu_custom_call.1} parent=5 // pred_check_branch
        %463 = sbr.rel (%p460) target = $region68
      $region67: #{tpu_custom_call.1} parent=5 // pred_region
        %s464 = ssub.s32 %s29, 1
        %s465 = sand.u32 %s42, 1
        %s466 = scalar_lea.sflag [#allocation3], %s465
        %s467 = sand.u32 %s42, 1
        %s468 = smul.addr %s467, 128
        %s469 = scalar_lea.vmem [#allocation2], %s468
        // Predicated region
        $region69: #{tpu_custom_call.1} parent=67 // pred_check
          %p470 = pneg %p55
        $region70: #{tpu_custom_call.1} parent=67 // pred_check_branch
          %472 = sbr.rel (%p470) target = $region72
        $region71: #{tpu_custom_call.1} parent=67 // pred_region
          %473 = dma.done %s466, 2048
        $region72: #{tpu_custom_call.1} parent=67 // pred_fallthru
          _
        %s474 = sand.u32 %s34, 1
        %s475 = scalar_lea.sflag [#allocation6], %s474
        %s476 = sand.u32 %s68, 1
        %s477 = smul.addr %s476, 32
        %s478 = scalar_lea.vmem [#allocation5], %s477
        // Predicated region
        $region73: #{tpu_custom_call.1} parent=67 // pred_check
          %p479 = pneg %p81
        $region74: #{tpu_custom_call.1} parent=67 // pred_check_branch
          %481 = sbr.rel (%p479) target = $region76
        $region75: #{tpu_custom_call.1} parent=67 // pred_region
          %482 = dma.done %s475, 512
        $region76: #{tpu_custom_call.1} parent=67 // pred_fallthru
          _
        // Predicated region
        $region77: #{tpu_custom_call.1} parent=67 // pred_check
          %p483 = pneg %p102
        $region78: #{tpu_custom_call.1} parent=67 // pred_check_branch
          %485 = sbr.rel (%p483) target = $region80
        $region79: #{tpu_custom_call.1} parent=67 // pred_region
          %486 = dma.done [#allocation6], 3072
        $region80: #{tpu_custom_call.1} parent=67 // pred_fallthru
          _
        // Predicated region
        $region81: #{tpu_custom_call.1} parent=67 // pred_check
          %p487 = pneg %p144
        $region82: #{tpu_custom_call.1} parent=67 // pred_check_branch
          %489 = sbr.rel (%p487) target = $region84
        $region83: #{tpu_custom_call.1} parent=67 // pred_region
          %490 = dma.done [#allocation9], 2048
        $region84: #{tpu_custom_call.1} parent=67 // pred_fallthru
          _
        // Predicated region
        $region85: #{tpu_custom_call.1} parent=67 // pred_check
          %p491 = pneg %p186
        $region86: #{tpu_custom_call.1} parent=67 // pred_check_branch
          %493 = sbr.rel (%p491) target = $region88
        $region87: #{tpu_custom_call.1} parent=67 // pred_region
          %494 = dma.done [#allocation9], 1024
        $region88: #{tpu_custom_call.1} parent=67 // pred_fallthru
          _
        // Predicated region
        $region89: #{tpu_custom_call.1} parent=67 // pred_check
          %p495 = pneg %p228
        $region90: #{tpu_custom_call.1} parent=67 // pred_check_branch
          %497 = sbr.rel (%p495) target = $region92
        $region91: #{tpu_custom_call.1} parent=67 // pred_region
          %498 = dma.done [#allocation12], 1024
        $region92: #{tpu_custom_call.1} parent=67 // pred_fallthru
          _
        // Predicated region
        $region93: #{tpu_custom_call.1} parent=67 // pred_check
          %p499 = pneg %p270
        $region94: #{tpu_custom_call.1} parent=67 // pred_check_branch
          %501 = sbr.rel (%p499) target = $region96
        $region95: #{tpu_custom_call.1} parent=67 // pred_region
          %502 = dma.done [#allocation12], 1024
        $region96: #{tpu_custom_call.1} parent=67 // pred_fallthru
          _
        %s503 = sand.u32 %s42, 1
        %s504 = scalar_lea.sflag [#allocation3], %s503
        %s505 = sand.u32 %s42, 1
        %s506 = smul.addr %s505, 128
        %s507 = scalar_lea.vmem [#allocation2], %s506
        %p508 = pneg %p55
        %p509 = pneg %p52
        %s510 = sand.u32 %s34, 1
        %s511 = scalar_lea.sflag [#allocation6], %s510
        %s512 = sand.u32 %s68, 1
        %s513 = smul.addr %s512, 32
        %s514 = scalar_lea.vmem [#allocation5], %s513
        %p515 = pneg %p81
        %p516 = pneg %p78
        %p517 = pneg %p102
        %p518 = pneg %p99
        %p519 = pneg %p123
        %p520 = pneg %p120
        %p521 = pneg %p144
        %p522 = pneg %p141
        %p523 = pneg %p165
        %p524 = pneg %p162
        %p525 = pneg %p186
        %p526 = pneg %p183
        %p527 = pneg %p207
        %p528 = pneg %p204
        %p529 = pneg %p228
        %p530 = pneg %p225
        %p531 = pneg %p249
        %p532 = pneg %p246
        %p533 = pneg %p270
        %p534 = pneg %p267
        %p535 = pneg %p291
        %p536 = pneg %p288
        %p537 = pneg %p317
        %p538 = pneg %p314
        %s539 = sand.u32 %s304, 1
        %s540 = scalar_lea.sflag [#allocation4], %s539
        %s541 = sand.u32 %s304, 1
        %s542 = smul.addr %s541, 8
        %s543 = scalar_lea.vmem [#allocation14], %s542
        %s544 = smul.u32 8, %s34
        %v546 = vld [vmem:[%s469] sm:$0xff]
        %v547 = vld [vmem:[%s469 + $0x8] sm:$0xff]
        %v548 = vld [vmem:[%s469 + $0x10] sm:$0xff]
        %v549 = vld [vmem:[%s469 + $0x18] sm:$0xff]
        %v550 = vld [vmem:[%s469 + $0x20] sm:$0xff]
        %v551 = vld [vmem:[%s469 + $0x28] sm:$0xff]
        %v552 = vld [vmem:[%s469 + $0x30] sm:$0xff]
        %v553 = vld [vmem:[%s469 + $0x38] sm:$0xff]
        %v554 = vld [vmem:[%s469 + $0x40] sm:$0xff]
        %v555 = vld [vmem:[%s469 + $0x48] sm:$0xff]
        %v556 = vld [vmem:[%s469 + $0x50] sm:$0xff]
        %v557 = vld [vmem:[%s469 + $0x58] sm:$0xff]
        %v558 = vld [vmem:[%s469 + $0x60] sm:$0xff]
        %v559 = vld [vmem:[%s469 + $0x68] sm:$0xff]
        %v560 = vld [vmem:[%s469 + $0x70] sm:$0xff]
        %v561 = vld [vmem:[%s469 + $0x78] sm:$0xff]
        %v562 = vld [vmem:[%s478] sm:$0xff]
        %v563 = vld [vmem:[%s478 + $0x8] sm:$0xff]
        %v564 = vld [vmem:[%s478 + $0x10] sm:$0xff]
        %v565 = vld [vmem:[%s478 + $0x18] sm:$0xff]
        %v566 = vcombine.low %v562, %v564
        %v567 = vcombine.high %v562, %v564
        %v569 = vunpack.c.l.s4 1983009808
        %v570 = vunpack.c.0.s8 %v569
        %v571 = vlaneseq
        %v572 = vshrl.u32 %v571, 7
        %v573 = vsub.s32 %v570, %v572
        %v574 = vrot.slane %v566, %v573
        %v576 = vunpack.c.l.s4 1983009808
        %v577 = vunpack.c.0.s8 %v576
        %v578 = vlaneseq
        %v579 = vshrl.u32 %v578, 7
        %v580 = vsub.s32 %v577, %v579
        %v581 = vrot.slane %v567, %v580
        %v582 = vcombine.low %v563, %v565
        %v583 = vcombine.high %v563, %v565
        %v585 = vunpack.c.l.s4 1983009808
        %v586 = vunpack.c.0.s8 %v585
        %v587 = vlaneseq
        %v588 = vshrl.u32 %v587, 7
        %v589 = vsub.s32 %v586, %v588
        %v590 = vrot.slane %v582, %v589
        %v592 = vunpack.c.l.s4 1983009808
        %v593 = vunpack.c.0.s8 %v592
        %v594 = vlaneseq
        %v595 = vshrl.u32 %v594, 7
        %v596 = vsub.s32 %v593, %v595
        %v597 = vrot.slane %v583, %v596
        %v598 = vcombine.low %v574, %v590
        %v599 = vcombine.high %v574, %v590
        %v601 = vunpack.c.l.s4 1934713408
        %v602 = vunpack.c.0.s8 %v601
        %v603 = vlaneseq
        %v604 = vshrl.u32 %v603, 7
        %v605 = vsub.s32 %v602, %v604
        %v606 = vrot.slane %v598, %v605
        %v608 = vunpack.c.l.s4 1934713408
        %v609 = vunpack.c.0.s8 %v608
        %v610 = vlaneseq
        %v611 = vshrl.u32 %v610, 7
        %v612 = vsub.s32 %v609, %v611
        %v613 = vrot.slane %v599, %v612
        %v614 = vcombine.low %v581, %v597
        %v615 = vcombine.high %v581, %v597
        %v617 = vunpack.c.l.s4 1934713408
        %v618 = vunpack.c.0.s8 %v617
        %v619 = vlaneseq
        %v620 = vshrl.u32 %v619, 7
        %v621 = vsub.s32 %v618, %v620
        %v622 = vrot.slane %v614, %v621
        %v624 = vunpack.c.l.s4 1934713408
        %v625 = vunpack.c.0.s8 %v624
        %v626 = vlaneseq
        %v627 = vshrl.u32 %v626, 7
        %v628 = vsub.s32 %v625, %v627
        %v629 = vrot.slane %v615, %v628
        %v630 = vcombine.high %v606, 0.0
        %v631 = vcombine.high %v613, 0.0
        %v632 = vcombine.high %v622, 0.0
        %v633 = vcombine.high %v629, 0.0
        %vm634 = vcmask 130048
        %v636 = vsel %vm634, %v606, 0
        %638 = vmatprep.subr.mxu0 0.0
        %639 = vmatpush1.msra.mxu0 %v546
        %640 = vmatprep.subr.mxu0 0.0
        %641 = vmatpush1.msra.mxu0 %v547
        %642 = vmatprep.subr.mxu0 0.0
        %643 = vmatpush1.msra.mxu0 0.0
        %644 = vmatprep.subr.mxu0 0.0
        %645 = vmatpush1.msra.mxu0 0.0
        %646 = vmatprep.subr.mxu0 0.0
        %647 = vmatpush1.msra.mxu0 0.0
        %648 = vmatprep.subr.mxu0 0.0
        %649 = vmatpush1.msra.mxu0 0.0
        %650 = vmatprep.subr.mxu0 0.0
        %651 = vmatpush1.msra.mxu0 0.0
        %652 = vmatprep.subr.mxu0 0.0
        %653 = vmatpush1.msra.mxu0 0.0
        %654 = vmatprep.subr.mxu0 0.0
        %655 = vmatpush1.msra.mxu0 0.0
        %656 = vmatprep.subr.mxu0 0.0
        %657 = vmatpush1.msra.mxu0 0.0
        %658 = vmatprep.subr.mxu0 0.0
        %659 = vmatpush1.msra.mxu0 0.0
        %660 = vmatprep.subr.mxu0 0.0
        %661 = vmatpush1.msra.mxu0 0.0
        %662 = vmatprep.subr.mxu0 0.0
        %663 = vmatpush1.msra.mxu0 0.0
        %664 = vmatprep.subr.mxu0 0.0
        %665 = vmatpush1.msra.mxu0 0.0
        %666 = vmatprep.subr.mxu0 0.0
        %667 = vmatpush1.msra.mxu0 0.0
        %668 = vmatprep.subr.mxu0 0.0
        %669 = vmatpush1.msra.mxu0 0.0
        %670 = vmatprep.subr.mxu0 0.0
        %671 = vmatpush1.msra.mxu0 0.0
        %672 = vmatprep.subr.mxu0 0.0
        %673 = vmatpush1.msra.mxu0 0.0
        %674 = vmatprep.subr.mxu0 0.0
        %675 = vmatpush1.msra.mxu0 0.0
        %676 = vmatprep.subr.mxu0 0.0
        %677 = vmatpush1.msra.mxu0 0.0
        %678 = vmatprep.subr.mxu0 0.0
        %679 = vmatpush1.msra.mxu0 0.0
        %680 = vmatprep.subr.mxu0 0.0
        %681 = vmatpush1.msra.mxu0 0.0
        %682 = vmatprep.subr.mxu0 0.0
        %683 = vmatpush1.msra.mxu0 0.0
        %684 = vmatprep.subr.mxu0 0.0
        %685 = vmatpush1.msra.mxu0 0.0
        %686 = vmatprep.subr.mxu0 0.0
        %687 = vmatpush1.msra.mxu0 0.0
        %688 = vmatprep.subr.mxu0 0.0
        %689 = vmatpush1.msra.mxu0 0.0
        %690 = vmatprep.subr.mxu0 0.0
        %691 = vmatpush1.msra.mxu0 0.0
        %692 = vmatprep.subr.mxu0 0.0
        %693 = vmatpush1.msra.mxu0 0.0
        %694 = vmatprep.subr.mxu0 0.0
        %695 = vmatpush1.msra.mxu0 0.0
        %696 = vmatprep.subr.mxu0 0.0
        %697 = vmatpush1.msra.mxu0 0.0
        %698 = vmatprep.subr.mxu0 0.0
        %699 = vmatpush1.msra.mxu0 0.0
        %700 = vmatprep.subr.mxu0 0.0
        %701 = vmatpush1.msra.mxu0 0.0
        %702 = vmatprep.mubr.f32.mxu0 0.0
        %703 = vmatmul.mubr.f32.gmra.mrb[0].mxu0 %v636
        %v704 = vpop.f32.mrb[0].mxu0
        %v705 = vadd.f32 0.0, %v704
        %v706 = vpop.f32.mrb[0].mxu0
        %707 = vdwg.mxu0
        %v709 = vsel %vm634, %v630, 0
        %711 = vmatprep.subr.mxu0 0.0
        %712 = vmatpush1.msra.mxu0 %v548
        %713 = vmatprep.subr.mxu0 0.0
        %714 = vmatpush1.msra.mxu0 %v549
        %715 = vmatprep.subr.mxu0 0.0
        %716 = vmatpush1.msra.mxu0 0.0
        %717 = vmatprep.subr.mxu0 0.0
        %718 = vmatpush1.msra.mxu0 0.0
        %719 = vmatprep.subr.mxu0 0.0
        %720 = vmatpush1.msra.mxu0 0.0
        %721 = vmatprep.subr.mxu0 0.0
        %722 = vmatpush1.msra.mxu0 0.0
        %723 = vmatprep.subr.mxu0 0.0
        %724 = vmatpush1.msra.mxu0 0.0
        %725 = vmatprep.subr.mxu0 0.0
        %726 = vmatpush1.msra.mxu0 0.0
        %727 = vmatprep.subr.mxu0 0.0
        %728 = vmatpush1.msra.mxu0 0.0
        %729 = vmatprep.subr.mxu0 0.0
        %730 = vmatpush1.msra.mxu0 0.0
        %731 = vmatprep.subr.mxu0 0.0
        %732 = vmatpush1.msra.mxu0 0.0
        %733 = vmatprep.subr.mxu0 0.0
        %734 = vmatpush1.msra.mxu0 0.0
        %735 = vmatprep.subr.mxu0 0.0
        %736 = vmatpush1.msra.mxu0 0.0
        %737 = vmatprep.subr.mxu0 0.0
        %738 = vmatpush1.msra.mxu0 0.0
        %739 = vmatprep.subr.mxu0 0.0
        %740 = vmatpush1.msra.mxu0 0.0
        %741 = vmatprep.subr.mxu0 0.0
        %742 = vmatpush1.msra.mxu0 0.0
        %743 = vmatprep.subr.mxu0 0.0
        %744 = vmatpush1.msra.mxu0 0.0
        %745 = vmatprep.subr.mxu0 0.0
        %746 = vmatpush1.msra.mxu0 0.0
        %747 = vmatprep.subr.mxu0 0.0
        %748 = vmatpush1.msra.mxu0 0.0
        %749 = vmatprep.subr.mxu0 0.0
        %750 = vmatpush1.msra.mxu0 0.0
        %751 = vmatprep.subr.mxu0 0.0
        %752 = vmatpush1.msra.mxu0 0.0
        %753 = vmatprep.subr.mxu0 0.0
        %754 = vmatpush1.msra.mxu0 0.0
        %755 = vmatprep.subr.mxu0 0.0
        %756 = vmatpush1.msra.mxu0 0.0
        %757 = vmatprep.subr.mxu0 0.0
        %758 = vmatpush1.msra.mxu0 0.0
        %759 = vmatprep.subr.mxu0 0.0
        %760 = vmatpush1.msra.mxu0 0.0
        %761 = vmatprep.subr.mxu0 0.0
        %762 = vmatpush1.msra.mxu0 0.0
        %763 = vmatprep.subr.mxu0 0.0
        %764 = vmatpush1.msra.mxu0 0.0
        %765 = vmatprep.subr.mxu0 0.0
        %766 = vmatpush1.msra.mxu0 0.0
        %767 = vmatprep.subr.mxu0 0.0
        %768 = vmatpush1.msra.mxu0 0.0
        %769 = vmatprep.subr.mxu0 0.0
        %770 = vmatpush1.msra.mxu0 0.0
        %771 = vmatprep.subr.mxu0 0.0
        %772 = vmatpush1.msra.mxu0 0.0
        %773 = vmatprep.subr.mxu0 0.0
        %774 = vmatpush1.msra.mxu0 0.0
        %775 = vmatprep.mubr.f32.mxu0 0.0
        %776 = vmatmul.mubr.f32.gmra.mrb[0].mxu0 %v709
        %v777 = vpop.f32.mrb[0].mxu0
        %v778 = vadd.f32 0.0, %v777
        %v779 = vpop.f32.mrb[0].mxu0
        %780 = vdwg.mxu0
        %v782 = vsel %vm634, %v613, 0
        %784 = vmatprep.subr.mxu0 0.0
        %785 = vmatpush1.msra.mxu0 %v550
        %786 = vmatprep.subr.mxu0 0.0
        %787 = vmatpush1.msra.mxu0 %v551
        %788 = vmatprep.subr.mxu0 0.0
        %789 = vmatpush1.msra.mxu0 0.0
        %790 = vmatprep.subr.mxu0 0.0
        %791 = vmatpush1.msra.mxu0 0.0
        %792 = vmatprep.subr.mxu0 0.0
        %793 = vmatpush1.msra.mxu0 0.0
        %794 = vmatprep.subr.mxu0 0.0
        %795 = vmatpush1.msra.mxu0 0.0
        %796 = vmatprep.subr.mxu0 0.0
        %797 = vmatpush1.msra.mxu0 0.0
        %798 = vmatprep.subr.mxu0 0.0
        %799 = vmatpush1.msra.mxu0 0.0
        %800 = vmatprep.subr.mxu0 0.0
        %801 = vmatpush1.msra.mxu0 0.0
        %802 = vmatprep.subr.mxu0 0.0
        %803 = vmatpush1.msra.mxu0 0.0
        %804 = vmatprep.subr.mxu0 0.0
        %805 = vmatpush1.msra.mxu0 0.0
        %806 = vmatprep.subr.mxu0 0.0
        %807 = vmatpush1.msra.mxu0 0.0
        %808 = vmatprep.subr.mxu0 0.0
        %809 = vmatpush1.msra.mxu0 0.0
        %810 = vmatprep.subr.mxu0 0.0
        %811 = vmatpush1.msra.mxu0 0.0
        %812 = vmatprep.subr.mxu0 0.0
        %813 = vmatpush1.msra.mxu0 0.0
        %814 = vmatprep.subr.mxu0 0.0
        %815 = vmatpush1.msra.mxu0 0.0
        %816 = vmatprep.subr.mxu0 0.0
        %817 = vmatpush1.msra.mxu0 0.0
        %818 = vmatprep.subr.mxu0 0.0
        %819 = vmatpush1.msra.mxu0 0.0
        %820 = vmatprep.subr.mxu0 0.0
        %821 = vmatpush1.msra.mxu0 0.0
        %822 = vmatprep.subr.mxu0 0.0
        %823 = vmatpush1.msra.mxu0 0.0
        %824 = vmatprep.subr.mxu0 0.0
        %825 = vmatpush1.msra.mxu0 0.0
        %826 = vmatprep.subr.mxu0 0.0
        %827 = vmatpush1.msra.mxu0 0.0
        %828 = vmatprep.subr.mxu0 0.0
        %829 = vmatpush1.msra.mxu0 0.0
        %830 = vmatprep.subr.mxu0 0.0
        %831 = vmatpush1.msra.mxu0 0.0
        %832 = vmatprep.subr.mxu0 0.0
        %833 = vmatpush1.msra.mxu0 0.0
        %834 = vmatprep.subr.mxu0 0.0
        %835 = vmatpush1.msra.mxu0 0.0
        %836 = vmatprep.subr.mxu0 0.0
        %837 = vmatpush1.msra.mxu0 0.0
        %838 = vmatprep.subr.mxu0 0.0
        %839 = vmatpush1.msra.mxu0 0.0
        %840 = vmatprep.subr.mxu0 0.0
        %841 = vmatpush1.msra.mxu0 0.0
        %842 = vmatprep.subr.mxu0 0.0
        %843 = vmatpush1.msra.mxu0 0.0
        %844 = vmatprep.subr.mxu0 0.0
        %845 = vmatpush1.msra.mxu0 0.0
        %846 = vmatprep.subr.mxu0 0.0
        %847 = vmatpush1.msra.mxu0 0.0
        %848 = vmatprep.mubr.f32.mxu0 0.0
        %849 = vmatmul.mubr.f32.gmra.mrb[0].mxu0 %v782
        %v850 = vpop.f32.mrb[0].mxu0
        %v851 = vadd.f32 0.0, %v850
        %v852 = vpop.f32.mrb[0].mxu0
        %853 = vdwg.mxu0
        %v855 = vsel %vm634, %v631, 0
        %857 = vmatprep.subr.mxu0 0.0
        %858 = vmatpush1.msra.mxu0 %v552
        %859 = vmatprep.subr.mxu0 0.0
        %860 = vmatpush1.msra.mxu0 %v553
        %861 = vmatprep.subr.mxu0 0.0
        %862 = vmatpush1.msra.mxu0 0.0
        %863 = vmatprep.subr.mxu0 0.0
        %864 = vmatpush1.msra.mxu0 0.0
        %865 = vmatprep.subr.mxu0 0.0
        %866 = vmatpush1.msra.mxu0 0.0
        %867 = vmatprep.subr.mxu0 0.0
        %868 = vmatpush1.msra.mxu0 0.0
        %869 = vmatprep.subr.mxu0 0.0
        %870 = vmatpush1.msra.mxu0 0.0
        %871 = vmatprep.subr.mxu0 0.0
        %872 = vmatpush1.msra.mxu0 0.0
        %873 = vmatprep.subr.mxu0 0.0
        %874 = vmatpush1.msra.mxu0 0.0
        %875 = vmatprep.subr.mxu0 0.0
        %876 = vmatpush1.msra.mxu0 0.0
        %877 = vmatprep.subr.mxu0 0.0
        %878 = vmatpush1.msra.mxu0 0.0
        %879 = vmatprep.subr.mxu0 0.0
        %880 = vmatpush1.msra.mxu0 0.0
        %881 = vmatprep.subr.mxu0 0.0
        %882 = vmatpush1.msra.mxu0 0.0
        %883 = vmatprep.subr.mxu0 0.0
        %884 = vmatpush1.msra.mxu0 0.0
        %885 = vmatprep.subr.mxu0 0.0
        %886 = vmatpush1.msra.mxu0 0.0
        %887 = vmatprep.subr.mxu0 0.0
        %888 = vmatpush1.msra.mxu0 0.0
        %889 = vmatprep.subr.mxu0 0.0
        %890 = vmatpush1.msra.mxu0 0.0
        %891 = vmatprep.subr.mxu0 0.0
        %892 = vmatpush1.msra.mxu0 0.0
        %893 = vmatprep.subr.mxu0 0.0
        %894 = vmatpush1.msra.mxu0 0.0
        %895 = vmatprep.subr.mxu0 0.0
        %896 = vmatpush1.msra.mxu0 0.0
        %897 = vmatprep.subr.mxu0 0.0
        %898 = vmatpush1.msra.mxu0 0.0
        %899 = vmatprep.subr.mxu0 0.0
        %900 = vmatpush1.msra.mxu0 0.0
        %901 = vmatprep.subr.mxu0 0.0
        %902 = vmatpush1.msra.mxu0 0.0
        %903 = vmatprep.subr.mxu0 0.0
        %904 = vmatpush1.msra.mxu0 0.0
        %905 = vmatprep.subr.mxu0 0.0
        %906 = vmatpush1.msra.mxu0 0.0
        %907 = vmatprep.subr.mxu0 0.0
        %908 = vmatpush1.msra.mxu0 0.0
        %909 = vmatprep.subr.mxu0 0.0
        %910 = vmatpush1.msra.mxu0 0.0
        %911 = vmatprep.subr.mxu0 0.0
        %912 = vmatpush1.msra.mxu0 0.0
        %913 = vmatprep.subr.mxu0 0.0
        %914 = vmatpush1.msra.mxu0 0.0
        %915 = vmatprep.subr.mxu0 0.0
        %916 = vmatpush1.msra.mxu0 0.0
        %917 = vmatprep.subr.mxu0 0.0
        %918 = vmatpush1.msra.mxu0 0.0
        %919 = vmatprep.subr.mxu0 0.0
        %920 = vmatpush1.msra.mxu0 0.0
        %921 = vmatprep.mubr.f32.mxu0 0.0
        %922 = vmatmul.mubr.f32.gmra.mrb[0].mxu0 %v855
        %v923 = vpop.f32.mrb[0].mxu0
        %v924 = vadd.f32 0.0, %v923
        %v925 = vpop.f32.mrb[0].mxu0
        %926 = vdwg.mxu0
        %v928 = vsel %vm634, %v622, 0
        %930 = vmatprep.subr.mxu0 0.0
        %931 = vmatpush1.msra.mxu0 %v554
        %932 = vmatprep.subr.mxu0 0.0
        %933 = vmatpush1.msra.mxu0 %v555
        %934 = vmatprep.subr.mxu0 0.0
        %935 = vmatpush1.msra.mxu0 0.0
        %936 = vmatprep.subr.mxu0 0.0
        %937 = vmatpush1.msra.mxu0 0.0
        %938 = vmatprep.subr.mxu0 0.0
        %939 = vmatpush1.msra.mxu0 0.0
        %940 = vmatprep.subr.mxu0 0.0
        %941 = vmatpush1.msra.mxu0 0.0
        %942 = vmatprep.subr.mxu0 0.0
        %943 = vmatpush1.msra.mxu0 0.0
        %944 = vmatprep.subr.mxu0 0.0
        %945 = vmatpush1.msra.mxu0 0.0
        %946 = vmatprep.subr.mxu0 0.0
        %947 = vmatpush1.msra.mxu0 0.0
        %948 = vmatprep.subr.mxu0 0.0
        %949 = vmatpush1.msra.mxu0 0.0
        %950 = vmatprep.subr.mxu0 0.0
        %951 = vmatpush1.msra.mxu0 0.0
        %952 = vmatprep.subr.mxu0 0.0
        %953 = vmatpush1.msra.mxu0 0.0
        %954 = vmatprep.subr.mxu0 0.0
        %955 = vmatpush1.msra.mxu0 0.0
        %956 = vmatprep.subr.mxu0 0.0
        %957 = vmatpush1.msra.mxu0 0.0
        %958 = vmatprep.subr.mxu0 0.0
        %959 = vmatpush1.msra.mxu0 0.0
        %960 = vmatprep.subr.mxu0 0.0
        %961 = vmatpush1.msra.mxu0 0.0
        %962 = vmatprep.subr.mxu0 0.0
        %963 = vmatpush1.msra.mxu0 0.0
        %964 = vmatprep.subr.mxu0 0.0
        %965 = vmatpush1.msra.mxu0 0.0
        %966 = vmatprep.subr.mxu0 0.0
        %967 = vmatpush1.msra.mxu0 0.0
        %968 = vmatprep.subr.mxu0 0.0
        %969 = vmatpush1.msra.mxu0 0.0
        %970 = vmatprep.subr.mxu0 0.0
        %971 = vmatpush1.msra.mxu0 0.0
        %972 = vmatprep.subr.mxu0 0.0
        %973 = vmatpush1.msra.mxu0 0.0
        %974 = vmatprep.subr.mxu0 0.0
        %975 = vmatpush1.msra.mxu0 0.0
        %976 = vmatprep.subr.mxu0 0.0
        %977 = vmatpush1.msra.mxu0 0.0
        %978 = vmatprep.subr.mxu0 0.0
        %979 = vmatpush1.msra.mxu0 0.0
        %980 = vmatprep.subr.mxu0 0.0
        %981 = vmatpush1.msra.mxu0 0.0
        %982 = vmatprep.subr.mxu0 0.0
        %983 = vmatpush1.msra.mxu0 0.0
        %984 = vmatprep.subr.mxu0 0.0
        %985 = vmatpush1.msra.mxu0 0.0
        %986 = vmatprep.subr.mxu0 0.0
        %987 = vmatpush1.msra.mxu0 0.0
        %988 = vmatprep.subr.mxu0 0.0
        %989 = vmatpush1.msra.mxu0 0.0
        %990 = vmatprep.subr.mxu0 0.0
        %991 = vmatpush1.msra.mxu0 0.0
        %992 = vmatprep.subr.mxu0 0.0
        %993 = vmatpush1.msra.mxu0 0.0
        %994 = vmatprep.mubr.f32.mxu0 0.0
        %995 = vmatmul.mubr.f32.gmra.mrb[0].mxu0 %v928
        %v996 = vpop.f32.mrb[0].mxu0
        %v997 = vadd.f32 0.0, %v996
        %v998 = vpop.f32.mrb[0].mxu0
        %999 = vdwg.mxu0
        %v1001 = vsel %vm634, %v632, 0
        %1003 = vmatprep.subr.mxu0 0.0
        %1004 = vmatpush1.msra.mxu0 %v556
        %1005 = vmatprep.subr.mxu0 0.0
        %1006 = vmatpush1.msra.mxu0 %v557
        %1007 = vmatprep.subr.mxu0 0.0
        %1008 = vmatpush1.msra.mxu0 0.0
        %1009 = vmatprep.subr.mxu0 0.0
        %1010 = vmatpush1.msra.mxu0 0.0
        %1011 = vmatprep.subr.mxu0 0.0
        %1012 = vmatpush1.msra.mxu0 0.0
        %1013 = vmatprep.subr.mxu0 0.0
        %1014 = vmatpush1.msra.mxu0 0.0
        %1015 = vmatprep.subr.mxu0 0.0
        %1016 = vmatpush1.msra.mxu0 0.0
        %1017 = vmatprep.subr.mxu0 0.0
        %1018 = vmatpush1.msra.mxu0 0.0
        %1019 = vmatprep.subr.mxu0 0.0
        %1020 = vmatpush1.msra.mxu0 0.0
        %1021 = vmatprep.subr.mxu0 0.0
        %1022 = vmatpush1.msra.mxu0 0.0
        %1023 = vmatprep.subr.mxu0 0.0
        %1024 = vmatpush1.msra.mxu0 0.0
        %1025 = vmatprep.subr.mxu0 0.0
        %1026 = vmatpush1.msra.mxu0 0.0
        %1027 = vmatprep.subr.mxu0 0.0
        %1028 = vmatpush1.msra.mxu0 0.0
        %1029 = vmatprep.subr.mxu0 0.0
        %1030 = vmatpush1.msra.mxu0 0.0
        %1031 = vmatprep.subr.mxu0 0.0
        %1032 = vmatpush1.msra.mxu0 0.0
        %1033 = vmatprep.subr.mxu0 0.0
        %1034 = vmatpush1.msra.mxu0 0.0
        %1035 = vmatprep.subr.mxu0 0.0
        %1036 = vmatpush1.msra.mxu0 0.0
        %1037 = vmatprep.subr.mxu0 0.0
        %1038 = vmatpush1.msra.mxu0 0.0
        %1039 = vmatprep.subr.mxu0 0.0
        %1040 = vmatpush1.msra.mxu0 0.0
        %1041 = vmatprep.subr.mxu0 0.0
        %1042 = vmatpush1.msra.mxu0 0.0
        %1043 = vmatprep.subr.mxu0 0.0
        %1044 = vmatpush1.msra.mxu0 0.0
        %1045 = vmatprep.subr.mxu0 0.0
        %1046 = vmatpush1.msra.mxu0 0.0
        %1047 = vmatprep.subr.mxu0 0.0
        %1048 = vmatpush1.msra.mxu0 0.0
        %1049 = vmatprep.subr.mxu0 0.0
        %1050 = vmatpush1.msra.mxu0 0.0
        %1051 = vmatprep.subr.mxu0 0.0
        %1052 = vmatpush1.msra.mxu0 0.0
        %1053 = vmatprep.subr.mxu0 0.0
        %1054 = vmatpush1.msra.mxu0 0.0
        %1055 = vmatprep.subr.mxu0 0.0
        %1056 = vmatpush1.msra.mxu0 0.0
        %1057 = vmatprep.subr.mxu0 0.0
        %1058 = vmatpush1.msra.mxu0 0.0
        %1059 = vmatprep.subr.mxu0 0.0
        %1060 = vmatpush1.msra.mxu0 0.0
        %1061 = vmatprep.subr.mxu0 0.0
        %1062 = vmatpush1.msra.mxu0 0.0
        %1063 = vmatprep.subr.mxu0 0.0
        %1064 = vmatpush1.msra.mxu0 0.0
        %1065 = vmatprep.subr.mxu0 0.0
        %1066 = vmatpush1.msra.mxu0 0.0
        %1067 = vmatprep.mubr.f32.mxu0 0.0
        %1068 = vmatmul.mubr.f32.gmra.mrb[0].mxu0 %v1001
        %v1069 = vpop.f32.mrb[0].mxu0
        %v1070 = vadd.f32 0.0, %v1069
        %v1071 = vpop.f32.mrb[0].mxu0
        %1072 = vdwg.mxu0
        %v1074 = vsel %vm634, %v629, 0
        %1076 = vmatprep.subr.mxu0 0.0
        %1077 = vmatpush1.msra.mxu0 %v558
        %1078 = vmatprep.subr.mxu0 0.0
        %1079 = vmatpush1.msra.mxu0 %v559
        %1080 = vmatprep.subr.mxu0 0.0
        %1081 = vmatpush1.msra.mxu0 0.0
        %1082 = vmatprep.subr.mxu0 0.0
        %1083 = vmatpush1.msra.mxu0 0.0
        %1084 = vmatprep.subr.mxu0 0.0
        %1085 = vmatpush1.msra.mxu0 0.0
        %1086 = vmatprep.subr.mxu0 0.0
        %1087 = vmatpush1.msra.mxu0 0.0
        %1088 = vmatprep.subr.mxu0 0.0
        %1089 = vmatpush1.msra.mxu0 0.0
        %1090 = vmatprep.subr.mxu0 0.0
        %1091 = vmatpush1.msra.mxu0 0.0
        %1092 = vmatprep.subr.mxu0 0.0
        %1093 = vmatpush1.msra.mxu0 0.0
        %1094 = vmatprep.subr.mxu0 0.0
        %1095 = vmatpush1.msra.mxu0 0.0
        %1096 = vmatprep.subr.mxu0 0.0
        %1097 = vmatpush1.msra.mxu0 0.0
        %1098 = vmatprep.subr.mxu0 0.0
        %1099 = vmatpush1.msra.mxu0 0.0
        %1100 = vmatprep.subr.mxu0 0.0
        %1101 = vmatpush1.msra.mxu0 0.0
        %1102 = vmatprep.subr.mxu0 0.0
        %1103 = vmatpush1.msra.mxu0 0.0
        %1104 = vmatprep.subr.mxu0 0.0
        %1105 = vmatpush1.msra.mxu0 0.0
        %1106 = vmatprep.subr.mxu0 0.0
        %1107 = vmatpush1.msra.mxu0 0.0
        %1108 = vmatprep.subr.mxu0 0.0
        %1109 = vmatpush1.msra.mxu0 0.0
        %1110 = vmatprep.subr.mxu0 0.0
        %1111 = vmatpush1.msra.mxu0 0.0
        %1112 = vmatprep.subr.mxu0 0.0
        %1113 = vmatpush1.msra.mxu0 0.0
        %1114 = vmatprep.subr.mxu0 0.0
        %1115 = vmatpush1.msra.mxu0 0.0
        %1116 = vmatprep.subr.mxu0 0.0
        %1117 = vmatpush1.msra.mxu0 0.0
        %1118 = vmatprep.subr.mxu0 0.0
        %1119 = vmatpush1.msra.mxu0 0.0
        %1120 = vmatprep.subr.mxu0 0.0
        %1121 = vmatpush1.msra.mxu0 0.0
        %1122 = vmatprep.subr.mxu0 0.0
        %1123 = vmatpush1.msra.mxu0 0.0
        %1124 = vmatprep.subr.mxu0 0.0
        %1125 = vmatpush1.msra.mxu0 0.0
        %1126 = vmatprep.subr.mxu0 0.0
        %1127 = vmatpush1.msra.mxu0 0.0
        %1128 = vmatprep.subr.mxu0 0.0
        %1129 = vmatpush1.msra.mxu0 0.0
        %1130 = vmatprep.subr.mxu0 0.0
        %1131 = vmatpush1.msra.mxu0 0.0
        %1132 = vmatprep.subr.mxu0 0.0
        %1133 = vmatpush1.msra.mxu0 0.0
        %1134 = vmatprep.subr.mxu0 0.0
        %1135 = vmatpush1.msra.mxu0 0.0
        %1136 = vmatprep.subr.mxu0 0.0
        %1137 = vmatpush1.msra.mxu0 0.0
        %1138 = vmatprep.subr.mxu0 0.0
        %1139 = vmatpush1.msra.mxu0 0.0
        %1140 = vmatprep.mubr.f32.mxu0 0.0
        %1141 = vmatmul.mubr.f32.gmra.mrb[0].mxu0 %v1074
        %v1142 = vpop.f32.mrb[0].mxu0
        %v1143 = vadd.f32 0.0, %v1142
        %v1144 = vpop.f32.mrb[0].mxu0
        %1145 = vdwg.mxu0
        %v1147 = vsel %vm634, %v633, 0
        %1149 = vmatprep.subr.mxu0 0.0
        %1150 = vmatpush1.msra.mxu0 %v560
        %1151 = vmatprep.subr.mxu0 0.0
        %1152 = vmatpush1.msra.mxu0 %v561
        %1153 = vmatprep.subr.mxu0 0.0
        %1154 = vmatpush1.msra.mxu0 0.0
        %1155 = vmatprep.subr.mxu0 0.0
        %1156 = vmatpush1.msra.mxu0 0.0
        %1157 = vmatprep.subr.mxu0 0.0
        %1158 = vmatpush1.msra.mxu0 0.0
        %1159 = vmatprep.subr.mxu0 0.0
        %1160 = vmatpush1.msra.mxu0 0.0
        %1161 = vmatprep.subr.mxu0 0.0
        %1162 = vmatpush1.msra.mxu0 0.0
        %1163 = vmatprep.subr.mxu0 0.0
        %1164 = vmatpush1.msra.mxu0 0.0
        %1165 = vmatprep.subr.mxu0 0.0
        %1166 = vmatpush1.msra.mxu0 0.0
        %1167 = vmatprep.subr.mxu0 0.0
        %1168 = vmatpush1.msra.mxu0 0.0
        %1169 = vmatprep.subr.mxu0 0.0
        %1170 = vmatpush1.msra.mxu0 0.0
        %1171 = vmatprep.subr.mxu0 0.0
        %1172 = vmatpush1.msra.mxu0 0.0
        %1173 = vmatprep.subr.mxu0 0.0
        %1174 = vmatpush1.msra.mxu0 0.0
        %1175 = vmatprep.subr.mxu0 0.0
        %1176 = vmatpush1.msra.mxu0 0.0
        %1177 = vmatprep.subr.mxu0 0.0
        %1178 = vmatpush1.msra.mxu0 0.0
        %1179 = vmatprep.subr.mxu0 0.0
        %1180 = vmatpush1.msra.mxu0 0.0
        %1181 = vmatprep.subr.mxu0 0.0
        %1182 = vmatpush1.msra.mxu0 0.0
        %1183 = vmatprep.subr.mxu0 0.0
        %1184 = vmatpush1.msra.mxu0 0.0
        %1185 = vmatprep.subr.mxu0 0.0
        %1186 = vmatpush1.msra.mxu0 0.0
        %1187 = vmatprep.subr.mxu0 0.0
        %1188 = vmatpush1.msra.mxu0 0.0
        %1189 = vmatprep.subr.mxu0 0.0
        %1190 = vmatpush1.msra.mxu0 0.0
        %1191 = vmatprep.subr.mxu0 0.0
        %1192 = vmatpush1.msra.mxu0 0.0
        %1193 = vmatprep.subr.mxu0 0.0
        %1194 = vmatpush1.msra.mxu0 0.0
        %1195 = vmatprep.subr.mxu0 0.0
        %1196 = vmatpush1.msra.mxu0 0.0
        %1197 = vmatprep.subr.mxu0 0.0
        %1198 = vmatpush1.msra.mxu0 0.0
        %1199 = vmatprep.subr.mxu0 0.0
        %1200 = vmatpush1.msra.mxu0 0.0
        %1201 = vmatprep.subr.mxu0 0.0
        %1202 = vmatpush1.msra.mxu0 0.0
        %1203 = vmatprep.subr.mxu0 0.0
        %1204 = vmatpush1.msra.mxu0 0.0
        %1205 = vmatprep.subr.mxu0 0.0
        %1206 = vmatpush1.msra.mxu0 0.0
        %1207 = vmatprep.subr.mxu0 0.0
        %1208 = vmatpush1.msra.mxu0 0.0
        %1209 = vmatprep.subr.mxu0 0.0
        %1210 = vmatpush1.msra.mxu0 0.0
        %1211 = vmatprep.subr.mxu0 0.0
        %1212 = vmatpush1.msra.mxu0 0.0
        %1213 = vmatprep.mubr.f32.mxu0 0.0
        %1214 = vmatmul.mubr.f32.gmra.mrb[0].mxu0 %v1147
        %v1215 = vpop.f32.mrb[0].mxu0
        %v1216 = vadd.f32 0.0, %v1215
        %v1217 = vpop.f32.mrb[0].mxu0
        %1218 = vdwg.mxu0
        %v1219 = vpack.c.bf16 %v705, %v705
        %v1220 = vpack.c.bf16 %v778, %v778
        %v1221 = vpack.c.bf16 %v851, %v851
        %v1222 = vpack.c.bf16 %v924, %v924
        %v1223 = vpack.c.bf16 %v997, %v997
        %v1224 = vpack.c.bf16 %v1070, %v1070
        %v1225 = vpack.c.bf16 %v1143, %v1143
        %v1226 = vpack.c.bf16 %v1216, %v1216
        %v1227 = vld [vmem:[#allocation7] sm:$0xf]
        %v1228 = vld [vmem:[#allocation7 + $0x4] sm:$0xf]
        %v1229 = vld [vmem:[#allocation7 + $0x8] sm:$0xf]
        %v1230 = vld [vmem:[#allocation7 + $0xc] sm:$0xf]
        %v1231 = vld [vmem:[#allocation7 + $0x10] sm:$0xf]
        %v1232 = vld [vmem:[#allocation7 + $0x14] sm:$0xf]
        %v1233 = vld [vmem:[#allocation7 + $0x18] sm:$0xf]
        %v1234 = vld [vmem:[#allocation7 + $0x1c] sm:$0xf]
        %v1235 = vld [vmem:[#allocation7 + $0x20] sm:$0xf]
        %v1236 = vld [vmem:[#allocation7 + $0x24] sm:$0xf]
        %v1237 = vld [vmem:[#allocation7 + $0x28] sm:$0xf]
        %v1238 = vld [vmem:[#allocation7 + $0x2c] sm:$0xf]
        %v1239 = vld [vmem:[#allocation7 + $0x30] sm:$0xf]
        %v1240 = vld [vmem:[#allocation7 + $0x34] sm:$0xf]
        %v1241 = vld [vmem:[#allocation7 + $0x38] sm:$0xf]
        %v1242 = vld [vmem:[#allocation7 + $0x3c] sm:$0xf]
        %v1243 = vld [vmem:[#allocation7 + $0x40] sm:$0xf]
        %v1244 = vld [vmem:[#allocation7 + $0x44] sm:$0xf]
        %v1245 = vld [vmem:[#allocation7 + $0x48] sm:$0xf]
        %v1246 = vld [vmem:[#allocation7 + $0x4c] sm:$0xf]
        %v1247 = vld [vmem:[#allocation7 + $0x50] sm:$0xf]
        %v1248 = vld [vmem:[#allocation7 + $0x54] sm:$0xf]
        %v1249 = vld [vmem:[#allocation7 + $0x58] sm:$0xf]
        %v1250 = vld [vmem:[#allocation7 + $0x5c] sm:$0xf]
        %v1251 = vld [vmem:[#allocation7 + $0x60] sm:$0xf]
        %v1252 = vld [vmem:[#allocation7 + $0x64] sm:$0xf]
        %v1253 = vld [vmem:[#allocation7 + $0x68] sm:$0xf]
        %v1254 = vld [vmem:[#allocation7 + $0x6c] sm:$0xf]
        %v1255 = vld [vmem:[#allocation7 + $0x70] sm:$0xf]
        %v1256 = vld [vmem:[#allocation7 + $0x74] sm:$0xf]
        %v1257 = vld [vmem:[#allocation7 + $0x78] sm:$0xf]
        %v1258 = vld [vmem:[#allocation7 + $0x7c] sm:$0xf]
        %v1267 = vunpack.c.l.b16 %v1219
        %v1268 = vunpack.c.l.b16 %v1220
        %v1269 = vunpack.c.l.b16 %v1221
        %v1270 = vunpack.c.l.b16 %v1222
        %v1271 = vunpack.c.l.b16 %v1223
        %v1272 = vunpack.c.l.b16 %v1224
        %v1273 = vunpack.c.l.b16 %v1225
        %v1274 = vunpack.c.l.b16 %v1226
        %v1275 = vrot.slane %v1267, 1
        %vm1276 = vcmask 1041409
        %v1277 = vsel %vm1276, %v1268, %v1275
        %v1278 = vrot.slane %v1269, 7
        %vm1279 = vcmask 1042434
        %v1280 = vsel %vm1279, %v1278, %v1277
        %v1281 = vrot.slane %v1270, 6
        %vm1282 = vcmask 1043459
        %v1283 = vsel %vm1282, %v1281, %v1280
        %v1284 = vrot.slane %v1271, 5
        %vm1285 = vcmask 1044484
        %v1286 = vsel %vm1285, %v1284, %v1283
        %v1287 = vrot.slane %v1272, 4
        %vm1288 = vcmask 1045509
        %v1289 = vsel %vm1288, %v1287, %v1286
        %v1290 = vrot.slane %v1273, 3
        %vm1291 = vcmask 1046534
        %v1292 = vsel %vm1291, %v1290, %v1289
        %v1293 = vrot.slane %v1274, 2
        %vm1294 = vcmask 1047559
        %v1295 = vsel %vm1294, %v1293, %v1292
        %v1296 = vpack.c.b16 %v1295, %v1295
        %v1314 = vunpack.c.l.b16 %v1243
        %v1315 = vunpack.c.l.b16 %v1244
        %v1316 = vunpack.c.l.b16 %v1245
        %v1317 = vunpack.c.l.b16 %v1246
        %v1318 = vunpack.c.l.b16 %v1247
        %v1319 = vunpack.c.l.b16 %v1248
        %v1320 = vunpack.c.l.b16 %v1249
        %v1321 = vunpack.c.l.b16 %v1250
        %v1322 = vunpack.c.l.b16 %v1251
        %v1323 = vunpack.c.l.b16 %v1252
        %v1324 = vunpack.c.l.b16 %v1253
        %v1325 = vunpack.c.l.b16 %v1254
        %v1326 = vunpack.c.l.b16 %v1255
        %v1327 = vunpack.c.l.b16 %v1256
        %v1328 = vunpack.c.l.b16 %v1257
        %v1329 = vunpack.c.l.b16 %v1258
        %v1330 = vpack.c.b16 %v1315, %v1314
        %v1331 = vpack.c.b16 %v1317, %v1316
        %v1332 = vpack.c.b16 %v1319, %v1318
        %v1333 = vpack.c.b16 %v1321, %v1320
        %v1334 = vpack.c.b16 %v1323, %v1322
        %v1335 = vpack.c.b16 %v1325, %v1324
        %v1336 = vpack.c.b16 %v1327, %v1326
        %v1337 = vpack.c.b16 %v1329, %v1328
        %1346 = vmatprep.subr.bf16.mxu0 0
        %1347 = vmatpush1.bf16.msra.mxu0 %v1330
        %1348 = vmatprep.subr.bf16.mxu0 0
        %1349 = vmatpush1.bf16.msra.mxu0 %v1331
        %1350 = vmatprep.subr.bf16.mxu0 0
        %1351 = vmatpush1.bf16.msra.mxu0 %v1332
        %1352 = vmatprep.subr.bf16.mxu0 0
        %1353 = vmatpush1.bf16.msra.mxu0 %v1333
        %1354 = vmatprep.subr.bf16.mxu0 0
        %1355 = vmatpush1.bf16.msra.mxu0 %v1334
        %1356 = vmatprep.subr.bf16.mxu0 0
        %1357 = vmatpush1.bf16.msra.mxu0 %v1335
        %1358 = vmatprep.subr.bf16.mxu0 0
        %1359 = vmatpush1.bf16.msra.mxu0 %v1336
        %1360 = vmatprep.subr.bf16.mxu0 0
        %1361 = vmatpush1.bf16.msra.mxu0 %v1337
        %1362 = vmatprep.subr.bf16.mxu0 0
        %1363 = vmatpush1.bf16.msra.mxu0 0
        %1364 = vmatprep.subr.bf16.mxu0 0
        %1365 = vmatpush1.bf16.msra.mxu0 0
        %1366 = vmatprep.subr.bf16.mxu0 0
        %1367 = vmatpush1.bf16.msra.mxu0 0
        %1368 = vmatprep.subr.bf16.mxu0 0
        %1369 = vmatpush1.bf16.msra.mxu0 0
        %1370 = vmatprep.subr.bf16.mxu0 0
        %1371 = vmatpush1.bf16.msra.mxu0 0
        %1372 = vmatprep.subr.bf16.mxu0 0
        %1373 = vmatpush1.bf16.msra.mxu0 0
        %1374 = vmatprep.subr.bf16.mxu0 0
        %1375 = vmatpush1.bf16.msra.mxu0 0
        %1376 = vmatprep.subr.bf16.mxu0 0
        %1377 = vmatpush1.bf16.msra.mxu0 0
        %1378 = vmatprep.mubr.bf16.mxu0 0
        %1379 = vmatmul.mubr.bf16.gmra.mrb[0].mxu0 %v1296
        %v1380 = vpop.f32.mrb[0].mxu0
        %v1381 = vadd.f32 0.0, %v1380
        %v1382 = vpop.f32.mrb[0].mxu0
        %v1383 = vpop.f32.mrb[0].mxu0
        %v1384 = vpop.f32.mrb[0].mxu0
        %1385 = vdwg.mxu0
        %v1386 = vrot.slane %v1268, 7
        %v1387 = vsel %vm1276, %v1386, %v1267
        %v1388 = vrot.slane %v1269, 6
        %v1389 = vsel %vm1279, %v1388, %v1387
        %v1390 = vrot.slane %v1270, 5
        %v1391 = vsel %vm1282, %v1390, %v1389
        %v1392 = vrot.slane %v1271, 4
        %v1393 = vsel %vm1285, %v1392, %v1391
        %v1394 = vrot.slane %v1272, 3
        %v1395 = vsel %vm1288, %v1394, %v1393
        %v1396 = vrot.slane %v1273, 2
        %v1397 = vsel %vm1291, %v1396, %v1395
        %v1398 = vrot.slane %v1274, 1
        %v1399 = vsel %vm1294, %v1398, %v1397
        %v1400 = vpack.c.b16 %v1399, %v1399
        %v1418 = vunpack.c.l.b16 %v1227
        %v1419 = vunpack.c.l.b16 %v1228
        %v1420 = vunpack.c.l.b16 %v1229
        %v1421 = vunpack.c.l.b16 %v1230
        %v1422 = vunpack.c.l.b16 %v1231
        %v1423 = vunpack.c.l.b16 %v1232
        %v1424 = vunpack.c.l.b16 %v1233
        %v1425 = vunpack.c.l.b16 %v1234
        %v1426 = vunpack.c.l.b16 %v1235
        %v1427 = vunpack.c.l.b16 %v1236
        %v1428 = vunpack.c.l.b16 %v1237
        %v1429 = vunpack.c.l.b16 %v1238
        %v1430 = vunpack.c.l.b16 %v1239
        %v1431 = vunpack.c.l.b16 %v1240
        %v1432 = vunpack.c.l.b16 %v1241
        %v1433 = vunpack.c.l.b16 %v1242
        %v1434 = vpack.c.b16 %v1419, %v1418
        %v1435 = vpack.c.b16 %v1421, %v1420
        %v1436 = vpack.c.b16 %v1423, %v1422
        %v1437 = vpack.c.b16 %v1425, %v1424
        %v1438 = vpack.c.b16 %v1427, %v1426
        %v1439 = vpack.c.b16 %v1429, %v1428
        %v1440 = vpack.c.b16 %v1431, %v1430
        %v1441 = vpack.c.b16 %v1433, %v1432
        %1450 = vmatprep.subr.bf16.mxu0 0
        %1451 = vmatpush1.bf16.msra.mxu0 %v1434
        %1452 = vmatprep.subr.bf16.mxu0 0
        %1453 = vmatpush1.bf16.msra.mxu0 %v1435
        %1454 = vmatprep.subr.bf16.mxu0 0
        %1455 = vmatpush1.bf16.msra.mxu0 %v1436
        %1456 = vmatprep.subr.bf16.mxu0 0
        %1457 = vmatpush1.bf16.msra.mxu0 %v1437
        %1458 = vmatprep.subr.bf16.mxu0 0
        %1459 = vmatpush1.bf16.msra.mxu0 %v1438
        %1460 = vmatprep.subr.bf16.mxu0 0
        %1461 = vmatpush1.bf16.msra.mxu0 %v1439
        %1462 = vmatprep.subr.bf16.mxu0 0
        %1463 = vmatpush1.bf16.msra.mxu0 %v1440
        %1464 = vmatprep.subr.bf16.mxu0 0
        %1465 = vmatpush1.bf16.msra.mxu0 %v1441
        %1466 = vmatprep.subr.bf16.mxu0 0
        %1467 = vmatpush1.bf16.msra.mxu0 0
        %1468 = vmatprep.subr.bf16.mxu0 0
        %1469 = vmatpush1.bf16.msra.mxu0 0
        %1470 = vmatprep.subr.bf16.mxu0 0
        %1471 = vmatpush1.bf16.msra.mxu0 0
        %1472 = vmatprep.subr.bf16.mxu0 0
        %1473 = vmatpush1.bf16.msra.mxu0 0
        %1474 = vmatprep.subr.bf16.mxu0 0
        %1475 = vmatpush1.bf16.msra.mxu0 0
        %1476 = vmatprep.subr.bf16.mxu0 0
        %1477 = vmatpush1.bf16.msra.mxu0 0
        %1478 = vmatprep.subr.bf16.mxu0 0
        %1479 = vmatpush1.bf16.msra.mxu0 0
        %1480 = vmatprep.subr.bf16.mxu0 0
        %1481 = vmatpush1.bf16.msra.mxu0 0
        %1482 = vmatprep.mubr.bf16.mxu0 0
        %1483 = vmatmul.mubr.bf16.gmra.mrb[0].mxu0 %v1400
        %v1484 = vpop.f32.mrb[0].mxu0
        %v1485 = vadd.f32 %v1381, %v1484
        %v1486 = vpop.f32.mrb[0].mxu0
        %v1487 = vpop.f32.mrb[0].mxu0
        %v1488 = vpop.f32.mrb[0].mxu0
        %1489 = vdwg.mxu0
        %v1498 = vrot.slane %v705, 1
        %v1499 = vrot.slane %v778, 1
        %v1500 = vrot.slane %v851, 1
        %v1501 = vrot.slane %v924, 1
        %v1502 = vrot.slane %v997, 1
        %v1503 = vrot.slane %v1070, 1
        %v1504 = vrot.slane %v1143, 1
        %v1505 = vrot.slane %v1216, 1
        %v1514 = vmul.f32 %v705, %v1498
        %v1515 = vmul.f32 %v778, %v1499
        %v1516 = vmul.f32 %v851, %v1500
        %v1517 = vmul.f32 %v924, %v1501
        %v1518 = vmul.f32 %v997, %v1502
        %v1519 = vmul.f32 %v1070, %v1503
        %v1520 = vmul.f32 %v1143, %v1504
        %v1521 = vmul.f32 %v1216, %v1505
        %v1522 = vpack.c.bf16 %v1514, %v1514
        %v1523 = vpack.c.bf16 %v1515, %v1515
        %v1524 = vpack.c.bf16 %v1516, %v1516
        %v1525 = vpack.c.bf16 %v1517, %v1517
        %v1526 = vpack.c.bf16 %v1518, %v1518
        %v1527 = vpack.c.bf16 %v1519, %v1519
        %v1528 = vpack.c.bf16 %v1520, %v1520
        %v1529 = vpack.c.bf16 %v1521, %v1521
        %v1530 = vld [vmem:[#allocation7 + $0x80] sm:$0xf]
        %v1531 = vld [vmem:[#allocation7 + $0x84] sm:$0xf]
        %v1532 = vld [vmem:[#allocation7 + $0x88] sm:$0xf]
        %v1533 = vld [vmem:[#allocation7 + $0x8c] sm:$0xf]
        %v1534 = vld [vmem:[#allocation7 + $0x90] sm:$0xf]
        %v1535 = vld [vmem:[#allocation7 + $0x94] sm:$0xf]
        %v1536 = vld [vmem:[#allocation7 + $0x98] sm:$0xf]
        %v1537 = vld [vmem:[#allocation7 + $0x9c] sm:$0xf]
        %v1538 = vld [vmem:[#allocation7 + $0xa0] sm:$0xf]
        %v1539 = vld [vmem:[#allocation7 + $0xa4] sm:$0xf]
        %v1540 = vld [vmem:[#allocation7 + $0xa8] sm:$0xf]
        %v1541 = vld [vmem:[#allocation7 + $0xac] sm:$0xf]
        %v1542 = vld [vmem:[#allocation7 + $0xb0] sm:$0xf]
        %v1543 = vld [vmem:[#allocation7 + $0xb4] sm:$0xf]
        %v1544 = vld [vmem:[#allocation7 + $0xb8] sm:$0xf]
        %v1545 = vld [vmem:[#allocation7 + $0xbc] sm:$0xf]
        %v1554 = vunpack.c.l.b16 %v1522
        %v1555 = vunpack.c.l.b16 %v1523
        %v1556 = vunpack.c.l.b16 %v1524
        %v1557 = vunpack.c.l.b16 %v1525
        %v1558 = vunpack.c.l.b16 %v1526
        %v1559 = vunpack.c.l.b16 %v1527
        %v1560 = vunpack.c.l.b16 %v1528
        %v1561 = vunpack.c.l.b16 %v1529
        %v1562 = vrot.slane %v1555, 7
        %v1563 = vsel %vm1276, %v1562, %v1554
        %v1564 = vrot.slane %v1556, 6
        %v1565 = vsel %vm1279, %v1564, %v1563
        %v1566 = vrot.slane %v1557, 5
        %v1567 = vsel %vm1282, %v1566, %v1565
        %v1568 = vrot.slane %v1558, 4
        %v1569 = vsel %vm1285, %v1568, %v1567
        %v1570 = vrot.slane %v1559, 3
        %v1571 = vsel %vm1288, %v1570, %v1569
        %v1572 = vrot.slane %v1560, 2
        %v1573 = vsel %vm1291, %v1572, %v1571
        %v1574 = vrot.slane %v1561, 1
        %v1575 = vsel %vm1294, %v1574, %v1573
        %v1576 = vpack.c.b16 %v1575, %v1575
        %v1594 = vunpack.c.l.b16 %v1530
        %v1595 = vunpack.c.l.b16 %v1531
        %v1596 = vunpack.c.l.b16 %v1532
        %v1597 = vunpack.c.l.b16 %v1533
        %v1598 = vunpack.c.l.b16 %v1534
        %v1599 = vunpack.c.l.b16 %v1535
        %v1600 = vunpack.c.l.b16 %v1536
        %v1601 = vunpack.c.l.b16 %v1537
        %v1602 = vunpack.c.l.b16 %v1538
        %v1603 = vunpack.c.l.b16 %v1539
        %v1604 = vunpack.c.l.b16 %v1540
        %v1605 = vunpack.c.l.b16 %v1541
        %v1606 = vunpack.c.l.b16 %v1542
        %v1607 = vunpack.c.l.b16 %v1543
        %v1608 = vunpack.c.l.b16 %v1544
        %v1609 = vunpack.c.l.b16 %v1545
        %v1610 = vpack.c.b16 %v1595, %v1594
        %v1611 = vpack.c.b16 %v1597, %v1596
        %v1612 = vpack.c.b16 %v1599, %v1598
        %v1613 = vpack.c.b16 %v1601, %v1600
        %v1614 = vpack.c.b16 %v1603, %v1602
        %v1615 = vpack.c.b16 %v1605, %v1604
        %v1616 = vpack.c.b16 %v1607, %v1606
        %v1617 = vpack.c.b16 %v1609, %v1608
        %1626 = vmatprep.subr.bf16.mxu0 0
        %1627 = vmatpush1.bf16.msra.mxu0 %v1610
        %1628 = vmatprep.subr.bf16.mxu0 0
        %1629 = vmatpush1.bf16.msra.mxu0 %v1611
        %1630 = vmatprep.subr.bf16.mxu0 0
        %1631 = vmatpush1.bf16.msra.mxu0 %v1612
        %1632 = vmatprep.subr.bf16.mxu0 0
        %1633 = vmatpush1.bf16.msra.mxu0 %v1613
        %1634 = vmatprep.subr.bf16.mxu0 0
        %1635 = vmatpush1.bf16.msra.mxu0 %v1614
        %1636 = vmatprep.subr.bf16.mxu0 0
        %1637 = vmatpush1.bf16.msra.mxu0 %v1615
        %1638 = vmatprep.subr.bf16.mxu0 0
        %1639 = vmatpush1.bf16.msra.mxu0 %v1616
        %1640 = vmatprep.subr.bf16.mxu0 0
        %1641 = vmatpush1.bf16.msra.mxu0 %v1617
        %1642 = vmatprep.subr.bf16.mxu0 0
        %1643 = vmatpush1.bf16.msra.mxu0 0
        %1644 = vmatprep.subr.bf16.mxu0 0
        %1645 = vmatpush1.bf16.msra.mxu0 0
        %1646 = vmatprep.subr.bf16.mxu0 0
        %1647 = vmatpush1.bf16.msra.mxu0 0
        %1648 = vmatprep.subr.bf16.mxu0 0
        %1649 = vmatpush1.bf16.msra.mxu0 0
        %1650 = vmatprep.subr.bf16.mxu0 0
        %1651 = vmatpush1.bf16.msra.mxu0 0
        %1652 = vmatprep.subr.bf16.mxu0 0
        %1653 = vmatpush1.bf16.msra.mxu0 0
        %1654 = vmatprep.subr.bf16.mxu0 0
        %1655 = vmatpush1.bf16.msra.mxu0 0
        %1656 = vmatprep.subr.bf16.mxu0 0
        %1657 = vmatpush1.bf16.msra.mxu0 0
        %1658 = vmatprep.mubr.bf16.mxu0 0
        %1659 = vmatmul.mubr.bf16.gmra.mrb[0].mxu0 %v1576
        %v1660 = vpop.f32.mrb[0].mxu0
        %v1661 = vadd.f32 0.0, %v1660
        %v1662 = vpop.f32.mrb[0].mxu0
        %v1663 = vpop.f32.mrb[0].mxu0
        %v1664 = vpop.f32.mrb[0].mxu0
        %1665 = vdwg.mxu0
        %v1666 = vadd.f32 %v1485, %v1661
        %v1667 = vld [vmem:[%s3] sm:$0x1]
        %v1669 = vlaneseq
        %v1670 = vshrl.u32 %v1669, 7
        %v1671 = vsub.s32 0, %v1670
        %v1672 = vrot.slane %v1667, %v1671
        %v1674 = vadd.f32 %v1666, %v1672
        %v1675 = vtanh.pop %v1674
        %v1676 = vrot.slane %v1267, 3
        %v1677 = vrot.slane %v1268, 2
        %v1678 = vsel %vm1276, %v1677, %v1676
        %v1679 = vrot.slane %v1269, 1
        %v1680 = vsel %vm1279, %v1679, %v1678
        %v1681 = vsel %vm1282, %v1270, %v1680
        %v1682 = vrot.slane %v1271, 7
        %v1683 = vsel %vm1285, %v1682, %v1681
        %v1684 = vrot.slane %v1272, 6
        %v1685 = vsel %vm1288, %v1684, %v1683
        %v1686 = vrot.slane %v1273, 5
        %v1687 = vsel %vm1291, %v1686, %v1685
        %v1688 = vrot.slane %v1274, 4
        %v1689 = vsel %vm1294, %v1688, %v1687
        %v1690 = vpack.c.b16 %v1689, %v1689
        %1692 = vmatprep.subr.bf16.mxu0 0
        %1693 = vmatpush1.bf16.msra.mxu0 %v1330
        %1694 = vmatprep.subr.bf16.mxu0 0
        %1695 = vmatpush1.bf16.msra.mxu0 %v1331
        %1696 = vmatprep.subr.bf16.mxu0 0
        %1697 = vmatpush1.bf16.msra.mxu0 %v1332
        %1698 = vmatprep.subr.bf16.mxu0 0
        %1699 = vmatpush1.bf16.msra.mxu0 %v1333
        %1700 = vmatprep.subr.bf16.mxu0 0
        %1701 = vmatpush1.bf16.msra.mxu0 %v1334
        %1702 = vmatprep.subr.bf16.mxu0 0
        %1703 = vmatpush1.bf16.msra.mxu0 %v1335
        %1704 = vmatprep.subr.bf16.mxu0 0
        %1705 = vmatpush1.bf16.msra.mxu0 %v1336
        %1706 = vmatprep.subr.bf16.mxu0 0
        %1707 = vmatpush1.bf16.msra.mxu0 %v1337
        %1708 = vmatprep.subr.bf16.mxu0 0
        %1709 = vmatpush1.bf16.msra.mxu0 0
        %1710 = vmatprep.subr.bf16.mxu0 0
        %1711 = vmatpush1.bf16.msra.mxu0 0
        %1712 = vmatprep.subr.bf16.mxu0 0
        %1713 = vmatpush1.bf16.msra.mxu0 0
        %1714 = vmatprep.subr.bf16.mxu0 0
        %1715 = vmatpush1.bf16.msra.mxu0 0
        %1716 = vmatprep.subr.bf16.mxu0 0
        %1717 = vmatpush1.bf16.msra.mxu0 0
        %1718 = vmatprep.subr.bf16.mxu0 0
        %1719 = vmatpush1.bf16.msra.mxu0 0
        %1720 = vmatprep.subr.bf16.mxu0 0
        %1721 = vmatpush1.bf16.msra.mxu0 0
        %1722 = vmatprep.subr.bf16.mxu0 0
        %1723 = vmatpush1.bf16.msra.mxu0 0
        %1724 = vmatprep.mubr.bf16.mxu0 0
        %1725 = vmatmul.mubr.bf16.gmra.mrb[0].mxu0 %v1690
        %v1726 = vpop.f32.mrb[0].mxu0
        %v1727 = vadd.f32 0.0, %v1726
        %v1728 = vpop.f32.mrb[0].mxu0
        %v1729 = vpop.f32.mrb[0].mxu0
        %v1730 = vpop.f32.mrb[0].mxu0
        %1731 = vdwg.mxu0
        %v1732 = vrot.slane %v1267, 2
        %v1733 = vrot.slane %v1268, 1
        %v1734 = vsel %vm1276, %v1733, %v1732
        %v1735 = vsel %vm1279, %v1269, %v1734
        %v1736 = vrot.slane %v1270, 7
        %v1737 = vsel %vm1282, %v1736, %v1735
        %v1738 = vrot.slane %v1271, 6
        %v1739 = vsel %vm1285, %v1738, %v1737
        %v1740 = vrot.slane %v1272, 5
        %v1741 = vsel %vm1288, %v1740, %v1739
        %v1742 = vrot.slane %v1273, 4
        %v1743 = vsel %vm1291, %v1742, %v1741
        %v1744 = vrot.slane %v1274, 3
        %v1745 = vsel %vm1294, %v1744, %v1743
        %v1746 = vpack.c.b16 %v1745, %v1745
        %1748 = vmatprep.subr.bf16.mxu0 0
        %1749 = vmatpush1.bf16.msra.mxu0 %v1434
        %1750 = vmatprep.subr.bf16.mxu0 0
        %1751 = vmatpush1.bf16.msra.mxu0 %v1435
        %1752 = vmatprep.subr.bf16.mxu0 0
        %1753 = vmatpush1.bf16.msra.mxu0 %v1436
        %1754 = vmatprep.subr.bf16.mxu0 0
        %1755 = vmatpush1.bf16.msra.mxu0 %v1437
        %1756 = vmatprep.subr.bf16.mxu0 0
        %1757 = vmatpush1.bf16.msra.mxu0 %v1438
        %1758 = vmatprep.subr.bf16.mxu0 0
        %1759 = vmatpush1.bf16.msra.mxu0 %v1439
        %1760 = vmatprep.subr.bf16.mxu0 0
        %1761 = vmatpush1.bf16.msra.mxu0 %v1440
        %1762 = vmatprep.subr.bf16.mxu0 0
        %1763 = vmatpush1.bf16.msra.mxu0 %v1441
        %1764 = vmatprep.subr.bf16.mxu0 0
        %1765 = vmatpush1.bf16.msra.mxu0 0
        %1766 = vmatprep.subr.bf16.mxu0 0
        %1767 = vmatpush1.bf16.msra.mxu0 0
        %1768 = vmatprep.subr.bf16.mxu0 0
        %1769 = vmatpush1.bf16.msra.mxu0 0
        %1770 = vmatprep.subr.bf16.mxu0 0
        %1771 = vmatpush1.bf16.msra.mxu0 0
        %1772 = vmatprep.subr.bf16.mxu0 0
        %1773 = vmatpush1.bf16.msra.mxu0 0
        %1774 = vmatprep.subr.bf16.mxu0 0
        %1775 = vmatpush1.bf16.msra.mxu0 0
        %1776 = vmatprep.subr.bf16.mxu0 0
        %1777 = vmatpush1.bf16.msra.mxu0 0
        %1778 = vmatprep.subr.bf16.mxu0 0
        %1779 = vmatpush1.bf16.msra.mxu0 0
        %1780 = vmatprep.mubr.bf16.mxu0 0
        %1781 = vmatmul.mubr.bf16.gmra.mrb[0].mxu0 %v1746
        %v1782 = vpop.f32.mrb[0].mxu0
        %v1783 = vadd.f32 %v1727, %v1782
        %v1784 = vpop.f32.mrb[0].mxu0
        %v1785 = vpop.f32.mrb[0].mxu0
        %v1786 = vpop.f32.mrb[0].mxu0
        %1787 = vdwg.mxu0
        %v1788 = vrot.slane %v1554, 2
        %v1789 = vrot.slane %v1555, 1
        %v1790 = vsel %vm1276, %v1789, %v1788
        %v1791 = vsel %vm1279, %v1556, %v1790
        %v1792 = vrot.slane %v1557, 7
        %v1793 = vsel %vm1282, %v1792, %v1791
        %v1794 = vrot.slane %v1558, 6
        %v1795 = vsel %vm1285, %v1794, %v1793
        %v1796 = vrot.slane %v1559, 5
        %v1797 = vsel %vm1288, %v1796, %v1795
        %v1798 = vrot.slane %v1560, 4
        %v1799 = vsel %vm1291, %v1798, %v1797
        %v1800 = vrot.slane %v1561, 3
        %v1801 = vsel %vm1294, %v1800, %v1799
        %v1802 = vpack.c.b16 %v1801, %v1801
        %1804 = vmatprep.subr.bf16.mxu0 0
        %1805 = vmatpush1.bf16.msra.mxu0 %v1610
        %1806 = vmatprep.subr.bf16.mxu0 0
        %1807 = vmatpush1.bf16.msra.mxu0 %v1611
        %1808 = vmatprep.subr.bf16.mxu0 0
        %1809 = vmatpush1.bf16.msra.mxu0 %v1612
        %1810 = vmatprep.subr.bf16.mxu0 0
        %1811 = vmatpush1.bf16.msra.mxu0 %v1613
        %1812 = vmatprep.subr.bf16.mxu0 0
        %1813 = vmatpush1.bf16.msra.mxu0 %v1614
        %1814 = vmatprep.subr.bf16.mxu0 0
        %1815 = vmatpush1.bf16.msra.mxu0 %v1615
        %1816 = vmatprep.subr.bf16.mxu0 0
        %1817 = vmatpush1.bf16.msra.mxu0 %v1616
        %1818 = vmatprep.subr.bf16.mxu0 0
        %1819 = vmatpush1.bf16.msra.mxu0 %v1617
        %1820 = vmatprep.subr.bf16.mxu0 0
        %1821 = vmatpush1.bf16.msra.mxu0 0
        %1822 = vmatprep.subr.bf16.mxu0 0
        %1823 = vmatpush1.bf16.msra.mxu0 0
        %1824 = vmatprep.subr.bf16.mxu0 0
        %1825 = vmatpush1.bf16.msra.mxu0 0
        %1826 = vmatprep.subr.bf16.mxu0 0
        %1827 = vmatpush1.bf16.msra.mxu0 0
        %1828 = vmatprep.subr.bf16.mxu0 0
        %1829 = vmatpush1.bf16.msra.mxu0 0
        %1830 = vmatprep.subr.bf16.mxu0 0
        %1831 = vmatpush1.bf16.msra.mxu0 0
        %1832 = vmatprep.subr.bf16.mxu0 0
        %1833 = vmatpush1.bf16.msra.mxu0 0
        %1834 = vmatprep.subr.bf16.mxu0 0
        %1835 = vmatpush1.bf16.msra.mxu0 0
        %1836 = vmatprep.mubr.bf16.mxu0 0
        %1837 = vmatmul.mubr.bf16.gmra.mrb[0].mxu0 %v1802
        %v1838 = vpop.f32.mrb[0].mxu0
        %v1839 = vadd.f32 0.0, %v1838
        %v1840 = vpop.f32.mrb[0].mxu0
        %v1841 = vpop.f32.mrb[0].mxu0
        %v1842 = vpop.f32.mrb[0].mxu0
        %1843 = vdwg.mxu0
        %v1844 = vadd.f32 %v1783, %v1839
        %v1845 = vadd.f32 %v1844, %v1672
        %v1846 = vtanh.pop %v1845
        %v1847 = vpack.c.bf16 %v1675, %v1675
        %v1848 = vld [vmem:[#allocation8] sm:$0xf]
        %v1849 = vld [vmem:[#allocation8 + $0x4] sm:$0xf]
        %v1850 = vld [vmem:[#allocation8 + $0x8] sm:$0xf]
        %v1851 = vld [vmem:[#allocation8 + $0xc] sm:$0xf]
        %v1852 = vld [vmem:[#allocation8 + $0x10] sm:$0xf]
        %v1853 = vld [vmem:[#allocation8 + $0x14] sm:$0xf]
        %v1854 = vld [vmem:[#allocation8 + $0x18] sm:$0xf]
        %v1855 = vld [vmem:[#allocation8 + $0x1c] sm:$0xf]
        %v1856 = vld [vmem:[#allocation8 + $0x20] sm:$0xf]
        %v1857 = vld [vmem:[#allocation8 + $0x24] sm:$0xf]
        %v1858 = vld [vmem:[#allocation8 + $0x28] sm:$0xf]
        %v1859 = vld [vmem:[#allocation8 + $0x2c] sm:$0xf]
        %v1860 = vld [vmem:[#allocation8 + $0x30] sm:$0xf]
        %v1861 = vld [vmem:[#allocation8 + $0x34] sm:$0xf]
        %v1862 = vld [vmem:[#allocation8 + $0x38] sm:$0xf]
        %v1863 = vld [vmem:[#allocation8 + $0x3c] sm:$0xf]
        %v1864 = vpack.c.bf16 %v1846, %v1846
        %v1865 = vld [vmem:[#allocation8 + $0x40] sm:$0xf]
        %v1866 = vld [vmem:[#allocation8 + $0x44] sm:$0xf]
        %v1867 = vld [vmem:[#allocation8 + $0x48] sm:$0xf]
        %v1868 = vld [vmem:[#allocation8 + $0x4c] sm:$0xf]
        %v1869 = vld [vmem:[#allocation8 + $0x50] sm:$0xf]
        %v1870 = vld [vmem:[#allocation8 + $0x54] sm:$0xf]
        %v1871 = vld [vmem:[#allocation8 + $0x58] sm:$0xf]
        %v1872 = vld [vmem:[#allocation8 + $0x5c] sm:$0xf]
        %v1873 = vld [vmem:[#allocation8 + $0x60] sm:$0xf]
        %v1874 = vld [vmem:[#allocation8 + $0x64] sm:$0xf]
        %v1875 = vld [vmem:[#allocation8 + $0x68] sm:$0xf]
        %v1876 = vld [vmem:[#allocation8 + $0x6c] sm:$0xf]
        %v1877 = vld [vmem:[#allocation8 + $0x70] sm:$0xf]
        %v1878 = vld [vmem:[#allocation8 + $0x74] sm:$0xf]
        %v1879 = vld [vmem:[#allocation8 + $0x78] sm:$0xf]
        %v1880 = vld [vmem:[#allocation8 + $0x7c] sm:$0xf]
        %v1897 = vunpack.c.l.b16 %v1865
        %v1898 = vunpack.c.l.b16 %v1866
        %v1899 = vunpack.c.l.b16 %v1867
        %v1900 = vunpack.c.l.b16 %v1868
        %v1901 = vunpack.c.l.b16 %v1869
        %v1902 = vunpack.c.l.b16 %v1870
        %v1903 = vunpack.c.l.b16 %v1871
        %v1904 = vunpack.c.l.b16 %v1872
        %v1905 = vunpack.c.l.b16 %v1873
        %v1906 = vunpack.c.l.b16 %v1874
        %v1907 = vunpack.c.l.b16 %v1875
        %v1908 = vunpack.c.l.b16 %v1876
        %v1909 = vunpack.c.l.b16 %v1877
        %v1910 = vunpack.c.l.b16 %v1878
        %v1911 = vunpack.c.l.b16 %v1879
        %v1912 = vunpack.c.l.b16 %v1880
        %v1913 = vpack.c.b16 %v1898, %v1897
        %v1914 = vpack.c.b16 %v1900, %v1899
        %v1915 = vpack.c.b16 %v1902, %v1901
        %v1916 = vpack.c.b16 %v1904, %v1903
        %v1917 = vpack.c.b16 %v1906, %v1905
        %v1918 = vpack.c.b16 %v1908, %v1907
        %v1919 = vpack.c.b16 %v1910, %v1909
        %v1920 = vpack.c.b16 %v1912, %v1911
        %1929 = vmatprep.subr.bf16.mxu0 0
        %1930 = vmatpush1.bf16.msra.mxu0 %v1913
        %1931 = vmatprep.subr.bf16.mxu0 0
        %1932 = vmatpush1.bf16.msra.mxu0 %v1914
        %1933 = vmatprep.subr.bf16.mxu0 0
        %1934 = vmatpush1.bf16.msra.mxu0 %v1915
        %1935 = vmatprep.subr.bf16.mxu0 0
        %1936 = vmatpush1.bf16.msra.mxu0 %v1916
        %1937 = vmatprep.subr.bf16.mxu0 0
        %1938 = vmatpush1.bf16.msra.mxu0 %v1917
        %1939 = vmatprep.subr.bf16.mxu0 0
        %1940 = vmatpush1.bf16.msra.mxu0 %v1918
        %1941 = vmatprep.subr.bf16.mxu0 0
        %1942 = vmatpush1.bf16.msra.mxu0 %v1919
        %1943 = vmatprep.subr.bf16.mxu0 0
        %1944 = vmatpush1.bf16.msra.mxu0 %v1920
        %1945 = vmatprep.subr.bf16.mxu0 0
        %1946 = vmatpush1.bf16.msra.mxu0 0
        %1947 = vmatprep.subr.bf16.mxu0 0
        %1948 = vmatpush1.bf16.msra.mxu0 0
        %1949 = vmatprep.subr.bf16.mxu0 0
        %1950 = vmatpush1.bf16.msra.mxu0 0
        %1951 = vmatprep.subr.bf16.mxu0 0
        %1952 = vmatpush1.bf16.msra.mxu0 0
        %1953 = vmatprep.subr.bf16.mxu0 0
        %1954 = vmatpush1.bf16.msra.mxu0 0
        %1955 = vmatprep.subr.bf16.mxu0 0
        %1956 = vmatpush1.bf16.msra.mxu0 0
        %1957 = vmatprep.subr.bf16.mxu0 0
        %1958 = vmatpush1.bf16.msra.mxu0 0
        %1959 = vmatprep.subr.bf16.mxu0 0
        %1960 = vmatpush1.bf16.msra.mxu0 0
        %1961 = vmatprep.mubr.bf16.mxu0 0
        %1962 = vmatmul.mubr.bf16.gmra.mrb[0].mxu0 %v1864
        %v1963 = vpop.f32.mrb[0].mxu0
        %v1964 = vadd.f32 0.0, %v1963
        %v1965 = vpop.f32.mrb[0].mxu0
        %v1966 = vpop.f32.mrb[0].mxu0
        %v1967 = vpop.f32.mrb[0].mxu0
        %1968 = vdwg.mxu0
        %v1985 = vunpack.c.l.b16 %v1848
        %v1986 = vunpack.c.l.b16 %v1849
        %v1987 = vunpack.c.l.b16 %v1850
        %v1988 = vunpack.c.l.b16 %v1851
        %v1989 = vunpack.c.l.b16 %v1852
        %v1990 = vunpack.c.l.b16 %v1853
        %v1991 = vunpack.c.l.b16 %v1854
        %v1992 = vunpack.c.l.b16 %v1855
        %v1993 = vunpack.c.l.b16 %v1856
        %v1994 = vunpack.c.l.b16 %v1857
        %v1995 = vunpack.c.l.b16 %v1858
        %v1996 = vunpack.c.l.b16 %v1859
        %v1997 = vunpack.c.l.b16 %v1860
        %v1998 = vunpack.c.l.b16 %v1861
        %v1999 = vunpack.c.l.b16 %v1862
        %v2000 = vunpack.c.l.b16 %v1863
        %v2001 = vpack.c.b16 %v1986, %v1985
        %v2002 = vpack.c.b16 %v1988, %v1987
        %v2003 = vpack.c.b16 %v1990, %v1989
        %v2004 = vpack.c.b16 %v1992, %v1991
        %v2005 = vpack.c.b16 %v1994, %v1993
        %v2006 = vpack.c.b16 %v1996, %v1995
        %v2007 = vpack.c.b16 %v1998, %v1997
        %v2008 = vpack.c.b16 %v2000, %v1999
        %2017 = vmatprep.subr.bf16.mxu0 0
        %2018 = vmatpush1.bf16.msra.mxu0 %v2001
        %2019 = vmatprep.subr.bf16.mxu0 0
        %2020 = vmatpush1.bf16.msra.mxu0 %v2002
        %2021 = vmatprep.subr.bf16.mxu0 0
        %2022 = vmatpush1.bf16.msra.mxu0 %v2003
        %2023 = vmatprep.subr.bf16.mxu0 0
        %2024 = vmatpush1.bf16.msra.mxu0 %v2004
        %2025 = vmatprep.subr.bf16.mxu0 0
        %2026 = vmatpush1.bf16.msra.mxu0 %v2005
        %2027 = vmatprep.subr.bf16.mxu0 0
        %2028 = vmatpush1.bf16.msra.mxu0 %v2006
        %2029 = vmatprep.subr.bf16.mxu0 0
        %2030 = vmatpush1.bf16.msra.mxu0 %v2007
        %2031 = vmatprep.subr.bf16.mxu0 0
        %2032 = vmatpush1.bf16.msra.mxu0 %v2008
        %2033 = vmatprep.subr.bf16.mxu0 0
        %2034 = vmatpush1.bf16.msra.mxu0 0
        %2035 = vmatprep.subr.bf16.mxu0 0
        %2036 = vmatpush1.bf16.msra.mxu0 0
        %2037 = vmatprep.subr.bf16.mxu0 0
        %2038 = vmatpush1.bf16.msra.mxu0 0
        %2039 = vmatprep.subr.bf16.mxu0 0
        %2040 = vmatpush1.bf16.msra.mxu0 0
        %2041 = vmatprep.subr.bf16.mxu0 0
        %2042 = vmatpush1.bf16.msra.mxu0 0
        %2043 = vmatprep.subr.bf16.mxu0 0
        %2044 = vmatpush1.bf16.msra.mxu0 0
        %2045 = vmatprep.subr.bf16.mxu0 0
        %2046 = vmatpush1.bf16.msra.mxu0 0
        %2047 = vmatprep.subr.bf16.mxu0 0
        %2048 = vmatpush1.bf16.msra.mxu0 0
        %2049 = vmatprep.mubr.bf16.mxu0 0
        %2050 = vmatmul.mubr.bf16.gmra.mrb[0].mxu0 %v1847
        %v2051 = vpop.f32.mrb[0].mxu0
        %v2052 = vadd.f32 %v1964, %v2051
        %v2053 = vpop.f32.mrb[0].mxu0
        %v2054 = vpop.f32.mrb[0].mxu0
        %v2055 = vpop.f32.mrb[0].mxu0
        %2056 = vdwg.mxu0
        %v2057 = vld [vmem:[%s5] sm:$0x1]
        %v2059 = vlaneseq
        %v2060 = vshrl.u32 %v2059, 7
        %v2061 = vsub.s32 0, %v2060
        %v2062 = vrot.slane %v2057, %v2061
        %v2064 = vadd.f32 %v2052, %v2062
        %v2065 = vtanh.pop %v2064
        %v2066 = vpack.c.bf16 %v2065, %v2065
        %v2067 = vld [vmem:[#allocation10] sm:$0xf]
        %v2068 = vld [vmem:[#allocation10 + $0x4] sm:$0xf]
        %v2069 = vld [vmem:[#allocation10 + $0x8] sm:$0xf]
        %v2070 = vld [vmem:[#allocation10 + $0xc] sm:$0xf]
        %v2071 = vld [vmem:[#allocation10 + $0x10] sm:$0xf]
        %v2072 = vld [vmem:[#allocation10 + $0x14] sm:$0xf]
        %v2073 = vld [vmem:[#allocation10 + $0x18] sm:$0xf]
        %v2074 = vld [vmem:[#allocation10 + $0x1c] sm:$0xf]
        %v2075 = vld [vmem:[#allocation10 + $0x20] sm:$0xf]
        %v2076 = vld [vmem:[#allocation10 + $0x24] sm:$0xf]
        %v2077 = vld [vmem:[#allocation10 + $0x28] sm:$0xf]
        %v2078 = vld [vmem:[#allocation10 + $0x2c] sm:$0xf]
        %v2079 = vld [vmem:[#allocation10 + $0x30] sm:$0xf]
        %v2080 = vld [vmem:[#allocation10 + $0x34] sm:$0xf]
        %v2081 = vld [vmem:[#allocation10 + $0x38] sm:$0xf]
        %v2082 = vld [vmem:[#allocation10 + $0x3c] sm:$0xf]
        %v2083 = vld [vmem:[%s7] sm:$0x1]
        %v2085 = vlaneseq
        %v2086 = vshrl.u32 %v2085, 7
        %v2087 = vsub.s32 0, %v2086
        %v2088 = vrot.slane %v2083, %v2087
        %v2106 = vunpack.c.l.b16 %v2067
        %v2107 = vunpack.c.l.b16 %v2068
        %v2108 = vunpack.c.l.b16 %v2069
        %v2109 = vunpack.c.l.b16 %v2070
        %v2110 = vunpack.c.l.b16 %v2071
        %v2111 = vunpack.c.l.b16 %v2072
        %v2112 = vunpack.c.l.b16 %v2073
        %v2113 = vunpack.c.l.b16 %v2074
        %v2114 = vunpack.c.l.b16 %v2075
        %v2115 = vunpack.c.l.b16 %v2076
        %v2116 = vunpack.c.l.b16 %v2077
        %v2117 = vunpack.c.l.b16 %v2078
        %v2118 = vunpack.c.l.b16 %v2079
        %v2119 = vunpack.c.l.b16 %v2080
        %v2120 = vunpack.c.l.b16 %v2081
        %v2121 = vunpack.c.l.b16 %v2082
        %v2122 = vpack.c.b16 %v2107, %v2106
        %v2123 = vpack.c.b16 %v2109, %v2108
        %v2124 = vpack.c.b16 %v2111, %v2110
        %v2125 = vpack.c.b16 %v2113, %v2112
        %v2126 = vpack.c.b16 %v2115, %v2114
        %v2127 = vpack.c.b16 %v2117, %v2116
        %v2128 = vpack.c.b16 %v2119, %v2118
        %v2129 = vpack.c.b16 %v2121, %v2120
        %2138 = vmatprep.subr.bf16.mxu0 0
        %2139 = vmatpush1.bf16.msra.mxu0 %v2122
        %2140 = vmatprep.subr.bf16.mxu0 0
        %2141 = vmatpush1.bf16.msra.mxu0 %v2123
        %2142 = vmatprep.subr.bf16.mxu0 0
        %2143 = vmatpush1.bf16.msra.mxu0 %v2124
        %2144 = vmatprep.subr.bf16.mxu0 0
        %2145 = vmatpush1.bf16.msra.mxu0 %v2125
        %2146 = vmatprep.subr.bf16.mxu0 0
        %2147 = vmatpush1.bf16.msra.mxu0 %v2126
        %2148 = vmatprep.subr.bf16.mxu0 0
        %2149 = vmatpush1.bf16.msra.mxu0 %v2127
        %2150 = vmatprep.subr.bf16.mxu0 0
        %2151 = vmatpush1.bf16.msra.mxu0 %v2128
        %2152 = vmatprep.subr.bf16.mxu0 0
        %2153 = vmatpush1.bf16.msra.mxu0 %v2129
        %2154 = vmatprep.subr.bf16.mxu0 0
        %2155 = vmatpush1.bf16.msra.mxu0 0
        %2156 = vmatprep.subr.bf16.mxu0 0
        %2157 = vmatpush1.bf16.msra.mxu0 0
        %2158 = vmatprep.subr.bf16.mxu0 0
        %2159 = vmatpush1.bf16.msra.mxu0 0
        %2160 = vmatprep.subr.bf16.mxu0 0
        %2161 = vmatpush1.bf16.msra.mxu0 0
        %2162 = vmatprep.subr.bf16.mxu0 0
        %2163 = vmatpush1.bf16.msra.mxu0 0
        %2164 = vmatprep.subr.bf16.mxu0 0
        %2165 = vmatpush1.bf16.msra.mxu0 0
        %2166 = vmatprep.subr.bf16.mxu0 0
        %2167 = vmatpush1.bf16.msra.mxu0 0
        %2168 = vmatprep.subr.bf16.mxu0 0
        %2169 = vmatpush1.bf16.msra.mxu0 0
        %2170 = vmatprep.mubr.bf16.mxu0 0
        %2171 = vmatmul.mubr.bf16.gmra.mrb[0].mxu0 %v2066
        %v2172 = vpop.f32.mrb[0].mxu0
        %v2173 = vadd.f32 %v2088, %v2172
        %v2174 = vpop.f32.mrb[0].mxu0
        %v2175 = vpop.f32.mrb[0].mxu0
        %v2176 = vpop.f32.mrb[0].mxu0
        %2177 = vdwg.mxu0
        %v2178 = vtanh.pop %v2173
        %v2179 = vpack.c.bf16 %v2178, %v2178
        %v2180 = vld [vmem:[#allocation11] sm:$0xf]
        %v2181 = vld [vmem:[#allocation11 + $0x4] sm:$0xf]
        %v2182 = vld [vmem:[#allocation11 + $0x8] sm:$0xf]
        %v2183 = vld [vmem:[#allocation11 + $0xc] sm:$0xf]
        %v2184 = vld [vmem:[#allocation11 + $0x10] sm:$0xf]
        %v2185 = vld [vmem:[#allocation11 + $0x14] sm:$0xf]
        %v2186 = vld [vmem:[#allocation11 + $0x18] sm:$0xf]
        %v2187 = vld [vmem:[#allocation11 + $0x1c] sm:$0xf]
        %v2188 = vld [vmem:[#allocation11 + $0x20] sm:$0xf]
        %v2189 = vld [vmem:[#allocation11 + $0x24] sm:$0xf]
        %v2190 = vld [vmem:[#allocation11 + $0x28] sm:$0xf]
        %v2191 = vld [vmem:[#allocation11 + $0x2c] sm:$0xf]
        %v2192 = vld [vmem:[#allocation11 + $0x30] sm:$0xf]
        %v2193 = vld [vmem:[#allocation11 + $0x34] sm:$0xf]
        %v2194 = vld [vmem:[#allocation11 + $0x38] sm:$0xf]
        %v2195 = vld [vmem:[#allocation11 + $0x3c] sm:$0xf]
        %v2196 = vld [vmem:[%s9] sm:$0x1]
        %v2198 = vlaneseq
        %v2199 = vshrl.u32 %v2198, 7
        %v2200 = vsub.s32 0, %v2199
        %v2201 = vrot.slane %v2196, %v2200
        %v2219 = vunpack.c.l.b16 %v2180
        %v2220 = vunpack.c.l.b16 %v2181
        %v2221 = vunpack.c.l.b16 %v2182
        %v2222 = vunpack.c.l.b16 %v2183
        %v2223 = vunpack.c.l.b16 %v2184
        %v2224 = vunpack.c.l.b16 %v2185
        %v2225 = vunpack.c.l.b16 %v2186
        %v2226 = vunpack.c.l.b16 %v2187
        %v2227 = vunpack.c.l.b16 %v2188
        %v2228 = vunpack.c.l.b16 %v2189
        %v2229 = vunpack.c.l.b16 %v2190
        %v2230 = vunpack.c.l.b16 %v2191
        %v2231 = vunpack.c.l.b16 %v2192
        %v2232 = vunpack.c.l.b16 %v2193
        %v2233 = vunpack.c.l.b16 %v2194
        %v2234 = vunpack.c.l.b16 %v2195
        %v2235 = vpack.c.b16 %v2220, %v2219
        %v2236 = vpack.c.b16 %v2222, %v2221
        %v2237 = vpack.c.b16 %v2224, %v2223
        %v2238 = vpack.c.b16 %v2226, %v2225
        %v2239 = vpack.c.b16 %v2228, %v2227
        %v2240 = vpack.c.b16 %v2230, %v2229
        %v2241 = vpack.c.b16 %v2232, %v2231
        %v2242 = vpack.c.b16 %v2234, %v2233
        %2251 = vmatprep.subr.bf16.mxu0 0
        %2252 = vmatpush1.bf16.msra.mxu0 %v2235
        %2253 = vmatprep.subr.bf16.mxu0 0
        %2254 = vmatpush1.bf16.msra.mxu0 %v2236
        %2255 = vmatprep.subr.bf16.mxu0 0
        %2256 = vmatpush1.bf16.msra.mxu0 %v2237
        %2257 = vmatprep.subr.bf16.mxu0 0
        %2258 = vmatpush1.bf16.msra.mxu0 %v2238
        %2259 = vmatprep.subr.bf16.mxu0 0
        %2260 = vmatpush1.bf16.msra.mxu0 %v2239
        %2261 = vmatprep.subr.bf16.mxu0 0
        %2262 = vmatpush1.bf16.msra.mxu0 %v2240
        %2263 = vmatprep.subr.bf16.mxu0 0
        %2264 = vmatpush1.bf16.msra.mxu0 %v2241
        %2265 = vmatprep.subr.bf16.mxu0 0
        %2266 = vmatpush1.bf16.msra.mxu0 %v2242
        %2267 = vmatprep.subr.bf16.mxu0 0
        %2268 = vmatpush1.bf16.msra.mxu0 0
        %2269 = vmatprep.subr.bf16.mxu0 0
        %2270 = vmatpush1.bf16.msra.mxu0 0
        %2271 = vmatprep.subr.bf16.mxu0 0
        %2272 = vmatpush1.bf16.msra.mxu0 0
        %2273 = vmatprep.subr.bf16.mxu0 0
        %2274 = vmatpush1.bf16.msra.mxu0 0
        %2275 = vmatprep.subr.bf16.mxu0 0
        %2276 = vmatpush1.bf16.msra.mxu0 0
        %2277 = vmatprep.subr.bf16.mxu0 0
        %2278 = vmatpush1.bf16.msra.mxu0 0
        %2279 = vmatprep.subr.bf16.mxu0 0
        %2280 = vmatpush1.bf16.msra.mxu0 0
        %2281 = vmatprep.subr.bf16.mxu0 0
        %2282 = vmatpush1.bf16.msra.mxu0 0
        %2283 = vmatprep.mubr.bf16.mxu0 0
        %2284 = vmatmul.mubr.bf16.gmra.mrb[0].mxu0 %v2179
        %v2285 = vpop.f32.mrb[0].mxu0
        %v2286 = vadd.f32 %v2201, %v2285
        %v2287 = vpop.f32.mrb[0].mxu0
        %v2288 = vpop.f32.mrb[0].mxu0
        %v2289 = vpop.f32.mrb[0].mxu0
        %2290 = vdwg.mxu0
        %v2291 = vtanh.pop %v2286
        %v2292 = vpack.c.bf16 %v2291, %v2291
        %v2293 = vld [vmem:[#allocation13] sm:$0xf]
        %v2294 = vld [vmem:[#allocation13 + $0x4] sm:$0xf]
        %v2295 = vld [vmem:[#allocation13 + $0x8] sm:$0xf]
        %v2296 = vld [vmem:[#allocation13 + $0xc] sm:$0xf]
        %v2297 = vld [vmem:[#allocation13 + $0x10] sm:$0xf]
        %v2298 = vld [vmem:[#allocation13 + $0x14] sm:$0xf]
        %v2299 = vld [vmem:[#allocation13 + $0x18] sm:$0xf]
        %v2300 = vld [vmem:[#allocation13 + $0x1c] sm:$0xf]
        %v2301 = vld [vmem:[#allocation13 + $0x20] sm:$0xf]
        %v2302 = vld [vmem:[#allocation13 + $0x24] sm:$0xf]
        %v2303 = vld [vmem:[#allocation13 + $0x28] sm:$0xf]
        %v2304 = vld [vmem:[#allocation13 + $0x2c] sm:$0xf]
        %v2305 = vld [vmem:[#allocation13 + $0x30] sm:$0xf]
        %v2306 = vld [vmem:[#allocation13 + $0x34] sm:$0xf]
        %v2307 = vld [vmem:[#allocation13 + $0x38] sm:$0xf]
        %v2308 = vld [vmem:[#allocation13 + $0x3c] sm:$0xf]
        %v2309 = vld [vmem:[%s11] sm:$0x1]
        %v2311 = vlaneseq
        %v2312 = vshrl.u32 %v2311, 7
        %v2313 = vsub.s32 0, %v2312
        %v2314 = vrot.slane %v2309, %v2313
        %v2332 = vunpack.c.l.b16 %v2293
        %v2333 = vunpack.c.l.b16 %v2294
        %v2334 = vunpack.c.l.b16 %v2295
        %v2335 = vunpack.c.l.b16 %v2296
        %v2336 = vunpack.c.l.b16 %v2297
        %v2337 = vunpack.c.l.b16 %v2298
        %v2338 = vunpack.c.l.b16 %v2299
        %v2339 = vunpack.c.l.b16 %v2300
        %v2340 = vunpack.c.l.b16 %v2301
        %v2341 = vunpack.c.l.b16 %v2302
        %v2342 = vunpack.c.l.b16 %v2303
        %v2343 = vunpack.c.l.b16 %v2304
        %v2344 = vunpack.c.l.b16 %v2305
        %v2345 = vunpack.c.l.b16 %v2306
        %v2346 = vunpack.c.l.b16 %v2307
        %v2347 = vunpack.c.l.b16 %v2308
        %v2348 = vpack.c.b16 %v2333, %v2332
        %v2349 = vpack.c.b16 %v2335, %v2334
        %v2350 = vpack.c.b16 %v2337, %v2336
        %v2351 = vpack.c.b16 %v2339, %v2338
        %v2352 = vpack.c.b16 %v2341, %v2340
        %v2353 = vpack.c.b16 %v2343, %v2342
        %v2354 = vpack.c.b16 %v2345, %v2344
        %v2355 = vpack.c.b16 %v2347, %v2346
        %2364 = vmatprep.subr.bf16.mxu0 0
        %2365 = vmatpush1.bf16.msra.mxu0 %v2348
        %2366 = vmatprep.subr.bf16.mxu0 0
        %2367 = vmatpush1.bf16.msra.mxu0 %v2349
        %2368 = vmatprep.subr.bf16.mxu0 0
        %2369 = vmatpush1.bf16.msra.mxu0 %v2350
        %2370 = vmatprep.subr.bf16.mxu0 0
        %2371 = vmatpush1.bf16.msra.mxu0 %v2351
        %2372 = vmatprep.subr.bf16.mxu0 0
        %2373 = vmatpush1.bf16.msra.mxu0 %v2352
        %2374 = vmatprep.subr.bf16.mxu0 0
        %2375 = vmatpush1.bf16.msra.mxu0 %v2353
        %2376 = vmatprep.subr.bf16.mxu0 0
        %2377 = vmatpush1.bf16.msra.mxu0 %v2354
        %2378 = vmatprep.subr.bf16.mxu0 0
        %2379 = vmatpush1.bf16.msra.mxu0 %v2355
        %2380 = vmatprep.subr.bf16.mxu0 0
        %2381 = vmatpush1.bf16.msra.mxu0 0
        %2382 = vmatprep.subr.bf16.mxu0 0
        %2383 = vmatpush1.bf16.msra.mxu0 0
        %2384 = vmatprep.subr.bf16.mxu0 0
        %2385 = vmatpush1.bf16.msra.mxu0 0
        %2386 = vmatprep.subr.bf16.mxu0 0
        %2387 = vmatpush1.bf16.msra.mxu0 0
        %2388 = vmatprep.subr.bf16.mxu0 0
        %2389 = vmatpush1.bf16.msra.mxu0 0
        %2390 = vmatprep.subr.bf16.mxu0 0
        %2391 = vmatpush1.bf16.msra.mxu0 0
        %2392 = vmatprep.subr.bf16.mxu0 0
        %2393 = vmatpush1.bf16.msra.mxu0 0
        %2394 = vmatprep.subr.bf16.mxu0 0
        %2395 = vmatpush1.bf16.msra.mxu0 0
        %2396 = vmatprep.mubr.bf16.mxu0 0
        %2397 = vmatmul.mubr.bf16.gmra.mrb[0].mxu0 %v2292
        %v2398 = vpop.f32.mrb[0].mxu0
        %v2399 = vadd.f32 %v2314, %v2398
        %v2400 = vpop.f32.mrb[0].mxu0
        %v2401 = vpop.f32.mrb[0].mxu0
        %v2402 = vpop.f32.mrb[0].mxu0
        %2403 = vdwg.mxu0
        %2404 = vst [vmem:[%s543] sm:$0xff] %v2399
        %s2405 = sand.u32 %s304, 1
        %s2406 = scalar_lea.sflag [#allocation4], %s2405
        %s2407 = sand.u32 %s304, 1
        %s2408 = smul.addr %s2407, 8
        %s2409 = scalar_lea.vmem [#allocation14], %s2408
        // Predicated region
        $region97: #{tpu_custom_call.1} parent=67 // pred_check
          %p2410 = pneg %p314
        $region98: #{tpu_custom_call.1} parent=67 // pred_check_branch
          %2412 = sbr.rel (%p2410) target = $region100
        $region99: #{tpu_custom_call.1} parent=67 // pred_region
          %s2414 = ssub.s32 128, 128
          %2415 = vsyncadd %s2406, %s2414
          %s2416 = smul.addr %s34, 128
          %s2417 = scalar_lea.hbm %s12, %s2416
          %s2419 = sshll.u32 %s2409, 4
          %s2420 = int_to_ptr.vmem [resolvable:$true] %s2419
          %2422 = dma.vmem_to_hbm [thread:$0]  %s2420, 128, %s2417, %s2406
        $region100: #{tpu_custom_call.1} parent=67 // pred_fallthru
          _
      $region68: #{tpu_custom_call.1} parent=5 // pred_fallthru
        _
      %p2423 = scmp.le.s32.totalorder 2, %s29
      // Predicated region
      $region101: #{tpu_custom_call.1} parent=5 // pred_check
        %p2424 = pneg %p2423
      $region102: #{tpu_custom_call.1} parent=5 // pred_check_branch
        %2426 = sbr.rel (%p2424) target = $region104
      $region103: #{tpu_custom_call.1} parent=5 // pred_region
        %s2427 = ssub.s32 %s29, 2
        // Predicated region
        $region105: #{tpu_custom_call.1} parent=103 // pred_check
          %p2428 = pneg %p320
        $region106: #{tpu_custom_call.1} parent=103 // pred_check_branch
          %2430 = sbr.rel (%p2428) target = $region108
        $region107: #{tpu_custom_call.1} parent=103 // pred_region
          %s2431 = sand.u32 %s305, 1
          %s2432 = scalar_lea.sflag [#allocation4], %s2431
          %s2433 = sand.u32 %s305, 1
          %s2434 = smul.addr %s2433, 8
          %s2435 = scalar_lea.vmem [#allocation14], %s2434
          %2436 = dma.done %s2432, 128
        $region108: #{tpu_custom_call.1} parent=103 // pred_fallthru
          _
      $region104: #{tpu_custom_call.1} parent=5 // pred_fallthru
        _
    $region6: #{tpu_custom_call.1} parent=1 // loop_footer
      %s33 = sadd.s32 1, %s29
    $region7: #{tpu_custom_call.1} parent=1 // loop_footer_branch
      %28 = sbr.rel target = $region3
    $region8: #{tpu_custom_call.1} parent=1 // loop_exit
      _
    %2437 = vsyncpa [#allocation3], 1
    %s2438 = scalar_lea.sflag [#allocation3], 1
    %2439 = vsyncpa %s2438, 1
    %2440 = vsyncpa [#allocation6], 1
    %s2441 = scalar_lea.sflag [#allocation6], 1
    %2442 = vsyncpa %s2441, 1
    %2443 = vsyncpa [#allocation9], 1
    %2444 = vsyncpa [#allocation12], 1
    %2445 = vsyncpa [#allocation4], 1
    %s2446 = scalar_lea.sflag [#allocation4], 1
    %2447 = vsyncpa %s2446, 1

// kernel: tpu_custom_call.1
$region0: #{tpu_custom_call.1}
  #allocation0 [shape = 'u32[]', space=smem, size = 0x4, offset = 0x4, fixed_abs, tag = 'smem constant byte address 0x4 - core index']
  #allocation1 [shape = 'u32[144,128]{1,0:T(1,128)}', space=vmem, size = 0x12000, scoped, tag = 'internal scratch']
  %s0 = inlined_call_operand.hbm [shape: f32[16,16,128], index: 0, kind: input, shape index: {}]
  %s1 = inlined_call_operand.hbm [shape: f32[4,16,16], index: 1, kind: input, shape index: {}]
  %s2 = inlined_call_operand.hbm [shape: bf16[384,128], index: 2, kind: input, shape index: {}]
  %s3 = inlined_call_operand.vmem [shape: f32[1,128], index: 3, kind: input, shape index: {}]
  %s4 = inlined_call_operand.hbm [shape: bf16[256,128], index: 4, kind: input, shape index: {}]
  %s5 = inlined_call_operand.vmem [shape: f32[1,128], index: 5, kind: input, shape index: {}]
  %s6 = inlined_call_operand.hbm [shape: bf16[128,128], index: 6, kind: input, shape index: {}]
  %s7 = inlined_call_operand.vmem [shape: f32[1,128], index: 7, kind: input, shape index: {}]
  %s8 = inlined_call_operand.hbm [shape: bf16[128,128], index: 8, kind: input, shape index: {}]
  %s9 = inlined_call_operand.vmem [shape: f32[1,128], index: 9, kind: input, shape index: {}]
  %s10 = inlined_call_operand.hbm [shape: bf16[128,128], index: 10, kind: input, shape index: {}]
  %s11 = inlined_call_operand.vmem [shape: f32[1,128], index: 11, kind: input, shape index: {}]
  %s12 = inlined_call_operand.hbm [shape: f32[16,128], index: 12, kind: output, shape index: {}]
  %s13 = sld [smem:[#allocation0]]
  $region109: #{tpu_custom_call.1} parent=0
    _
  %s15 = ssub.s32 1, %s13
  %s16 = scalar_select 0, %s15, %s13
  $region1: #{tpu_custom_call.1} parent=0
    #allocation2 [shape = 'u8[131072]{0}', space=vmem, size = 0x20000, scoped, tag = 'input window, operand 0']
    #allocation3 [shape = 's32[2]{0}', space=sflag, size = 0x8, scoped, tag = 'scoped memory for tpu_custom_call.1']
    #allocation4 [shape = 's32[2]{0}', space=sflag, size = 0x8, scoped, tag = 'scoped memory for tpu_custom_call.1']
    #allocation5 [shape = 'u8[32768]{0}', space=vmem, size = 0x8000, scoped, tag = 'input window, operand 1']
    #allocation6 [shape = 's32[2]{0}', space=sflag, size = 0x8, scoped, tag = 'scoped memory for tpu_custom_call.1']
    #allocation7 [shape = 'u8[98304]{0}', space=vmem, size = 0x18000, scoped, tag = 'input window, operand 2, single buffered']
    #allocation8 [shape = 'u8[65536]{0}', space=vmem, size = 0x10000, scoped, tag = 'input window, operand 4, single buffered']
    #allocation9 [shape = 's32[1]{0}', space=sflag, size = 0x4, scoped, tag = 'scoped memory for tpu_custom_call.1']
    #allocation10 [shape = 'u8[32768]{0}', space=vmem, size = 0x8000, scoped, tag = 'input window, operand 6, single buffered']
    #allocation11 [shape = 'u8[32768]{0}', space=vmem, size = 0x8000, scoped, tag = 'input window, operand 8, single buffered']
    #allocation12 [shape = 's32[1]{0}', space=sflag, size = 0x4, scoped, tag = 'scoped memory for tpu_custom_call.1']
    #allocation13 [shape = 'u8[32768]{0}', space=vmem, size = 0x8000, scoped, tag = 'input window, operand 10, single buffered']
    #allocation14 [shape = 'u8[8192]{0}', space=vmem, size = 0x2000, scoped, tag = 'output window, operand 0']
    %17 = vsyncpa [#allocation3], 0
    %s18 = scalar_lea.sflag [#allocation3], 1
    %19 = vsyncpa %s18, 0
    %20 = vsyncpa [#allocation6], 0
    %s21 = scalar_lea.sflag [#allocation6], 1
    %22 = vsyncpa %s21, 0
    %23 = vsyncpa [#allocation9], 0
    %24 = vsyncpa [#allocation12], 0
    %25 = vsyncpa [#allocation4], 0
    %s26 = scalar_lea.sflag [#allocation4], 1
    %27 = vsyncpa %s26, 0
    loop: start=0, step=1, limit=4
    $region2: #{tpu_custom_call.1} parent=1 // loop_pre_header
      _
    $region3: #{tpu_custom_call.1} parent=1 // loop_header
      %s29 = sphi 0, %s33
      %p30 = scmp.ge.s32.totalorder %s29, 4
      %s39 = sphi 0, %s41
      %s42 = sphi 0, %s39
      %s43 = sphi 0, %s42
      %s59 = sphi 0, %s43
      %s65 = sphi 0, %s67
      %s68 = sphi 0, %s65
      %s69 = sphi 0, %s68
      %s85 = sphi 0, %s69
      %s89 = sphi 0, %s89
      %s91 = sphi 0, %s89
      %s92 = sphi 0, %s91
      %s106 = sphi 0, %s92
      %s110 = sphi 0, %s110
      %s112 = sphi 0, %s110
      %s113 = sphi 0, %s112
      %s127 = sphi 0, %s113
      %s131 = sphi 0, %s131
      %s133 = sphi 0, %s131
      %s134 = sphi 0, %s133
      %s148 = sphi 0, %s134
      %s152 = sphi 0, %s152
      %s154 = sphi 0, %s152
      %s155 = sphi 0, %s154
      %s169 = sphi 0, %s155
      %s173 = sphi 0, %s173
      %s175 = sphi 0, %s173
      %s176 = sphi 0, %s175
      %s190 = sphi 0, %s176
      %s194 = sphi 0, %s194
      %s196 = sphi 0, %s194
      %s197 = sphi 0, %s196
      %s211 = sphi 0, %s197
      %s215 = sphi 0, %s215
      %s217 = sphi 0, %s215
      %s218 = sphi 0, %s217
      %s232 = sphi 0, %s218
      %s236 = sphi 0, %s236
      %s238 = sphi 0, %s236
      %s239 = sphi 0, %s238
      %s253 = sphi 0, %s239
      %s257 = sphi 0, %s257
      %s259 = sphi 0, %s257
      %s260 = sphi 0, %s259
      %s274 = sphi 0, %s260
      %s278 = sphi 0, %s278
      %s280 = sphi 0, %s278
      %s281 = sphi 0, %s280
      %s295 = sphi 0, %s281
      %s301 = sphi 0, %s303
      %s304 = sphi 0, %s301
      %s305 = sphi 0, %s304
      %s321 = sphi 0, %s305
    $region4: #{tpu_custom_call.1} parent=1 // loop_header_branch
      %32 = sbr.rel (%p30) target = $region8
    $region5: #{tpu_custom_call.1} parent=1 // loop_body
      %s34 = ssub.s32 %s29, 1
      %s35 = ssub.s32 %s29, 2
      %s36 = sadd.s32 %s29, 1
      %s37 = ssub.s32 %s29, %s36
      %p38 = scmp.eq.s32.totalorder %s37, 0
      %s40 = sadd.s32 %s39, 1
      %s41 = scalar_select %p38, %s39, %s40
      %p44 = pneg %p38
      %p45 = scmp.eq.s32.totalorder %s29, 1
      %p46 = por %p44, %p45
      %p47 = scmp.ne.s32.totalorder %s39, %s42
      %p48 = scmp.eq.s32.totalorder %s29, 0
      %p49 = por %p47, %p48
      %p50 = scmp.ne.s32.totalorder %s39, %s42
      %p51 = scmp.eq.s32.totalorder %s34, 1
      %p52 = por %p50, %p51
      %p53 = scmp.ne.s32.totalorder %s42, %s43
      %p54 = scmp.eq.s32.totalorder %s34, 0
      %p55 = por %p53, %p54
      %p56 = scmp.ne.s32.totalorder %s42, %s43
      %p57 = scmp.eq.s32.totalorder %s35, 1
      %p58 = por %p56, %p57
      %p60 = scmp.ne.s32.totalorder %s43, %s59
      %p61 = scmp.eq.s32.totalorder %s35, 0
      %p62 = por %p60, %p61
      %s63 = ssub.s32 %s29, %s36
      %p64 = scmp.eq.s32.totalorder %s63, 0
      %s66 = sadd.s32 %s65, 1
      %s67 = scalar_select %p64, %s65, %s66
      %p70 = pneg %p64
      %p71 = scmp.eq.s32.totalorder %s29, 1
      %p72 = por %p70, %p71
      %p73 = scmp.ne.s32.totalorder %s65, %s68
      %p74 = scmp.eq.s32.totalorder %s29, 0
      %p75 = por %p73, %p74
      %p76 = scmp.ne.s32.totalorder %s65, %s68
      %p77 = scmp.eq.s32.totalorder %s34, 1
      %p78 = por %p76, %p77
      %p79 = scmp.ne.s32.totalorder %s68, %s69
      %p80 = scmp.eq.s32.totalorder %s34, 0
      %p81 = por %p79, %p80
      %p82 = scmp.ne.s32.totalorder %s68, %s69
      %p83 = scmp.eq.s32.totalorder %s35, 1
      %p84 = por %p82, %p83
      %p86 = scmp.ne.s32.totalorder %s69, %s85
      %p87 = scmp.eq.s32.totalorder %s35, 0
      %p88 = por %p86, %p87
      %s90 = sadd.s32 %s89, 1
      %p93 = scmp.eq.s32.totalorder %s29, 1
      %p94 = scmp.ne.s32.totalorder %s89, %s91
      %p95 = scmp.eq.s32.totalorder %s29, 0
      %p96 = por %p94, %p95
      %p97 = scmp.ne.s32.totalorder %s89, %s91
      %p98 = scmp.eq.s32.totalorder %s34, 1
      %p99 = por %p97, %p98
      %p100 = scmp.ne.s32.totalorder %s91, %s92
      %p101 = scmp.eq.s32.totalorder %s34, 0
      %p102 = por %p100, %p101
      %p103 = scmp.ne.s32.totalorder %s91, %s92
      %p104 = scmp.eq.s32.totalorder %s35, 1
      %p105 = por %p103, %p104
      %p107 = scmp.ne.s32.totalorder %s92, %s106
      %p108 = scmp.eq.s32.totalorder %s35, 0
      %p109 = por %p107, %p108
      %s111 = sadd.s32 %s110, 1
      %p114 = scmp.eq.s32.totalorder %s29, 1
      %p115 = scmp.ne.s32.totalorder %s110, %s112
      %p116 = scmp.eq.s32.totalorder %s29, 0
      %p117 = por %p115, %p116
      %p118 = scmp.ne.s32.totalorder %s110, %s112
      %p119 = scmp.eq.s32.totalorder %s34, 1
      %p120 = por %p118, %p119
      %p121 = scmp.ne.s32.totalorder %s112, %s113
      %p122 = scmp.eq.s32.totalorder %s34, 0
      %p123 = por %p121, %p122
      %p124 = scmp.ne.s32.totalorder %s112, %s113
      %p125 = scmp.eq.s32.totalorder %s35, 1
      %p126 = por %p124, %p125
      %p128 = scmp.ne.s32.totalorder %s113, %s127
      %p129 = scmp.eq.s32.totalorder %s35, 0
      %p130 = por %p128, %p129
      %s132 = sadd.s32 %s131, 1
      %p135 = scmp.eq.s32.totalorder %s29, 1
      %p136 = scmp.ne.s32.totalorder %s131, %s133
      %p137 = scmp.eq.s32.totalorder %s29, 0
      %p138 = por %p136, %p137
      %p139 = scmp.ne.s32.totalorder %s131, %s133
      %p140 = scmp.eq.s32.totalorder %s34, 1
      %p141 = por %p139, %p140
      %p142 = scmp.ne.s32.totalorder %s133, %s134
      %p143 = scmp.eq.s32.totalorder %s34, 0
      %p144 = por %p142, %p143
      %p145 = scmp.ne.s32.totalorder %s133, %s134
      %p146 = scmp.eq.s32.totalorder %s35, 1
      %p147 = por %p145, %p146
      %p149 = scmp.ne.s32.totalorder %s134, %s148
      %p150 = scmp.eq.s32.totalorder %s35, 0
      %p151 = por %p149, %p150
      %s153 = sadd.s32 %s152, 1
      %p156 = scmp.eq.s32.totalorder %s29, 1
      %p157 = scmp.ne.s32.totalorder %s152, %s154
      %p158 = scmp.eq.s32.totalorder %s29, 0
      %p159 = por %p157, %p158
      %p160 = scmp.ne.s32.totalorder %s152, %s154
      %p161 = scmp.eq.s32.totalorder %s34, 1
      %p162 = por %p160, %p161
      %p163 = scmp.ne.s32.totalorder %s154, %s155
      %p164 = scmp.eq.s32.totalorder %s34, 0
      %p165 = por %p163, %p164
      %p166 = scmp.ne.s32.totalorder %s154, %s155
      %p167 = scmp.eq.s32.totalorder %s35, 1
      %p168 = por %p166, %p167
      %p170 = scmp.ne.s32.totalorder %s155, %s169
      %p171 = scmp.eq.s32.totalorder %s35, 0
      %p172 = por %p170, %p171
      %s174 = sadd.s32 %s173, 1
      %p177 = scmp.eq.s32.totalorder %s29, 1
      %p178 = scmp.ne.s32.totalorder %s173, %s175
      %p179 = scmp.eq.s32.totalorder %s29, 0
      %p180 = por %p178, %p179
      %p181 = scmp.ne.s32.totalorder %s173, %s175
      %p182 = scmp.eq.s32.totalorder %s34, 1
      %p183 = por %p181, %p182
      %p184 = scmp.ne.s32.totalorder %s175, %s176
      %p185 = scmp.eq.s32.totalorder %s34, 0
      %p186 = por %p184, %p185
      %p187 = scmp.ne.s32.totalorder %s175, %s176
      %p188 = scmp.eq.s32.totalorder %s35, 1
      %p189 = por %p187, %p188
      %p191 = scmp.ne.s32.totalorder %s176, %s190
      %p192 = scmp.eq.s32.totalorder %s35, 0
      %p193 = por %p191, %p192
      %s195 = sadd.s32 %s194, 1
      %p198 = scmp.eq.s32.totalorder %s29, 1
      %p199 = scmp.ne.s32.totalorder %s194, %s196
      %p200 = scmp.eq.s32.totalorder %s29, 0
      %p201 = por %p199, %p200
      %p202 = scmp.ne.s32.totalorder %s194, %s196
      %p203 = scmp.eq.s32.totalorder %s34, 1
      %p204 = por %p202, %p203
      %p205 = scmp.ne.s32.totalorder %s196, %s197
      %p206 = scmp.eq.s32.totalorder %s34, 0
      %p207 = por %p205, %p206
      %p208 = scmp.ne.s32.totalorder %s196, %s197
      %p209 = scmp.eq.s32.totalorder %s35, 1
      %p210 = por %p208, %p209
      %p212 = scmp.ne.s32.totalorder %s197, %s211
      %p213 = scmp.eq.s32.totalorder %s35, 0
      %p214 = por %p212, %p213
      %s216 = sadd.s32 %s215, 1
      %p219 = scmp.eq.s32.totalorder %s29, 1
      %p220 = scmp.ne.s32.totalorder %s215, %s217
      %p221 = scmp.eq.s32.totalorder %s29, 0
      %p222 = por %p220, %p221
      %p223 = scmp.ne.s32.totalorder %s215, %s217
      %p224 = scmp.eq.s32.totalorder %s34, 1
      %p225 = por %p223, %p224
      %p226 = scmp.ne.s32.totalorder %s217, %s218
      %p227 = scmp.eq.s32.totalorder %s34, 0
      %p228 = por %p226, %p227
      %p229 = scmp.ne.s32.totalorder %s217, %s218
      %p230 = scmp.eq.s32.totalorder %s35, 1
      %p231 = por %p229, %p230
      %p233 = scmp.ne.s32.totalorder %s218, %s232
      %p234 = scmp.eq.s32.totalorder %s35, 0
      %p235 = por %p233, %p234
      %s237 = sadd.s32 %s236, 1
      %p240 = scmp.eq.s32.totalorder %s29, 1
      %p241 = scmp.ne.s32.totalorder %s236, %s238
      %p242 = scmp.eq.s32.totalorder %s29, 0
      %p243 = por %p241, %p242
      %p244 = scmp.ne.s32.totalorder %s236, %s238
      %p245 = scmp.eq.s32.totalorder %s34, 1
      %p246 = por %p244, %p245
      %p247 = scmp.ne.s32.totalorder %s238, %s239
      %p248 = scmp.eq.s32.totalorder %s34, 0
      %p249 = por %p247, %p248
      %p250 = scmp.ne.s32.totalorder %s238, %s239
      %p251 = scmp.eq.s32.totalorder %s35, 1
      %p252 = por %p250, %p251
      %p254 = scmp.ne.s32.totalorder %s239, %s253
      %p255 = scmp.eq.s32.totalorder %s35, 0
      %p256 = por %p254, %p255
      %s258 = sadd.s32 %s257, 1
      %p261 = scmp.eq.s32.totalorder %s29, 1
      %p262 = scmp.ne.s32.totalorder %s257, %s259
      %p263 = scmp.eq.s32.totalorder %s29, 0
      %p264 = por %p262, %p263
      %p265 = scmp.ne.s32.totalorder %s257, %s259
      %p266 = scmp.eq.s32.totalorder %s34, 1
      %p267 = por %p265, %p266
      %p268 = scmp.ne.s32.totalorder %s259, %s260
      %p269 = scmp.eq.s32.totalorder %s34, 0
      %p270 = por %p268, %p269
      %p271 = scmp.ne.s32.totalorder %s259, %s260
      %p272 = scmp.eq.s32.totalorder %s35, 1
      %p273 = por %p271, %p272
      %p275 = scmp.ne.s32.totalorder %s260, %s274
      %p276 = scmp.eq.s32.totalorder %s35, 0
      %p277 = por %p275, %p276
      %s279 = sadd.s32 %s278, 1
      %p282 = scmp.eq.s32.totalorder %s29, 1
      %p283 = scmp.ne.s32.totalorder %s278, %s280
      %p284 = scmp.eq.s32.totalorder %s29, 0
      %p285 = por %p283, %p284
      %p286 = scmp.ne.s32.totalorder %s278, %s280
      %p287 = scmp.eq.s32.totalorder %s34, 1
      %p288 = por %p286, %p287
      %p289 = scmp.ne.s32.totalorder %s280, %s281
      %p290 = scmp.eq.s32.totalorder %s34, 0
      %p291 = por %p289, %p290
      %p292 = scmp.ne.s32.totalorder %s280, %s281
      %p293 = scmp.eq.s32.totalorder %s35, 1
      %p294 = por %p292, %p293
      %p296 = scmp.ne.s32.totalorder %s281, %s295
      %p297 = scmp.eq.s32.totalorder %s35, 0
      %p298 = por %p296, %p297
      %s299 = ssub.s32 %s29, %s36
      %p300 = scmp.eq.s32.totalorder %s299, 0
      %s302 = sadd.s32 %s301, 1
      %s303 = scalar_select %p300, %s301, %s302
      %p306 = pneg %p300
      %p307 = scmp.eq.s32.totalorder %s29, 1
      %p308 = por %p306, %p307
      %p309 = scmp.ne.s32.totalorder %s301, %s304
      %p310 = scmp.eq.s32.totalorder %s29, 0
      %p311 = por %p309, %p310
      %p312 = scmp.ne.s32.totalorder %s301, %s304
      %p313 = scmp.eq.s32.totalorder %s34, 1
      %p314 = por %p312, %p313
      %p315 = scmp.ne.s32.totalorder %s304, %s305
      %p316 = scmp.eq.s32.totalorder %s34, 0
      %p317 = por %p315, %p316
      %p318 = scmp.ne.s32.totalorder %s304, %s305
      %p319 = scmp.eq.s32.totalorder %s35, 1
      %p320 = por %p318, %p319
      %p322 = scmp.ne.s32.totalorder %s305, %s321
      %p323 = scmp.eq.s32.totalorder %s35, 0
      %p324 = por %p322, %p323
      %p325 = scmp.le.s32.totalorder 1, %s29
      %p326 = scmp.lt.s32.totalorder %s29, 3
      %p327 = pnand %p325, %p326
      %p328 = pneg %p327
      // Predicated region
      $region9: #{tpu_custom_call.1} parent=5 // pred_check
        _
      $region10: #{tpu_custom_call.1} parent=5 // pred_check_branch
        %330 = sbr.rel (%p327) target = $region12
      $region11: #{tpu_custom_call.1} parent=5 // pred_region
        %s331 = ssub.s32 %s29, 1
        // Predicated region
        $region13: #{tpu_custom_call.1} parent=11 // pred_check
          %p332 = pneg %p102
        $region14: #{tpu_custom_call.1} parent=11 // pred_check_branch
          %334 = sbr.rel (%p332) target = $region16
        $region15: #{tpu_custom_call.1} parent=11 // pred_region
          %s336 = ssub.s32 3072, 3072
          %337 = vsyncadd [#allocation6], %s336
          %s338 = sshll.u32 [#allocation7], 4
          %s339 = int_to_ptr.vmem [resolvable:$true] %s338
          %344 = dma.hbm_to_vmem [thread:$0]  %s2, 3072, %s339, [#allocation6], 64, 64, 4
        $region16: #{tpu_custom_call.1} parent=11 // pred_fallthru
          _
        // Predicated region
        $region17: #{tpu_custom_call.1} parent=11 // pred_check
          %p345 = pneg %p123
        $region18: #{tpu_custom_call.1} parent=11 // pred_check_branch
          %347 = sbr.rel (%p345) target = $region20
        $region19: #{tpu_custom_call.1} parent=11 // pred_region
          _
        $region20: #{tpu_custom_call.1} parent=11 // pred_fallthru
          _
        // Predicated region
        $region21: #{tpu_custom_call.1} parent=11 // pred_check
          %p348 = pneg %p144
        $region22: #{tpu_custom_call.1} parent=11 // pred_check_branch
          %350 = sbr.rel (%p348) target = $region24
        $region23: #{tpu_custom_call.1} parent=11 // pred_region
          %s352 = ssub.s32 2048, 2048
          %353 = vsyncadd [#allocation9], %s352
          %s354 = sshll.u32 [#allocation8], 4
          %s355 = int_to_ptr.vmem [resolvable:$true] %s354
          %360 = dma.hbm_to_vmem [thread:$0]  %s4, 2048, %s355, [#allocation9], 64, 64, 4
        $region24: #{tpu_custom_call.1} parent=11 // pred_fallthru
          _
        // Predicated region
        $region25: #{tpu_custom_call.1} parent=11 // pred_check
          %p361 = pneg %p165
        $region26: #{tpu_custom_call.1} parent=11 // pred_check_branch
          %363 = sbr.rel (%p361) target = $region28
        $region27: #{tpu_custom_call.1} parent=11 // pred_region
          _
        $region28: #{tpu_custom_call.1} parent=11 // pred_fallthru
          _
        // Predicated region
        $region29: #{tpu_custom_call.1} parent=11 // pred_check
          %p364 = pneg %p186
        $region30: #{tpu_custom_call.1} parent=11 // pred_check_branch
          %366 = sbr.rel (%p364) target = $region32
        $region31: #{tpu_custom_call.1} parent=11 // pred_region
          %s368 = ssub.s32 1024, 1024
          %369 = vsyncadd [#allocation9], %s368
          %s370 = sshll.u32 [#allocation10], 4
          %s371 = int_to_ptr.vmem [resolvable:$true] %s370
          %376 = dma.hbm_to_vmem [thread:$0]  %s6, 1024, %s371, [#allocation9], 64, 64, 4
        $region32: #{tpu_custom_call.1} parent=11 // pred_fallthru
          _
        // Predicated region
        $region33: #{tpu_custom_call.1} parent=11 // pred_check
          %p377 = pneg %p207
        $region34: #{tpu_custom_call.1} parent=11 // pred_check_branch
          %379 = sbr.rel (%p377) target = $region36
        $region35: #{tpu_custom_call.1} parent=11 // pred_region
          _
        $region36: #{tpu_custom_call.1} parent=11 // pred_fallthru
          _
        // Predicated region
        $region37: #{tpu_custom_call.1} parent=11 // pred_check
          %p380 = pneg %p228
        $region38: #{tpu_custom_call.1} parent=11 // pred_check_branch
          %382 = sbr.rel (%p380) target = $region40
        $region39: #{tpu_custom_call.1} parent=11 // pred_region
          %s384 = ssub.s32 1024, 1024
          %385 = vsyncadd [#allocation12], %s384
          %s386 = sshll.u32 [#allocation11], 4
          %s387 = int_to_ptr.vmem [resolvable:$true] %s386
          %392 = dma.hbm_to_vmem [thread:$0]  %s8, 1024, %s387, [#allocation12], 64, 64, 4
        $region40: #{tpu_custom_call.1} parent=11 // pred_fallthru
          _
        // Predicated region
        $region41: #{tpu_custom_call.1} parent=11 // pred_check
          %p393 = pneg %p249
        $region42: #{tpu_custom_call.1} parent=11 // pred_check_branch
          %395 = sbr.rel (%p393) target = $region44
        $region43: #{tpu_custom_call.1} parent=11 // pred_region
          _
        $region44: #{tpu_custom_call.1} parent=11 // pred_fallthru
          _
        // Predicated region
        $region45: #{tpu_custom_call.1} parent=11 // pred_check
          %p396 = pneg %p270
        $region46: #{tpu_custom_call.1} parent=11 // pred_check_branch
          %398 = sbr.rel (%p396) target = $region48
        $region47: #{tpu_custom_call.1} parent=11 // pred_region
          %s400 = ssub.s32 1024, 1024
          %401 = vsyncadd [#allocation12], %s400
          %s402 = sshll.u32 [#allocation13], 4
          %s403 = int_to_ptr.vmem [resolvable:$true] %s402
          %408 = dma.hbm_to_vmem [thread:$0]  %s10, 1024, %s403, [#allocation12], 64, 64, 4
        $region48: #{tpu_custom_call.1} parent=11 // pred_fallthru
          _
        // Predicated region
        $region49: #{tpu_custom_call.1} parent=11 // pred_check
          %p409 = pneg %p291
        $region50: #{tpu_custom_call.1} parent=11 // pred_check_branch
          %411 = sbr.rel (%p409) target = $region52
        $region51: #{tpu_custom_call.1} parent=11 // pred_region
          _
        $region52: #{tpu_custom_call.1} parent=11 // pred_fallthru
          _
      $region12: #{tpu_custom_call.1} parent=5 // pred_fallthru
        _
      %p412 = scmp.lt.s32.totalorder %s29, 2
      // Predicated region
      $region53: #{tpu_custom_call.1} parent=5 // pred_check
        %p413 = pneg %p412
      $region54: #{tpu_custom_call.1} parent=5 // pred_check_branch
        %415 = sbr.rel (%p413) target = $region56
      $region55: #{tpu_custom_call.1} parent=5 // pred_region
        // Predicated region
        $region57: #{tpu_custom_call.1} parent=55 // pred_check
          %p416 = pneg %p49
        $region58: #{tpu_custom_call.1} parent=55 // pred_check_branch
          %418 = sbr.rel (%p416) target = $region60
        $region59: #{tpu_custom_call.1} parent=55 // pred_region
          %s419 = sand.u32 %s39, 1
          %s420 = scalar_lea.sflag [#allocation3], %s419
          %s421 = sand.u32 %s39, 1
          %s422 = smul.addr %s421, 128
          %s423 = scalar_lea.vmem [#allocation2], %s422
          %s424 = smul.u32 8, %s29
          %s426 = ssub.s32 2048, 2048
          %427 = vsyncadd %s420, %s426
          %s428 = smul.addr %s424, 2
          %s429 = smul.addr %s428, 128
          %s430 = scalar_lea.hbm %s0, %s429
          %s431 = sshll.u32 %s423, 4
          %s432 = int_to_ptr.vmem [resolvable:$true] %s431
          %437 = dma.hbm_to_vmem [thread:$0]  %s430, 2048, %s432, %s420, 128, 128, 8
        $region60: #{tpu_custom_call.1} parent=55 // pred_fallthru
          _
        // Predicated region
        $region61: #{tpu_custom_call.1} parent=55 // pred_check
          %p438 = pneg %p75
        $region62: #{tpu_custom_call.1} parent=55 // pred_check_branch
          %440 = sbr.rel (%p438) target = $region64
        $region63: #{tpu_custom_call.1} parent=55 // pred_region
          %s441 = sand.u32 %s29, 1
          %s442 = scalar_lea.sflag [#allocation6], %s441
          %s443 = sand.u32 %s65, 1
          %s444 = smul.addr %s443, 32
          %s445 = scalar_lea.vmem [#allocation5], %s444
          %s447 = ssub.s32 512, 512
          %448 = vsyncadd %s442, %s447
          %s449 = smul.addr %s29, 128
          %s450 = scalar_lea.hbm %s1, %s449
          %s451 = sshll.u32 %s445, 4
          %s452 = int_to_ptr.vmem [resolvable:$true] %s451
          %457 = dma.hbm_to_vmem [thread:$0]  %s450, 512, %s452, %s442, 256, 128, 8
        $region64: #{tpu_custom_call.1} parent=55 // pred_fallthru
          _
      $region56: #{tpu_custom_call.1} parent=5 // pred_fallthru
        _
      %p458 = scmp.le.s32.totalorder 1, %s29
      %p459 = scmp.lt.s32.totalorder %s29, 3
      %p460 = pnand %p458, %p459
      %p461 = pneg %p460
      // Predicated region
      $region65: #{tpu_custom_call.1} parent=5 // pred_check
        _
      $region66: #{tpu_custom_call.1} parent=5 // pred_check_branch
        %463 = sbr.rel (%p460) target = $region68
      $region67: #{tpu_custom_call.1} parent=5 // pred_region
        %s464 = ssub.s32 %s29, 1
        %s465 = sand.u32 %s42, 1
        %s466 = scalar_lea.sflag [#allocation3], %s465
        %s467 = sand.u32 %s42, 1
        %s468 = smul.addr %s467, 128
        %s469 = scalar_lea.vmem [#allocation2], %s468
        // Predicated region
        $region69: #{tpu_custom_call.1} parent=67 // pred_check
          %p470 = pneg %p55
        $region70: #{tpu_custom_call.1} parent=67 // pred_check_branch
          %472 = sbr.rel (%p470) target = $region72
        $region71: #{tpu_custom_call.1} parent=67 // pred_region
          %473 = dma.done %s466, 2048
        $region72: #{tpu_custom_call.1} parent=67 // pred_fallthru
          _
        %s474 = sand.u32 %s34, 1
        %s475 = scalar_lea.sflag [#allocation6], %s474
        %s476 = sand.u32 %s68, 1
        %s477 = smul.addr %s476, 32
        %s478 = scalar_lea.vmem [#allocation5], %s477
        // Predicated region
        $region73: #{tpu_custom_call.1} parent=67 // pred_check
          %p479 = pneg %p81
        $region74: #{tpu_custom_call.1} parent=67 // pred_check_branch
          %481 = sbr.rel (%p479) target = $region76
        $region75: #{tpu_custom_call.1} parent=67 // pred_region
          %482 = dma.done %s475, 512
        $region76: #{tpu_custom_call.1} parent=67 // pred_fallthru
          _
        // Predicated region
        $region77: #{tpu_custom_call.1} parent=67 // pred_check
          %p483 = pneg %p102
        $region78: #{tpu_custom_call.1} parent=67 // pred_check_branch
          %485 = sbr.rel (%p483) target = $region80
        $region79: #{tpu_custom_call.1} parent=67 // pred_region
          %486 = dma.done [#allocation6], 3072
        $region80: #{tpu_custom_call.1} parent=67 // pred_fallthru
          _
        // Predicated region
        $region81: #{tpu_custom_call.1} parent=67 // pred_check
          %p487 = pneg %p144
        $region82: #{tpu_custom_call.1} parent=67 // pred_check_branch
          %489 = sbr.rel (%p487) target = $region84
        $region83: #{tpu_custom_call.1} parent=67 // pred_region
          %490 = dma.done [#allocation9], 2048
        $region84: #{tpu_custom_call.1} parent=67 // pred_fallthru
          _
        // Predicated region
        $region85: #{tpu_custom_call.1} parent=67 // pred_check
          %p491 = pneg %p186
        $region86: #{tpu_custom_call.1} parent=67 // pred_check_branch
          %493 = sbr.rel (%p491) target = $region88
        $region87: #{tpu_custom_call.1} parent=67 // pred_region
          %494 = dma.done [#allocation9], 1024
        $region88: #{tpu_custom_call.1} parent=67 // pred_fallthru
          _
        // Predicated region
        $region89: #{tpu_custom_call.1} parent=67 // pred_check
          %p495 = pneg %p228
        $region90: #{tpu_custom_call.1} parent=67 // pred_check_branch
          %497 = sbr.rel (%p495) target = $region92
        $region91: #{tpu_custom_call.1} parent=67 // pred_region
          %498 = dma.done [#allocation12], 1024
        $region92: #{tpu_custom_call.1} parent=67 // pred_fallthru
          _
        // Predicated region
        $region93: #{tpu_custom_call.1} parent=67 // pred_check
          %p499 = pneg %p270
        $region94: #{tpu_custom_call.1} parent=67 // pred_check_branch
          %501 = sbr.rel (%p499) target = $region96
        $region95: #{tpu_custom_call.1} parent=67 // pred_region
          %502 = dma.done [#allocation12], 1024
        $region96: #{tpu_custom_call.1} parent=67 // pred_fallthru
          _
        %s503 = sand.u32 %s42, 1
        %s504 = scalar_lea.sflag [#allocation3], %s503
        %s505 = sand.u32 %s42, 1
        %s506 = smul.addr %s505, 128
        %s507 = scalar_lea.vmem [#allocation2], %s506
        %p508 = pneg %p55
        %p509 = pneg %p52
        %s510 = sand.u32 %s34, 1
        %s511 = scalar_lea.sflag [#allocation6], %s510
        %s512 = sand.u32 %s68, 1
        %s513 = smul.addr %s512, 32
        %s514 = scalar_lea.vmem [#allocation5], %s513
        %p515 = pneg %p81
        %p516 = pneg %p78
        %p517 = pneg %p102
        %p518 = pneg %p99
        %p519 = pneg %p123
        %p520 = pneg %p120
        %p521 = pneg %p144
        %p522 = pneg %p141
        %p523 = pneg %p165
        %p524 = pneg %p162
        %p525 = pneg %p186
        %p526 = pneg %p183
        %p527 = pneg %p207
        %p528 = pneg %p204
        %p529 = pneg %p228
        %p530 = pneg %p225
        %p531 = pneg %p249
        %p532 = pneg %p246
        %p533 = pneg %p270
        %p534 = pneg %p267
        %p535 = pneg %p291
        %p536 = pneg %p288
        %p537 = pneg %p317
        %p538 = pneg %p314
        %s539 = sand.u32 %s304, 1
        %s540 = scalar_lea.sflag [#allocation4], %s539
        %s541 = sand.u32 %s304, 1
        %s542 = smul.addr %s541, 8
        %s543 = scalar_lea.vmem [#allocation14], %s542
        %s544 = smul.u32 8, %s34
        %v546 = vld [vmem:[%s469] sm:$0xff]
        %v547 = vld [vmem:[%s469 + $0x8] sm:$0xff]
        %v548 = vld [vmem:[%s469 + $0x10] sm:$0xff]
        %v549 = vld [vmem:[%s469 + $0x18] sm:$0xff]
        %v550 = vld [vmem:[%s469 + $0x20] sm:$0xff]
        %v551 = vld [vmem:[%s469 + $0x28] sm:$0xff]
        %v552 = vld [vmem:[%s469 + $0x30] sm:$0xff]
        %v553 = vld [vmem:[%s469 + $0x38] sm:$0xff]
        %v554 = vld [vmem:[%s469 + $0x40] sm:$0xff]
        %v555 = vld [vmem:[%s469 + $0x48] sm:$0xff]
        %v556 = vld [vmem:[%s469 + $0x50] sm:$0xff]
        %v557 = vld [vmem:[%s469 + $0x58] sm:$0xff]
        %v558 = vld [vmem:[%s469 + $0x60] sm:$0xff]
        %v559 = vld [vmem:[%s469 + $0x68] sm:$0xff]
        %v560 = vld [vmem:[%s469 + $0x70] sm:$0xff]
        %v561 = vld [vmem:[%s469 + $0x78] sm:$0xff]
        %v562 = vld [vmem:[%s478] sm:$0xff]
        %v563 = vld [vmem:[%s478 + $0x8] sm:$0xff]
        %v564 = vld [vmem:[%s478 + $0x10] sm:$0xff]
        %v565 = vld [vmem:[%s478 + $0x18] sm:$0xff]
        %v566 = vcombine.low %v562, %v564
        %v567 = vcombine.high %v562, %v564
        %v569 = vunpack.c.l.s4 1983009808
        %v570 = vunpack.c.0.s8 %v569
        %v571 = vlaneseq
        %v572 = vshrl.u32 %v571, 7
        %v573 = vsub.s32 %v570, %v572
        %v574 = vrot.slane %v566, %v573
        %v576 = vunpack.c.l.s4 1983009808
        %v577 = vunpack.c.0.s8 %v576
        %v578 = vlaneseq
        %v579 = vshrl.u32 %v578, 7
        %v580 = vsub.s32 %v577, %v579
        %v581 = vrot.slane %v567, %v580
        %v582 = vcombine.low %v563, %v565
        %v583 = vcombine.high %v563, %v565
        %v585 = vunpack.c.l.s4 1983009808
        %v586 = vunpack.c.0.s8 %v585
        %v587 = vlaneseq
        %v588 = vshrl.u32 %v587, 7
        %v589 = vsub.s32 %v586, %v588
        %v590 = vrot.slane %v582, %v589
        %v592 = vunpack.c.l.s4 1983009808
        %v593 = vunpack.c.0.s8 %v592
        %v594 = vlaneseq
        %v595 = vshrl.u32 %v594, 7
        %v596 = vsub.s32 %v593, %v595
        %v597 = vrot.slane %v583, %v596
        %v598 = vcombine.low %v574, %v590
        %v599 = vcombine.high %v574, %v590
        %v601 = vunpack.c.l.s4 1934713408
        %v602 = vunpack.c.0.s8 %v601
        %v603 = vlaneseq
        %v604 = vshrl.u32 %v603, 7
        %v605 = vsub.s32 %v602, %v604
        %v606 = vrot.slane %v598, %v605
        %v608 = vunpack.c.l.s4 1934713408
        %v609 = vunpack.c.0.s8 %v608
        %v610 = vlaneseq
        %v611 = vshrl.u32 %v610, 7
        %v612 = vsub.s32 %v609, %v611
        %v613 = vrot.slane %v599, %v612
        %v614 = vcombine.low %v581, %v597
        %v615 = vcombine.high %v581, %v597
        %v617 = vunpack.c.l.s4 1934713408
        %v618 = vunpack.c.0.s8 %v617
        %v619 = vlaneseq
        %v620 = vshrl.u32 %v619, 7
        %v621 = vsub.s32 %v618, %v620
        %v622 = vrot.slane %v614, %v621
        %v624 = vunpack.c.l.s4 1934713408
        %v625 = vunpack.c.0.s8 %v624
        %v626 = vlaneseq
        %v627 = vshrl.u32 %v626, 7
        %v628 = vsub.s32 %v625, %v627
        %v629 = vrot.slane %v615, %v628
        %v630 = vcombine.high %v606, 0.0
        %v631 = vcombine.high %v613, 0.0
        %v632 = vcombine.high %v622, 0.0
        %v633 = vcombine.high %v629, 0.0
        %vm634 = vcmask 130048
        %v636 = vsel %vm634, %v606, 0
        %638 = vmatprep.subr.mxu0 0.0
        %639 = vmatpush1.msra.mxu0 %v546
        %640 = vmatprep.subr.mxu0 0.0
        %641 = vmatpush1.msra.mxu0 %v547
        %642 = vmatprep.subr.mxu0 0.0
        %643 = vmatpush1.msra.mxu0 0.0
        %644 = vmatprep.subr.mxu0 0.0
        %645 = vmatpush1.msra.mxu0 0.0
        %646 = vmatprep.subr.mxu0 0.0
        %647 = vmatpush1.msra.mxu0 0.0
        %648 = vmatprep.subr.mxu0 0.0
        %649 = vmatpush1.msra.mxu0 0.0
        %650 = vmatprep.subr.mxu0 0.0
        %651 = vmatpush1.msra.mxu0 0.0
        %652 = vmatprep.subr.mxu0 0.0
        %653 = vmatpush1.msra.mxu0 0.0
        %654 = vmatprep.subr.mxu0 0.0
        %655 = vmatpush1.msra.mxu0 0.0
        %656 = vmatprep.subr.mxu0 0.0
        %657 = vmatpush1.msra.mxu0 0.0
        %658 = vmatprep.subr.mxu0 0.0
        %659 = vmatpush1.msra.mxu0 0.0
        %660 = vmatprep.subr.mxu0 0.0
        %661 = vmatpush1.msra.mxu0 0.0
        %662 = vmatprep.subr.mxu0 0.0
        %663 = vmatpush1.msra.mxu0 0.0
        %664 = vmatprep.subr.mxu0 0.0
        %665 = vmatpush1.msra.mxu0 0.0
        %666 = vmatprep.subr.mxu0 0.0
        %667 = vmatpush1.msra.mxu0 0.0
        %668 = vmatprep.subr.mxu0 0.0
        %669 = vmatpush1.msra.mxu0 0.0
        %670 = vmatprep.subr.mxu0 0.0
        %671 = vmatpush1.msra.mxu0 0.0
        %672 = vmatprep.subr.mxu0 0.0
        %673 = vmatpush1.msra.mxu0 0.0
        %674 = vmatprep.subr.mxu0 0.0
        %675 = vmatpush1.msra.mxu0 0.0
        %676 = vmatprep.subr.mxu0 0.0
        %677 = vmatpush1.msra.mxu0 0.0
        %678 = vmatprep.subr.mxu0 0.0
        %679 = vmatpush1.msra.mxu0 0.0
        %680 = vmatprep.subr.mxu0 0.0
        %681 = vmatpush1.msra.mxu0 0.0
        %682 = vmatprep.subr.mxu0 0.0
        %683 = vmatpush1.msra.mxu0 0.0
        %684 = vmatprep.subr.mxu0 0.0
        %685 = vmatpush1.msra.mxu0 0.0
        %686 = vmatprep.subr.mxu0 0.0
        %687 = vmatpush1.msra.mxu0 0.0
        %688 = vmatprep.subr.mxu0 0.0
        %689 = vmatpush1.msra.mxu0 0.0
        %690 = vmatprep.subr.mxu0 0.0
        %691 = vmatpush1.msra.mxu0 0.0
        %692 = vmatprep.subr.mxu0 0.0
        %693 = vmatpush1.msra.mxu0 0.0
        %694 = vmatprep.subr.mxu0 0.0
        %695 = vmatpush1.msra.mxu0 0.0
        %696 = vmatprep.subr.mxu0 0.0
        %697 = vmatpush1.msra.mxu0 0.0
        %698 = vmatprep.subr.mxu0 0.0
        %699 = vmatpush1.msra.mxu0 0.0
        %700 = vmatprep.subr.mxu0 0.0
        %701 = vmatpush1.msra.mxu0 0.0
        %702 = vmatprep.mubr.f32.mxu0 0.0
        %703 = vmatmul.mubr.f32.gmra.mrb[0].mxu0 %v636
        %v704 = vpop.f32.mrb[0].mxu0
        %v705 = vadd.f32 0.0, %v704
        %v706 = vpop.f32.mrb[0].mxu0
        %707 = vdwg.mxu0
        %v709 = vsel %vm634, %v630, 0
        %711 = vmatprep.subr.mxu0 0.0
        %712 = vmatpush1.msra.mxu0 %v548
        %713 = vmatprep.subr.mxu0 0.0
        %714 = vmatpush1.msra.mxu0 %v549
        %715 = vmatprep.subr.mxu0 0.0
        %716 = vmatpush1.msra.mxu0 0.0
        %717 = vmatprep.subr.mxu0 0.0
        %718 = vmatpush1.msra.mxu0 0.0
        %719 = vmatprep.subr.mxu0 0.0
        %720 = vmatpush1.msra.mxu0 0.0
        %721 = vmatprep.subr.mxu0 0.0
        %722 = vmatpush1.msra.mxu0 0.0
        %723 = vmatprep.subr.mxu0 0.0
        %724 = vmatpush1.msra.mxu0 0.0
        %725 = vmatprep.subr.mxu0 0.0
        %726 = vmatpush1.msra.mxu0 0.0
        %727 = vmatprep.subr.mxu0 0.0
        %728 = vmatpush1.msra.mxu0 0.0
        %729 = vmatprep.subr.mxu0 0.0
        %730 = vmatpush1.msra.mxu0 0.0
        %731 = vmatprep.subr.mxu0 0.0
        %732 = vmatpush1.msra.mxu0 0.0
        %733 = vmatprep.subr.mxu0 0.0
        %734 = vmatpush1.msra.mxu0 0.0
        %735 = vmatprep.subr.mxu0 0.0
        %736 = vmatpush1.msra.mxu0 0.0
        %737 = vmatprep.subr.mxu0 0.0
        %738 = vmatpush1.msra.mxu0 0.0
        %739 = vmatprep.subr.mxu0 0.0
        %740 = vmatpush1.msra.mxu0 0.0
        %741 = vmatprep.subr.mxu0 0.0
        %742 = vmatpush1.msra.mxu0 0.0
        %743 = vmatprep.subr.mxu0 0.0
        %744 = vmatpush1.msra.mxu0 0.0
        %745 = vmatprep.subr.mxu0 0.0
        %746 = vmatpush1.msra.mxu0 0.0
        %747 = vmatprep.subr.mxu0 0.0
        %748 = vmatpush1.msra.mxu0 0.0
        %749 = vmatprep.subr.mxu0 0.0
        %750 = vmatpush1.msra.mxu0 0.0
        %751 = vmatprep.subr.mxu0 0.0
        %752 = vmatpush1.msra.mxu0 0.0
        %753 = vmatprep.subr.mxu0 0.0
        %754 = vmatpush1.msra.mxu0 0.0
        %755 = vmatprep.subr.mxu0 0.0
        %756 = vmatpush1.msra.mxu0 0.0
        %757 = vmatprep.subr.mxu0 0.0
        %758 = vmatpush1.msra.mxu0 0.0
        %759 = vmatprep.subr.mxu0 0.0
        %760 = vmatpush1.msra.mxu0 0.0
        %761 = vmatprep.subr.mxu0 0.0
        %762 = vmatpush1.msra.mxu0 0.0
        %763 = vmatprep.subr.mxu0 0.0
        %764 = vmatpush1.msra.mxu0 0.0
        %765 = vmatprep.subr.mxu0 0.0
        %766 = vmatpush1.msra.mxu0 0.0
        %767 = vmatprep.subr.mxu0 0.0
        %768 = vmatpush1.msra.mxu0 0.0
        %769 = vmatprep.subr.mxu0 0.0
        %770 = vmatpush1.msra.mxu0 0.0
        %771 = vmatprep.subr.mxu0 0.0
        %772 = vmatpush1.msra.mxu0 0.0
        %773 = vmatprep.subr.mxu0 0.0
        %774 = vmatpush1.msra.mxu0 0.0
        %775 = vmatprep.mubr.f32.mxu0 0.0
        %776 = vmatmul.mubr.f32.gmra.mrb[0].mxu0 %v709
        %v777 = vpop.f32.mrb[0].mxu0
        %v778 = vadd.f32 0.0, %v777
        %v779 = vpop.f32.mrb[0].mxu0
        %780 = vdwg.mxu0
        %v782 = vsel %vm634, %v613, 0
        %784 = vmatprep.subr.mxu0 0.0
        %785 = vmatpush1.msra.mxu0 %v550
        %786 = vmatprep.subr.mxu0 0.0
        %787 = vmatpush1.msra.mxu0 %v551
        %788 = vmatprep.subr.mxu0 0.0
        %789 = vmatpush1.msra.mxu0 0.0
        %790 = vmatprep.subr.mxu0 0.0
        %791 = vmatpush1.msra.mxu0 0.0
        %792 = vmatprep.subr.mxu0 0.0
        %793 = vmatpush1.msra.mxu0 0.0
        %794 = vmatprep.subr.mxu0 0.0
        %795 = vmatpush1.msra.mxu0 0.0
        %796 = vmatprep.subr.mxu0 0.0
        %797 = vmatpush1.msra.mxu0 0.0
        %798 = vmatprep.subr.mxu0 0.0
        %799 = vmatpush1.msra.mxu0 0.0
        %800 = vmatprep.subr.mxu0 0.0
        %801 = vmatpush1.msra.mxu0 0.0
        %802 = vmatprep.subr.mxu0 0.0
        %803 = vmatpush1.msra.mxu0 0.0
        %804 = vmatprep.subr.mxu0 0.0
        %805 = vmatpush1.msra.mxu0 0.0
        %806 = vmatprep.subr.mxu0 0.0
        %807 = vmatpush1.msra.mxu0 0.0
        %808 = vmatprep.subr.mxu0 0.0
        %809 = vmatpush1.msra.mxu0 0.0
        %810 = vmatprep.subr.mxu0 0.0
        %811 = vmatpush1.msra.mxu0 0.0
        %812 = vmatprep.subr.mxu0 0.0
        %813 = vmatpush1.msra.mxu0 0.0
        %814 = vmatprep.subr.mxu0 0.0
        %815 = vmatpush1.msra.mxu0 0.0
        %816 = vmatprep.subr.mxu0 0.0
        %817 = vmatpush1.msra.mxu0 0.0
        %818 = vmatprep.subr.mxu0 0.0
        %819 = vmatpush1.msra.mxu0 0.0
        %820 = vmatprep.subr.mxu0 0.0
        %821 = vmatpush1.msra.mxu0 0.0
        %822 = vmatprep.subr.mxu0 0.0
        %823 = vmatpush1.msra.mxu0 0.0
        %824 = vmatprep.subr.mxu0 0.0
        %825 = vmatpush1.msra.mxu0 0.0
        %826 = vmatprep.subr.mxu0 0.0
        %827 = vmatpush1.msra.mxu0 0.0
        %828 = vmatprep.subr.mxu0 0.0
        %829 = vmatpush1.msra.mxu0 0.0
        %830 = vmatprep.subr.mxu0 0.0
        %831 = vmatpush1.msra.mxu0 0.0
        %832 = vmatprep.subr.mxu0 0.0
        %833 = vmatpush1.msra.mxu0 0.0
        %834 = vmatprep.subr.mxu0 0.0
        %835 = vmatpush1.msra.mxu0 0.0
        %836 = vmatprep.subr.mxu0 0.0
        %837 = vmatpush1.msra.mxu0 0.0
        %838 = vmatprep.subr.mxu0 0.0
        %839 = vmatpush1.msra.mxu0 0.0
        %840 = vmatprep.subr.mxu0 0.0
        %841 = vmatpush1.msra.mxu0 0.0
        %842 = vmatprep.subr.mxu0 0.0
        %843 = vmatpush1.msra.mxu0 0.0
        %844 = vmatprep.subr.mxu0 0.0
        %845 = vmatpush1.msra.mxu0 0.0
        %846 = vmatprep.subr.mxu0 0.0
        %847 = vmatpush1.msra.mxu0 0.0
        %848 = vmatprep.mubr.f32.mxu0 0.0
        %849 = vmatmul.mubr.f32.gmra.mrb[0].mxu0 %v782
        %v850 = vpop.f32.mrb[0].mxu0
        %v851 = vadd.f32 0.0, %v850
        %v852 = vpop.f32.mrb[0].mxu0
        %853 = vdwg.mxu0
        %v855 = vsel %vm634, %v631, 0
        %857 = vmatprep.subr.mxu0 0.0
        %858 = vmatpush1.msra.mxu0 %v552
        %859 = vmatprep.subr.mxu0 0.0
        %860 = vmatpush1.msra.mxu0 %v553
        %861 = vmatprep.subr.mxu0 0.0
        %862 = vmatpush1.msra.mxu0 0.0
        %863 = vmatprep.subr.mxu0 0.0
        %864 = vmatpush1.msra.mxu0 0.0
        %865 = vmatprep.subr.mxu0 0.0
        %866 = vmatpush1.msra.mxu0 0.0
        %867 = vmatprep.subr.mxu0 0.0
        %868 = vmatpush1.msra.mxu0 0.0
        %869 = vmatprep.subr.mxu0 0.0
        %870 = vmatpush1.msra.mxu0 0.0
        %871 = vmatprep.subr.mxu0 0.0
        %872 = vmatpush1.msra.mxu0 0.0
        %873 = vmatprep.subr.mxu0 0.0
        %874 = vmatpush1.msra.mxu0 0.0
        %875 = vmatprep.subr.mxu0 0.0
        %876 = vmatpush1.msra.mxu0 0.0
        %877 = vmatprep.subr.mxu0 0.0
        %878 = vmatpush1.msra.mxu0 0.0
        %879 = vmatprep.subr.mxu0 0.0
        %880 = vmatpush1.msra.mxu0 0.0
        %881 = vmatprep.subr.mxu0 0.0
        %882 = vmatpush1.msra.mxu0 0.0
        %883 = vmatprep.subr.mxu0 0.0
        %884 = vmatpush1.msra.mxu0 0.0
        %885 = vmatprep.subr.mxu0 0.0
        %886 = vmatpush1.msra.mxu0 0.0
        %887 = vmatprep.subr.mxu0 0.0
        %888 = vmatpush1.msra.mxu0 0.0
        %889 = vmatprep.subr.mxu0 0.0
        %890 = vmatpush1.msra.mxu0 0.0
        %891 = vmatprep.subr.mxu0 0.0
        %892 = vmatpush1.msra.mxu0 0.0
        %893 = vmatprep.subr.mxu0 0.0
        %894 = vmatpush1.msra.mxu0 0.0
        %895 = vmatprep.subr.mxu0 0.0
        %896 = vmatpush1.msra.mxu0 0.0
        %897 = vmatprep.subr.mxu0 0.0
        %898 = vmatpush1.msra.mxu0 0.0
        %899 = vmatprep.subr.mxu0 0.0
        %900 = vmatpush1.msra.mxu0 0.0
        %901 = vmatprep.subr.mxu0 0.0
        %902 = vmatpush1.msra.mxu0 0.0
        %903 = vmatprep.subr.mxu0 0.0
        %904 = vmatpush1.msra.mxu0 0.0
        %905 = vmatprep.subr.mxu0 0.0
        %906 = vmatpush1.msra.mxu0 0.0
        %907 = vmatprep.subr.mxu0 0.0
        %908 = vmatpush1.msra.mxu0 0.0
        %909 = vmatprep.subr.mxu0 0.0
        %910 = vmatpush1.msra.mxu0 0.0
        %911 = vmatprep.subr.mxu0 0.0
        %912 = vmatpush1.msra.mxu0 0.0
        %913 = vmatprep.subr.mxu0 0.0
        %914 = vmatpush1.msra.mxu0 0.0
        %915 = vmatprep.subr.mxu0 0.0
        %916 = vmatpush1.msra.mxu0 0.0
        %917 = vmatprep.subr.mxu0 0.0
        %918 = vmatpush1.msra.mxu0 0.0
        %919 = vmatprep.subr.mxu0 0.0
        %920 = vmatpush1.msra.mxu0 0.0
        %921 = vmatprep.mubr.f32.mxu0 0.0
        %922 = vmatmul.mubr.f32.gmra.mrb[0].mxu0 %v855
        %v923 = vpop.f32.mrb[0].mxu0
        %v924 = vadd.f32 0.0, %v923
        %v925 = vpop.f32.mrb[0].mxu0
        %926 = vdwg.mxu0
        %v928 = vsel %vm634, %v622, 0
        %930 = vmatprep.subr.mxu0 0.0
        %931 = vmatpush1.msra.mxu0 %v554
        %932 = vmatprep.subr.mxu0 0.0
        %933 = vmatpush1.msra.mxu0 %v555
        %934 = vmatprep.subr.mxu0 0.0
        %935 = vmatpush1.msra.mxu0 0.0
        %936 = vmatprep.subr.mxu0 0.0
        %937 = vmatpush1.msra.mxu0 0.0
        %938 = vmatprep.subr.mxu0 0.0
        %939 = vmatpush1.msra.mxu0 0.0
        %940 = vmatprep.subr.mxu0 0.0
        %941 = vmatpush1.msra.mxu0 0.0
        %942 = vmatprep.subr.mxu0 0.0
        %943 = vmatpush1.msra.mxu0 0.0
        %944 = vmatprep.subr.mxu0 0.0
        %945 = vmatpush1.msra.mxu0 0.0
        %946 = vmatprep.subr.mxu0 0.0
        %947 = vmatpush1.msra.mxu0 0.0
        %948 = vmatprep.subr.mxu0 0.0
        %949 = vmatpush1.msra.mxu0 0.0
        %950 = vmatprep.subr.mxu0 0.0
        %951 = vmatpush1.msra.mxu0 0.0
        %952 = vmatprep.subr.mxu0 0.0
        %953 = vmatpush1.msra.mxu0 0.0
        %954 = vmatprep.subr.mxu0 0.0
        %955 = vmatpush1.msra.mxu0 0.0
        %956 = vmatprep.subr.mxu0 0.0
        %957 = vmatpush1.msra.mxu0 0.0
        %958 = vmatprep.subr.mxu0 0.0
        %959 = vmatpush1.msra.mxu0 0.0
        %960 = vmatprep.subr.mxu0 0.0
        %961 = vmatpush1.msra.mxu0 0.0
        %962 = vmatprep.subr.mxu0 0.0
        %963 = vmatpush1.msra.mxu0 0.0
        %964 = vmatprep.subr.mxu0 0.0
        %965 = vmatpush1.msra.mxu0 0.0
        %966 = vmatprep.subr.mxu0 0.0
        %967 = vmatpush1.msra.mxu0 0.0
        %968 = vmatprep.subr.mxu0 0.0
        %969 = vmatpush1.msra.mxu0 0.0
        %970 = vmatprep.subr.mxu0 0.0
        %971 = vmatpush1.msra.mxu0 0.0
        %972 = vmatprep.subr.mxu0 0.0
        %973 = vmatpush1.msra.mxu0 0.0
        %974 = vmatprep.subr.mxu0 0.0
        %975 = vmatpush1.msra.mxu0 0.0
        %976 = vmatprep.subr.mxu0 0.0
        %977 = vmatpush1.msra.mxu0 0.0
        %978 = vmatprep.subr.mxu0 0.0
        %979 = vmatpush1.msra.mxu0 0.0
        %980 = vmatprep.subr.mxu0 0.0
        %981 = vmatpush1.msra.mxu0 0.0
        %982 = vmatprep.subr.mxu0 0.0
        %983 = vmatpush1.msra.mxu0 0.0
        %984 = vmatprep.subr.mxu0 0.0
        %985 = vmatpush1.msra.mxu0 0.0
        %986 = vmatprep.subr.mxu0 0.0
        %987 = vmatpush1.msra.mxu0 0.0
        %988 = vmatprep.subr.mxu0 0.0
        %989 = vmatpush1.msra.mxu0 0.0
        %990 = vmatprep.subr.mxu0 0.0
        %991 = vmatpush1.msra.mxu0 0.0
        %992 = vmatprep.subr.mxu0 0.0
        %993 = vmatpush1.msra.mxu0 0.0
        %994 = vmatprep.mubr.f32.mxu0 0.0
        %995 = vmatmul.mubr.f32.gmra.mrb[0].mxu0 %v928
        %v996 = vpop.f32.mrb[0].mxu0
        %v997 = vadd.f32 0.0, %v996
        %v998 = vpop.f32.mrb[0].mxu0
        %999 = vdwg.mxu0
        %v1001 = vsel %vm634, %v632, 0
        %1003 = vmatprep.subr.mxu0 0.0
        %1004 = vmatpush1.msra.mxu0 %v556
        %1005 = vmatprep.subr.mxu0 0.0
        %1006 = vmatpush1.msra.mxu0 %v557
        %1007 = vmatprep.subr.mxu0 0.0
        %1008 = vmatpush1.msra.mxu0 0.0
        %1009 = vmatprep.subr.mxu0 0.0
        %1010 = vmatpush1.msra.mxu0 0.0
        %1011 = vmatprep.subr.mxu0 0.0
        %1012 = vmatpush1.msra.mxu0 0.0
        %1013 = vmatprep.subr.mxu0 0.0
        %1014 = vmatpush1.msra.mxu0 0.0
        %1015 = vmatprep.subr.mxu0 0.0
        %1016 = vmatpush1.msra.mxu0 0.0
        %1017 = vmatprep.subr.mxu0 0.0
        %1018 = vmatpush1.msra.mxu0 0.0
        %1019 = vmatprep.subr.mxu0 0.0
        %1020 = vmatpush1.msra.mxu0 0.0
        %1021 = vmatprep.subr.mxu0 0.0
        %1022 = vmatpush1.msra.mxu0 0.0
        %1023 = vmatprep.subr.mxu0 0.0
        %1024 = vmatpush1.msra.mxu0 0.0
        %1025 = vmatprep.subr.mxu0 0.0
        %1026 = vmatpush1.msra.mxu0 0.0
        %1027 = vmatprep.subr.mxu0 0.0
        %1028 = vmatpush1.msra.mxu0 0.0
        %1029 = vmatprep.subr.mxu0 0.0
        %1030 = vmatpush1.msra.mxu0 0.0
        %1031 = vmatprep.subr.mxu0 0.0
        %1032 = vmatpush1.msra.mxu0 0.0
        %1033 = vmatprep.subr.mxu0 0.0
        %1034 = vmatpush1.msra.mxu0 0.0
        %1035 = vmatprep.subr.mxu0 0.0
        %1036 = vmatpush1.msra.mxu0 0.0
        %1037 = vmatprep.subr.mxu0 0.0
        %1038 = vmatpush1.msra.mxu0 0.0
        %1039 = vmatprep.subr.mxu0 0.0
        %1040 = vmatpush1.msra.mxu0 0.0
        %1041 = vmatprep.subr.mxu0 0.0
        %1042 = vmatpush1.msra.mxu0 0.0
        %1043 = vmatprep.subr.mxu0 0.0
        %1044 = vmatpush1.msra.mxu0 0.0
        %1045 = vmatprep.subr.mxu0 0.0
        %1046 = vmatpush1.msra.mxu0 0.0
        %1047 = vmatprep.subr.mxu0 0.0
        %1048 = vmatpush1.msra.mxu0 0.0
        %1049 = vmatprep.subr.mxu0 0.0
        %1050 = vmatpush1.msra.mxu0 0.0
        %1051 = vmatprep.subr.mxu0 0.0
        %1052 = vmatpush1.msra.mxu0 0.0
        %1053 = vmatprep.subr.mxu0 0.0
        %1054 = vmatpush1.msra.mxu0 0.0
        %1055 = vmatprep.subr.mxu0 0.0
        %1056 = vmatpush1.msra.mxu0 0.0
        %1057 = vmatprep.subr.mxu0 0.0
        %1058 = vmatpush1.msra.mxu0 0.0
        %1059 = vmatprep.subr.mxu0 0.0
        %1060 = vmatpush1.msra.mxu0 0.0
        %1061 = vmatprep.subr.mxu0 0.0
        %1062 = vmatpush1.msra.mxu0 0.0
        %1063 = vmatprep.subr.mxu0 0.0
        %1064 = vmatpush1.msra.mxu0 0.0
        %1065 = vmatprep.subr.mxu0 0.0
        %1066 = vmatpush1.msra.mxu0 0.0
        %1067 = vmatprep.mubr.f32.mxu0 0.0
        %1068 = vmatmul.mubr.f32.gmra.mrb[0].mxu0 %v1001
        %v1069 = vpop.f32.mrb[0].mxu0
        %v1070 = vadd.f32 0.0, %v1069
        %v1071 = vpop.f32.mrb[0].mxu0
        %1072 = vdwg.mxu0
        %v1074 = vsel %vm634, %v629, 0
        %1076 = vmatprep.subr.mxu0 0.0
        %1077 = vmatpush1.msra.mxu0 %v558
        %1078 = vmatprep.subr.mxu0 0.0
        %1079 = vmatpush1.msra.mxu0 %v559
        %1080 = vmatprep.subr.mxu0 0.0
        %1081 = vmatpush1.msra.mxu0 0.0
        %1082 = vmatprep.subr.mxu0 0.0
        %1083 = vmatpush1.msra.mxu0 0.0
        %1084 = vmatprep.subr.mxu0 0.0
        %1085 = vmatpush1.msra.mxu0 0.0
        %1086 = vmatprep.subr.mxu0 0.0
        %1087 = vmatpush1.msra.mxu0 0.0
        %1088 = vmatprep.subr.mxu0 0.0
        %1089 = vmatpush1.msra.mxu0 0.0
        %1090 = vmatprep.subr.mxu0 0.0
        %1091 = vmatpush1.msra.mxu0 0.0
        %1092 = vmatprep.subr.mxu0 0.0
        %1093 = vmatpush1.msra.mxu0 0.0
        %1094 = vmatprep.subr.mxu0 0.0
        %1095 = vmatpush1.msra.mxu0 0.0
        %1096 = vmatprep.subr.mxu0 0.0
        %1097 = vmatpush1.msra.mxu0 0.0
        %1098 = vmatprep.subr.mxu0 0.0
        %1099 = vmatpush1.msra.mxu0 0.0
        %1100 = vmatprep.subr.mxu0 0.0
        %1101 = vmatpush1.msra.mxu0 0.0
        %1102 = vmatprep.subr.mxu0 0.0
        %1103 = vmatpush1.msra.mxu0 0.0
        %1104 = vmatprep.subr.mxu0 0.0
        %1105 = vmatpush1.msra.mxu0 0.0
        %1106 = vmatprep.subr.mxu0 0.0
        %1107 = vmatpush1.msra.mxu0 0.0
        %1108 = vmatprep.subr.mxu0 0.0
        %1109 = vmatpush1.msra.mxu0 0.0
        %1110 = vmatprep.subr.mxu0 0.0
        %1111 = vmatpush1.msra.mxu0 0.0
        %1112 = vmatprep.subr.mxu0 0.0
        %1113 = vmatpush1.msra.mxu0 0.0
        %1114 = vmatprep.subr.mxu0 0.0
        %1115 = vmatpush1.msra.mxu0 0.0
        %1116 = vmatprep.subr.mxu0 0.0
        %1117 = vmatpush1.msra.mxu0 0.0
        %1118 = vmatprep.subr.mxu0 0.0
        %1119 = vmatpush1.msra.mxu0 0.0
        %1120 = vmatprep.subr.mxu0 0.0
        %1121 = vmatpush1.msra.mxu0 0.0
        %1122 = vmatprep.subr.mxu0 0.0
        %1123 = vmatpush1.msra.mxu0 0.0
        %1124 = vmatprep.subr.mxu0 0.0
        %1125 = vmatpush1.msra.mxu0 0.0
        %1126 = vmatprep.subr.mxu0 0.0
        %1127 = vmatpush1.msra.mxu0 0.0
        %1128 = vmatprep.subr.mxu0 0.0
        %1129 = vmatpush1.msra.mxu0 0.0
        %1130 = vmatprep.subr.mxu0 0.0
        %1131 = vmatpush1.msra.mxu0 0.0
        %1132 = vmatprep.subr.mxu0 0.0
        %1133 = vmatpush1.msra.mxu0 0.0
        %1134 = vmatprep.subr.mxu0 0.0
        %1135 = vmatpush1.msra.mxu0 0.0
        %1136 = vmatprep.subr.mxu0 0.0
        %1137 = vmatpush1.msra.mxu0 0.0
        %1138 = vmatprep.subr.mxu0 0.0
        %1139 = vmatpush1.msra.mxu0 0.0
        %1140 = vmatprep.mubr.f32.mxu0 0.0
        %1141 = vmatmul.mubr.f32.gmra.mrb[0].mxu0 %v1074
        %v1142 = vpop.f32.mrb[0].mxu0
        %v1143 = vadd.f32 0.0, %v1142
        %v1144 = vpop.f32.mrb[0].mxu0
        %1145 = vdwg.mxu0
        %v1147 = vsel %vm634, %v633, 0
        %1149 = vmatprep.subr.mxu0 0.0
        %1150 = vmatpush1.msra.mxu0 %v560
        %1151 = vmatprep.subr.mxu0 0.0
        %1152 = vmatpush1.msra.mxu0 %v561
        %1153 = vmatprep.subr.mxu0 0.0
        %1154 = vmatpush1.msra.mxu0 0.0
        %1155 = vmatprep.subr.mxu0 0.0
        %1156 = vmatpush1.msra.mxu0 0.0
        %1157 = vmatprep.subr.mxu0 0.0
        %1158 = vmatpush1.msra.mxu0 0.0
        %1159 = vmatprep.subr.mxu0 0.0
        %1160 = vmatpush1.msra.mxu0 0.0
        %1161 = vmatprep.subr.mxu0 0.0
        %1162 = vmatpush1.msra.mxu0 0.0
        %1163 = vmatprep.subr.mxu0 0.0
        %1164 = vmatpush1.msra.mxu0 0.0
        %1165 = vmatprep.subr.mxu0 0.0
        %1166 = vmatpush1.msra.mxu0 0.0
        %1167 = vmatprep.subr.mxu0 0.0
        %1168 = vmatpush1.msra.mxu0 0.0
        %1169 = vmatprep.subr.mxu0 0.0
        %1170 = vmatpush1.msra.mxu0 0.0
        %1171 = vmatprep.subr.mxu0 0.0
        %1172 = vmatpush1.msra.mxu0 0.0
        %1173 = vmatprep.subr.mxu0 0.0
        %1174 = vmatpush1.msra.mxu0 0.0
        %1175 = vmatprep.subr.mxu0 0.0
        %1176 = vmatpush1.msra.mxu0 0.0
        %1177 = vmatprep.subr.mxu0 0.0
        %1178 = vmatpush1.msra.mxu0 0.0
        %1179 = vmatprep.subr.mxu0 0.0
        %1180 = vmatpush1.msra.mxu0 0.0
        %1181 = vmatprep.subr.mxu0 0.0
        %1182 = vmatpush1.msra.mxu0 0.0
        %1183 = vmatprep.subr.mxu0 0.0
        %1184 = vmatpush1.msra.mxu0 0.0
        %1185 = vmatprep.subr.mxu0 0.0
        %1186 = vmatpush1.msra.mxu0 0.0
        %1187 = vmatprep.subr.mxu0 0.0
        %1188 = vmatpush1.msra.mxu0 0.0
        %1189 = vmatprep.subr.mxu0 0.0
        %1190 = vmatpush1.msra.mxu0 0.0
        %1191 = vmatprep.subr.mxu0 0.0
        %1192 = vmatpush1.msra.mxu0 0.0
        %1193 = vmatprep.subr.mxu0 0.0
        %1194 = vmatpush1.msra.mxu0 0.0
        %1195 = vmatprep.subr.mxu0 0.0
        %1196 = vmatpush1.msra.mxu0 0.0
        %1197 = vmatprep.subr.mxu0 0.0
        %1198 = vmatpush1.msra.mxu0 0.0
        %1199 = vmatprep.subr.mxu0 0.0
        %1200 = vmatpush1.msra.mxu0 0.0
        %1201 = vmatprep.subr.mxu0 0.0
        %1202 = vmatpush1.msra.mxu0 0.0
        %1203 = vmatprep.subr.mxu0 0.0
        %1204 = vmatpush1.msra.mxu0 0.0
        %1205 = vmatprep.subr.mxu0 0.0
        %1206 = vmatpush1.msra.mxu0 0.0
        %1207 = vmatprep.subr.mxu0 0.0
        %1208 = vmatpush1.msra.mxu0 0.0
        %1209 = vmatprep.subr.mxu0 0.0
        %1210 = vmatpush1.msra.mxu0 0.0
        %1211 = vmatprep.subr.mxu0 0.0
        %1212 = vmatpush1.msra.mxu0 0.0
        %1213 = vmatprep.mubr.f32.mxu0 0.0
        %1214 = vmatmul.mubr.f32.gmra.mrb[0].mxu0 %v1147
        %v1215 = vpop.f32.mrb[0].mxu0
        %v1216 = vadd.f32 0.0, %v1215
        %v1217 = vpop.f32.mrb[0].mxu0
        %1218 = vdwg.mxu0
        %v1219 = vpack.c.bf16 %v705, %v705
        %v1220 = vpack.c.bf16 %v778, %v778
        %v1221 = vpack.c.bf16 %v851, %v851
        %v1222 = vpack.c.bf16 %v924, %v924
        %v1223 = vpack.c.bf16 %v997, %v997
        %v1224 = vpack.c.bf16 %v1070, %v1070
        %v1225 = vpack.c.bf16 %v1143, %v1143
        %v1226 = vpack.c.bf16 %v1216, %v1216
        %v1227 = vld [vmem:[#allocation7] sm:$0xf]
        %v1228 = vld [vmem:[#allocation7 + $0x4] sm:$0xf]
        %v1229 = vld [vmem:[#allocation7 + $0x8] sm:$0xf]
        %v1230 = vld [vmem:[#allocation7 + $0xc] sm:$0xf]
        %v1231 = vld [vmem:[#allocation7 + $0x10] sm:$0xf]
        %v1232 = vld [vmem:[#allocation7 + $0x14] sm:$0xf]
        %v1233 = vld [vmem:[#allocation7 + $0x18] sm:$0xf]
        %v1234 = vld [vmem:[#allocation7 + $0x1c] sm:$0xf]
        %v1235 = vld [vmem:[#allocation7 + $0x20] sm:$0xf]
        %v1236 = vld [vmem:[#allocation7 + $0x24] sm:$0xf]
        %v1237 = vld [vmem:[#allocation7 + $0x28] sm:$0xf]
        %v1238 = vld [vmem:[#allocation7 + $0x2c] sm:$0xf]
        %v1239 = vld [vmem:[#allocation7 + $0x30] sm:$0xf]
        %v1240 = vld [vmem:[#allocation7 + $0x34] sm:$0xf]
        %v1241 = vld [vmem:[#allocation7 + $0x38] sm:$0xf]
        %v1242 = vld [vmem:[#allocation7 + $0x3c] sm:$0xf]
        %v1243 = vld [vmem:[#allocation7 + $0x40] sm:$0xf]
        %v1244 = vld [vmem:[#allocation7 + $0x44] sm:$0xf]
        %v1245 = vld [vmem:[#allocation7 + $0x48] sm:$0xf]
        %v1246 = vld [vmem:[#allocation7 + $0x4c] sm:$0xf]
        %v1247 = vld [vmem:[#allocation7 + $0x50] sm:$0xf]
        %v1248 = vld [vmem:[#allocation7 + $0x54] sm:$0xf]
        %v1249 = vld [vmem:[#allocation7 + $0x58] sm:$0xf]
        %v1250 = vld [vmem:[#allocation7 + $0x5c] sm:$0xf]
        %v1251 = vld [vmem:[#allocation7 + $0x60] sm:$0xf]
        %v1252 = vld [vmem:[#allocation7 + $0x64] sm:$0xf]
        %v1253 = vld [vmem:[#allocation7 + $0x68] sm:$0xf]
        %v1254 = vld [vmem:[#allocation7 + $0x6c] sm:$0xf]
        %v1255 = vld [vmem:[#allocation7 + $0x70] sm:$0xf]
        %v1256 = vld [vmem:[#allocation7 + $0x74] sm:$0xf]
        %v1257 = vld [vmem:[#allocation7 + $0x78] sm:$0xf]
        %v1258 = vld [vmem:[#allocation7 + $0x7c] sm:$0xf]
        %v1267 = vunpack.c.l.b16 %v1219
        %v1268 = vunpack.c.l.b16 %v1220
        %v1269 = vunpack.c.l.b16 %v1221
        %v1270 = vunpack.c.l.b16 %v1222
        %v1271 = vunpack.c.l.b16 %v1223
        %v1272 = vunpack.c.l.b16 %v1224
        %v1273 = vunpack.c.l.b16 %v1225
        %v1274 = vunpack.c.l.b16 %v1226
        %v1275 = vrot.slane %v1267, 1
        %vm1276 = vcmask 1041409
        %v1277 = vsel %vm1276, %v1268, %v1275
        %v1278 = vrot.slane %v1269, 7
        %vm1279 = vcmask 1042434
        %v1280 = vsel %vm1279, %v1278, %v1277
        %v1281 = vrot.slane %v1270, 6
        %vm1282 = vcmask 1043459
        %v1283 = vsel %vm1282, %v1281, %v1280
        %v1284 = vrot.slane %v1271, 5
        %vm1285 = vcmask 1044484
        %v1286 = vsel %vm1285, %v1284, %v1283
        %v1287 = vrot.slane %v1272, 4
        %vm1288 = vcmask 1045509
        %v1289 = vsel %vm1288, %v1287, %v1286
        %v1290 = vrot.slane %v1273, 3
        %vm1291 = vcmask 1046534
        %v1292 = vsel %vm1291, %v1290, %v1289
        %v1293 = vrot.slane %v1274, 2
        %vm1294 = vcmask 1047559
        %v1295 = vsel %vm1294, %v1293, %v1292
        %v1296 = vpack.c.b16 %v1295, %v1295
        %v1314 = vunpack.c.l.b16 %v1243
        %v1315 = vunpack.c.l.b16 %v1244
        %v1316 = vunpack.c.l.b16 %v1245
        %v1317 = vunpack.c.l.b16 %v1246
        %v1318 = vunpack.c.l.b16 %v1247
        %v1319 = vunpack.c.l.b16 %v1248
        %v1320 = vunpack.c.l.b16 %v1249
        %v1321 = vunpack.c.l.b16 %v1250
        %v1322 = vunpack.c.l.b16 %v1251
        %v1323 = vunpack.c.l.b16 %v1252
        %v1324 = vunpack.c.l.b16 %v1253
        %v1325 = vunpack.c.l.b16 %v1254
        %v1326 = vunpack.c.l.b16 %v1255
        %v1327 = vunpack.c.l.b16 %v1256
        %v1328 = vunpack.c.l.b16 %v1257
        %v1329 = vunpack.c.l.b16 %v1258
        %v1330 = vpack.c.b16 %v1315, %v1314
        %v1331 = vpack.c.b16 %v1317, %v1316
        %v1332 = vpack.c.b16 %v1319, %v1318
        %v1333 = vpack.c.b16 %v1321, %v1320
        %v1334 = vpack.c.b16 %v1323, %v1322
        %v1335 = vpack.c.b16 %v1325, %v1324
        %v1336 = vpack.c.b16 %v1327, %v1326
        %v1337 = vpack.c.b16 %v1329, %v1328
        %1346 = vmatprep.subr.bf16.mxu0 0
        %1347 = vmatpush1.bf16.msra.mxu0 %v1330
        %1348 = vmatprep.subr.bf16.mxu0 0
        %1349 = vmatpush1.bf16.msra.mxu0 %v1331
        %1350 = vmatprep.subr.bf16.mxu0 0
        %1351 = vmatpush1.bf16.msra.mxu0 %v1332
        %1352 = vmatprep.subr.bf16.mxu0 0
        %1353 = vmatpush1.bf16.msra.mxu0 %v1333
        %1354 = vmatprep.subr.bf16.mxu0 0
        %1355 = vmatpush1.bf16.msra.mxu0 %v1334
        %1356 = vmatprep.subr.bf16.mxu0 0
        %1357 = vmatpush1.bf16.msra.mxu0 %v1335
        %1358 = vmatprep.subr.bf16.mxu0 0
        %1359 = vmatpush1.bf16.msra.mxu0 %v1336
        %1360 = vmatprep.subr.bf16.mxu0 0
        %1361 = vmatpush1.bf16.msra.mxu0 %v1337
        %1362 = vmatprep.subr.bf16.mxu0 0
        %1363 = vmatpush1.bf16.msra.mxu0 0
        %1364 = vmatprep.subr.bf16.mxu0 0
        %1365 = vmatpush1.bf16.msra.mxu0 0
        %1366 = vmatprep.subr.bf16.mxu0 0
        %1367 = vmatpush1.bf16.msra.mxu0 0
        %1368 = vmatprep.subr.bf16.mxu0 0
        %1369 = vmatpush1.bf16.msra.mxu0 0
        %1370 = vmatprep.subr.bf16.mxu0 0
        %1371 = vmatpush1.bf16.msra.mxu0 0
        %1372 = vmatprep.subr.bf16.mxu0 0
        %1373 = vmatpush1.bf16.msra.mxu0 0
        %1374 = vmatprep.subr.bf16.mxu0 0
        %1375 = vmatpush1.bf16.msra.mxu0 0
        %1376 = vmatprep.subr.bf16.mxu0 0
        %1377 = vmatpush1.bf16.msra.mxu0 0
        %1378 = vmatprep.mubr.bf16.mxu0 0
        %1379 = vmatmul.mubr.bf16.gmra.mrb[0].mxu0 %v1296
        %v1380 = vpop.f32.mrb[0].mxu0
        %v1381 = vadd.f32 0.0, %v1380
        %v1382 = vpop.f32.mrb[0].mxu0
        %v1383 = vpop.f32.mrb[0].mxu0
        %v1384 = vpop.f32.mrb[0].mxu0
        %1385 = vdwg.mxu0
        %v1386 = vrot.slane %v1268, 7
        %v1387 = vsel %vm1276, %v1386, %v1267
        %v1388 = vrot.slane %v1269, 6
        %v1389 = vsel %vm1279, %v1388, %v1387
        %v1390 = vrot.slane %v1270, 5
        %v1391 = vsel %vm1282, %v1390, %v1389
        %v1392 = vrot.slane %v1271, 4
        %v1393 = vsel %vm1285, %v1392, %v1391
        %v1394 = vrot.slane %v1272, 3
        %v1395 = vsel %vm1288, %v1394, %v1393
        %v1396 = vrot.slane %v1273, 2
        %v1397 = vsel %vm1291, %v1396, %v1395
        %v1398 = vrot.slane %v1274, 1
        %v1399 = vsel %vm1294, %v1398, %v1397
        %v1400 = vpack.c.b16 %v1399, %v1399
        %v1418 = vunpack.c.l.b16 %v1227
        %v1419 = vunpack.c.l.b16 %v1228
        %v1420 = vunpack.c.l.b16 %v1229
        %v1421 = vunpack.c.l.b16 %v1230
        %v1422 = vunpack.c.l.b16 %v1231
        %v1423 = vunpack.c.l.b16 %v1232
        %v1424 = vunpack.c.l.b16 %v1233
        %v1425 = vunpack.c.l.b16 %v1234
        %v1426 = vunpack.c.l.b16 %v1235
        %v1427 = vunpack.c.l.b16 %v1236
        %v1428 = vunpack.c.l.b16 %v1237
        %v1429 = vunpack.c.l.b16 %v1238
        %v1430 = vunpack.c.l.b16 %v1239
        %v1431 = vunpack.c.l.b16 %v1240
        %v1432 = vunpack.c.l.b16 %v1241
        %v1433 = vunpack.c.l.b16 %v1242
        %v1434 = vpack.c.b16 %v1419, %v1418
        %v1435 = vpack.c.b16 %v1421, %v1420
        %v1436 = vpack.c.b16 %v1423, %v1422
        %v1437 = vpack.c.b16 %v1425, %v1424
        %v1438 = vpack.c.b16 %v1427, %v1426
        %v1439 = vpack.c.b16 %v1429, %v1428
        %v1440 = vpack.c.b16 %v1431, %v1430
        %v1441 = vpack.c.b16 %v1433, %v1432
        %1450 = vmatprep.subr.bf16.mxu0 0
        %1451 = vmatpush1.bf16.msra.mxu0 %v1434
        %1452 = vmatprep.subr.bf16.mxu0 0
        %1453 = vmatpush1.bf16.msra.mxu0 %v1435
        %1454 = vmatprep.subr.bf16.mxu0 0
        %1455 = vmatpush1.bf16.msra.mxu0 %v1436
        %1456 = vmatprep.subr.bf16.mxu0 0
        %1457 = vmatpush1.bf16.msra.mxu0 %v1437
        %1458 = vmatprep.subr.bf16.mxu0 0
        %1459 = vmatpush1.bf16.msra.mxu0 %v1438
        %1460 = vmatprep.subr.bf16.mxu0 0
        %1461 = vmatpush1.bf16.msra.mxu0 %v1439
        %1462 = vmatprep.subr.bf16.mxu0 0
        %1463 = vmatpush1.bf16.msra.mxu0 %v1440
        %1464 = vmatprep.subr.bf16.mxu0 0
        %1465 = vmatpush1.bf16.msra.mxu0 %v1441
        %1466 = vmatprep.subr.bf16.mxu0 0
        %1467 = vmatpush1.bf16.msra.mxu0 0
        %1468 = vmatprep.subr.bf16.mxu0 0
        %1469 = vmatpush1.bf16.msra.mxu0 0
        %1470 = vmatprep.subr.bf16.mxu0 0
        %1471 = vmatpush1.bf16.msra.mxu0 0
        %1472 = vmatprep.subr.bf16.mxu0 0
        %1473 = vmatpush1.bf16.msra.mxu0 0
        %1474 = vmatprep.subr.bf16.mxu0 0
        %1475 = vmatpush1.bf16.msra.mxu0 0
        %1476 = vmatprep.subr.bf16.mxu0 0
        %1477 = vmatpush1.bf16.msra.mxu0 0
        %1478 = vmatprep.subr.bf16.mxu0 0
        %1479 = vmatpush1.bf16.msra.mxu0 0
        %1480 = vmatprep.subr.bf16.mxu0 0
        %1481 = vmatpush1.bf16.msra.mxu0 0
        %1482 = vmatprep.mubr.bf16.mxu0 0
        %1483 = vmatmul.mubr.bf16.gmra.mrb[0].mxu0 %v1400
        %v1484 = vpop.f32.mrb[0].mxu0
        %v1485 = vadd.f32 %v1381, %v1484
        %v1486 = vpop.f32.mrb[0].mxu0
        %v1487 = vpop.f32.mrb[0].mxu0
        %v1488 = vpop.f32.mrb[0].mxu0
        %1489 = vdwg.mxu0
        %v1498 = vrot.slane %v705, 1
        %v1499 = vrot.slane %v778, 1
        %v1500 = vrot.slane %v851, 1
        %v1501 = vrot.slane %v924, 1
        %v1502 = vrot.slane %v997, 1
        %v1503 = vrot.slane %v1070, 1
        %v1504 = vrot.slane %v1143, 1
        %v1505 = vrot.slane %v1216, 1
        %v1514 = vmul.f32 %v705, %v1498
        %v1515 = vmul.f32 %v778, %v1499
        %v1516 = vmul.f32 %v851, %v1500
        %v1517 = vmul.f32 %v924, %v1501
        %v1518 = vmul.f32 %v997, %v1502
        %v1519 = vmul.f32 %v1070, %v1503
        %v1520 = vmul.f32 %v1143, %v1504
        %v1521 = vmul.f32 %v1216, %v1505
        %v1522 = vpack.c.bf16 %v1514, %v1514
        %v1523 = vpack.c.bf16 %v1515, %v1515
        %v1524 = vpack.c.bf16 %v1516, %v1516
        %v1525 = vpack.c.bf16 %v1517, %v1517
        %v1526 = vpack.c.bf16 %v1518, %v1518
        %v1527 = vpack.c.bf16 %v1519, %v1519
        %v1528 = vpack.c.bf16 %v1520, %v1520
        %v1529 = vpack.c.bf16 %v1521, %v1521
        %v1530 = vld [vmem:[#allocation7 + $0x80] sm:$0xf]
        %v1531 = vld [vmem:[#allocation7 + $0x84] sm:$0xf]
        %v1532 = vld [vmem:[#allocation7 + $0x88] sm:$0xf]
        %v1533 = vld [vmem:[#allocation7 + $0x8c] sm:$0xf]
        %v1534 = vld [vmem:[#allocation7 + $0x90] sm:$0xf]
        %v1535 = vld [vmem:[#allocation7 + $0x94] sm:$0xf]
        %v1536 = vld [vmem:[#allocation7 + $0x98] sm:$0xf]
        %v1537 = vld [vmem:[#allocation7 + $0x9c] sm:$0xf]
        %v1538 = vld [vmem:[#allocation7 + $0xa0] sm:$0xf]
        %v1539 = vld [vmem:[#allocation7 + $0xa4] sm:$0xf]
        %v1540 = vld [vmem:[#allocation7 + $0xa8] sm:$0xf]
        %v1541 = vld [vmem:[#allocation7 + $0xac] sm:$0xf]
        %v1542 = vld [vmem:[#allocation7 + $0xb0] sm:$0xf]
        %v1543 = vld [vmem:[#allocation7 + $0xb4] sm:$0xf]
        %v1544 = vld [vmem:[#allocation7 + $0xb8] sm:$0xf]
        %v1545 = vld [vmem:[#allocation7 + $0xbc] sm:$0xf]
        %v1554 = vunpack.c.l.b16 %v1522
        %v1555 = vunpack.c.l.b16 %v1523
        %v1556 = vunpack.c.l.b16 %v1524
        %v1557 = vunpack.c.l.b16 %v1525
        %v1558 = vunpack.c.l.b16 %v1526
        %v1559 = vunpack.c.l.b16 %v1527
        %v1560 = vunpack.c.l.b16 %v1528
        %v1561 = vunpack.c.l.b16 %v1529
        %v1562 = vrot.slane %v1555, 7
        %v1563 = vsel %vm1276, %v1562, %v1554
        %v1564 = vrot.slane %v1556, 6
        %v1565 = vsel %vm1279, %v1564, %v1563
        %v1566 = vrot.slane %v1557, 5
        %v1567 = vsel %vm1282, %v1566, %v1565
        %v1568 = vrot.slane %v1558, 4
        %v1569 = vsel %vm1285, %v1568, %v1567
        %v1570 = vrot.slane %v1559, 3
        %v1571 = vsel %vm1288, %v1570, %v1569
        %v1572 = vrot.slane %v1560, 2
        %v1573 = vsel %vm1291, %v1572, %v1571
        %v1574 = vrot.slane %v1561, 1
        %v1575 = vsel %vm1294, %v1574, %v1573
        %v1576 = vpack.c.b16 %v1575, %v1575
        %v1594 = vunpack.c.l.b16 %v1530
        %v1595 = vunpack.c.l.b16 %v1531
        %v1596 = vunpack.c.l.b16 %v1532
        %v1597 = vunpack.c.l.b16 %v1533
        %v1598 = vunpack.c.l.b16 %v1534
        %v1599 = vunpack.c.l.b16 %v1535
        %v1600 = vunpack.c.l.b16 %v1536
        %v1601 = vunpack.c.l.b16 %v1537
        %v1602 = vunpack.c.l.b16 %v1538
        %v1603 = vunpack.c.l.b16 %v1539
        %v1604 = vunpack.c.l.b16 %v1540
        %v1605 = vunpack.c.l.b16 %v1541
        %v1606 = vunpack.c.l.b16 %v1542
        %v1607 = vunpack.c.l.b16 %v1543
        %v1608 = vunpack.c.l.b16 %v1544
        %v1609 = vunpack.c.l.b16 %v1545
        %v1610 = vpack.c.b16 %v1595, %v1594
        %v1611 = vpack.c.b16 %v1597, %v1596
        %v1612 = vpack.c.b16 %v1599, %v1598
        %v1613 = vpack.c.b16 %v1601, %v1600
        %v1614 = vpack.c.b16 %v1603, %v1602
        %v1615 = vpack.c.b16 %v1605, %v1604
        %v1616 = vpack.c.b16 %v1607, %v1606
        %v1617 = vpack.c.b16 %v1609, %v1608
        %1626 = vmatprep.subr.bf16.mxu0 0
        %1627 = vmatpush1.bf16.msra.mxu0 %v1610
        %1628 = vmatprep.subr.bf16.mxu0 0
        %1629 = vmatpush1.bf16.msra.mxu0 %v1611
        %1630 = vmatprep.subr.bf16.mxu0 0
        %1631 = vmatpush1.bf16.msra.mxu0 %v1612
        %1632 = vmatprep.subr.bf16.mxu0 0
        %1633 = vmatpush1.bf16.msra.mxu0 %v1613
        %1634 = vmatprep.subr.bf16.mxu0 0
        %1635 = vmatpush1.bf16.msra.mxu0 %v1614
        %1636 = vmatprep.subr.bf16.mxu0 0
        %1637 = vmatpush1.bf16.msra.mxu0 %v1615
        %1638 = vmatprep.subr.bf16.mxu0 0
        %1639 = vmatpush1.bf16.msra.mxu0 %v1616
        %1640 = vmatprep.subr.bf16.mxu0 0
        %1641 = vmatpush1.bf16.msra.mxu0 %v1617
        %1642 = vmatprep.subr.bf16.mxu0 0
        %1643 = vmatpush1.bf16.msra.mxu0 0
        %1644 = vmatprep.subr.bf16.mxu0 0
        %1645 = vmatpush1.bf16.msra.mxu0 0
        %1646 = vmatprep.subr.bf16.mxu0 0
        %1647 = vmatpush1.bf16.msra.mxu0 0
        %1648 = vmatprep.subr.bf16.mxu0 0
        %1649 = vmatpush1.bf16.msra.mxu0 0
        %1650 = vmatprep.subr.bf16.mxu0 0
        %1651 = vmatpush1.bf16.msra.mxu0 0
        %1652 = vmatprep.subr.bf16.mxu0 0
        %1653 = vmatpush1.bf16.msra.mxu0 0
        %1654 = vmatprep.subr.bf16.mxu0 0
        %1655 = vmatpush1.bf16.msra.mxu0 0
        %1656 = vmatprep.subr.bf16.mxu0 0
        %1657 = vmatpush1.bf16.msra.mxu0 0
        %1658 = vmatprep.mubr.bf16.mxu0 0
        %1659 = vmatmul.mubr.bf16.gmra.mrb[0].mxu0 %v1576
        %v1660 = vpop.f32.mrb[0].mxu0
        %v1661 = vadd.f32 0.0, %v1660
        %v1662 = vpop.f32.mrb[0].mxu0
        %v1663 = vpop.f32.mrb[0].mxu0
        %v1664 = vpop.f32.mrb[0].mxu0
        %1665 = vdwg.mxu0
        %v1666 = vadd.f32 %v1485, %v1661
        %v1667 = vld [vmem:[%s3] sm:$0x1]
        %v1669 = vlaneseq
        %v1670 = vshrl.u32 %v1669, 7
        %v1671 = vsub.s32 0, %v1670
        %v1672 = vrot.slane %v1667, %v1671
        %v1674 = vadd.f32 %v1666, %v1672
        %v1675 = vtanh.pop %v1674
        %v1676 = vrot.slane %v1267, 3
        %v1677 = vrot.slane %v1268, 2
        %v1678 = vsel %vm1276, %v1677, %v1676
        %v1679 = vrot.slane %v1269, 1
        %v1680 = vsel %vm1279, %v1679, %v1678
        %v1681 = vsel %vm1282, %v1270, %v1680
        %v1682 = vrot.slane %v1271, 7
        %v1683 = vsel %vm1285, %v1682, %v1681
        %v1684 = vrot.slane %v1272, 6
        %v1685 = vsel %vm1288, %v1684, %v1683
        %v1686 = vrot.slane %v1273, 5
        %v1687 = vsel %vm1291, %v1686, %v1685
        %v1688 = vrot.slane %v1274, 4
        %v1689 = vsel %vm1294, %v1688, %v1687
        %v1690 = vpack.c.b16 %v1689, %v1689
        %1692 = vmatprep.subr.bf16.mxu0 0
        %1693 = vmatpush1.bf16.msra.mxu0 %v1330
        %1694 = vmatprep.subr.bf16.mxu0 0
        %1695 = vmatpush1.bf16.msra.mxu0 %v1331
        %1696 = vmatprep.subr.bf16.mxu0 0
        %1697 = vmatpush1.bf16.msra.mxu0 %v1332
        %1698 = vmatprep.subr.bf16.mxu0 0
        %1699 = vmatpush1.bf16.msra.mxu0 %v1333
        %1700 = vmatprep.subr.bf16.mxu0 0
        %1701 = vmatpush1.bf16.msra.mxu0 %v1334
        %1702 = vmatprep.subr.bf16.mxu0 0
        %1703 = vmatpush1.bf16.msra.mxu0 %v1335
        %1704 = vmatprep.subr.bf16.mxu0 0
        %1705 = vmatpush1.bf16.msra.mxu0 %v1336
        %1706 = vmatprep.subr.bf16.mxu0 0
        %1707 = vmatpush1.bf16.msra.mxu0 %v1337
        %1708 = vmatprep.subr.bf16.mxu0 0
        %1709 = vmatpush1.bf16.msra.mxu0 0
        %1710 = vmatprep.subr.bf16.mxu0 0
        %1711 = vmatpush1.bf16.msra.mxu0 0
        %1712 = vmatprep.subr.bf16.mxu0 0
        %1713 = vmatpush1.bf16.msra.mxu0 0
        %1714 = vmatprep.subr.bf16.mxu0 0
        %1715 = vmatpush1.bf16.msra.mxu0 0
        %1716 = vmatprep.subr.bf16.mxu0 0
        %1717 = vmatpush1.bf16.msra.mxu0 0
        %1718 = vmatprep.subr.bf16.mxu0 0
        %1719 = vmatpush1.bf16.msra.mxu0 0
        %1720 = vmatprep.subr.bf16.mxu0 0
        %1721 = vmatpush1.bf16.msra.mxu0 0
        %1722 = vmatprep.subr.bf16.mxu0 0
        %1723 = vmatpush1.bf16.msra.mxu0 0
        %1724 = vmatprep.mubr.bf16.mxu0 0
        %1725 = vmatmul.mubr.bf16.gmra.mrb[0].mxu0 %v1690
        %v1726 = vpop.f32.mrb[0].mxu0
        %v1727 = vadd.f32 0.0, %v1726
        %v1728 = vpop.f32.mrb[0].mxu0
        %v1729 = vpop.f32.mrb[0].mxu0
        %v1730 = vpop.f32.mrb[0].mxu0
        %1731 = vdwg.mxu0
        %v1732 = vrot.slane %v1267, 2
        %v1733 = vrot.slane %v1268, 1
        %v1734 = vsel %vm1276, %v1733, %v1732
        %v1735 = vsel %vm1279, %v1269, %v1734
        %v1736 = vrot.slane %v1270, 7
        %v1737 = vsel %vm1282, %v1736, %v1735
        %v1738 = vrot.slane %v1271, 6
        %v1739 = vsel %vm1285, %v1738, %v1737
        %v1740 = vrot.slane %v1272, 5
        %v1741 = vsel %vm1288, %v1740, %v1739
        %v1742 = vrot.slane %v1273, 4
        %v1743 = vsel %vm1291, %v1742, %v1741
        %v1744 = vrot.slane %v1274, 3
        %v1745 = vsel %vm1294, %v1744, %v1743
        %v1746 = vpack.c.b16 %v1745, %v1745
        %1748 = vmatprep.subr.bf16.mxu0 0
        %1749 = vmatpush1.bf16.msra.mxu0 %v1434
        %1750 = vmatprep.subr.bf16.mxu0 0
        %1751 = vmatpush1.bf16.msra.mxu0 %v1435
        %1752 = vmatprep.subr.bf16.mxu0 0
        %1753 = vmatpush1.bf16.msra.mxu0 %v1436
        %1754 = vmatprep.subr.bf16.mxu0 0
        %1755 = vmatpush1.bf16.msra.mxu0 %v1437
        %1756 = vmatprep.subr.bf16.mxu0 0
        %1757 = vmatpush1.bf16.msra.mxu0 %v1438
        %1758 = vmatprep.subr.bf16.mxu0 0
        %1759 = vmatpush1.bf16.msra.mxu0 %v1439
        %1760 = vmatprep.subr.bf16.mxu0 0
        %1761 = vmatpush1.bf16.msra.mxu0 %v1440
        %1762 = vmatprep.subr.bf16.mxu0 0
        %1763 = vmatpush1.bf16.msra.mxu0 %v1441
        %1764 = vmatprep.subr.bf16.mxu0 0
        %1765 = vmatpush1.bf16.msra.mxu0 0
        %1766 = vmatprep.subr.bf16.mxu0 0
        %1767 = vmatpush1.bf16.msra.mxu0 0
        %1768 = vmatprep.subr.bf16.mxu0 0
        %1769 = vmatpush1.bf16.msra.mxu0 0
        %1770 = vmatprep.subr.bf16.mxu0 0
        %1771 = vmatpush1.bf16.msra.mxu0 0
        %1772 = vmatprep.subr.bf16.mxu0 0
        %1773 = vmatpush1.bf16.msra.mxu0 0
        %1774 = vmatprep.subr.bf16.mxu0 0
        %1775 = vmatpush1.bf16.msra.mxu0 0
        %1776 = vmatprep.subr.bf16.mxu0 0
        %1777 = vmatpush1.bf16.msra.mxu0 0
        %1778 = vmatprep.subr.bf16.mxu0 0
        %1779 = vmatpush1.bf16.msra.mxu0 0
        %1780 = vmatprep.mubr.bf16.mxu0 0
        %1781 = vmatmul.mubr.bf16.gmra.mrb[0].mxu0 %v1746
        %v1782 = vpop.f32.mrb[0].mxu0
        %v1783 = vadd.f32 %v1727, %v1782
        %v1784 = vpop.f32.mrb[0].mxu0
        %v1785 = vpop.f32.mrb[0].mxu0
        %v1786 = vpop.f32.mrb[0].mxu0
        %1787 = vdwg.mxu0
        %v1788 = vrot.slane %v1554, 2
        %v1789 = vrot.slane %v1555, 1
        %v1790 = vsel %vm1276, %v1789, %v1788
        %v1791 = vsel %vm1279, %v1556, %v1790
        %v1792 = vrot.slane %v1557, 7
        %v1793 = vsel %vm1282, %v1792, %v1791
        %v1794 = vrot.slane %v1558, 6
        %v1795 = vsel %vm1285, %v1794, %v1793
        %v1796 = vrot.slane %v1559, 5
        %v1797 = vsel %vm1288, %v1796, %v1795
        %v1798 = vrot.slane %v1560, 4
        %v1799 = vsel %vm1291, %v1798, %v1797
        %v1800 = vrot.slane %v1561, 3
        %v1801 = vsel %vm1294, %v1800, %v1799
        %v1802 = vpack.c.b16 %v1801, %v1801
        %1804 = vmatprep.subr.bf16.mxu0 0
        %1805 = vmatpush1.bf16.msra.mxu0 %v1610
        %1806 = vmatprep.subr.bf16.mxu0 0
        %1807 = vmatpush1.bf16.msra.mxu0 %v1611
        %1808 = vmatprep.subr.bf16.mxu0 0
        %1809 = vmatpush1.bf16.msra.mxu0 %v1612
        %1810 = vmatprep.subr.bf16.mxu0 0
        %1811 = vmatpush1.bf16.msra.mxu0 %v1613
        %1812 = vmatprep.subr.bf16.mxu0 0
        %1813 = vmatpush1.bf16.msra.mxu0 %v1614
        %1814 = vmatprep.subr.bf16.mxu0 0
        %1815 = vmatpush1.bf16.msra.mxu0 %v1615
        %1816 = vmatprep.subr.bf16.mxu0 0
        %1817 = vmatpush1.bf16.msra.mxu0 %v1616
        %1818 = vmatprep.subr.bf16.mxu0 0
        %1819 = vmatpush1.bf16.msra.mxu0 %v1617
        %1820 = vmatprep.subr.bf16.mxu0 0
        %1821 = vmatpush1.bf16.msra.mxu0 0
        %1822 = vmatprep.subr.bf16.mxu0 0
        %1823 = vmatpush1.bf16.msra.mxu0 0
        %1824 = vmatprep.subr.bf16.mxu0 0
        %1825 = vmatpush1.bf16.msra.mxu0 0
        %1826 = vmatprep.subr.bf16.mxu0 0
        %1827 = vmatpush1.bf16.msra.mxu0 0
        %1828 = vmatprep.subr.bf16.mxu0 0
        %1829 = vmatpush1.bf16.msra.mxu0 0
        %1830 = vmatprep.subr.bf16.mxu0 0
        %1831 = vmatpush1.bf16.msra.mxu0 0
        %1832 = vmatprep.subr.bf16.mxu0 0
        %1833 = vmatpush1.bf16.msra.mxu0 0
        %1834 = vmatprep.subr.bf16.mxu0 0
        %1835 = vmatpush1.bf16.msra.mxu0 0
        %1836 = vmatprep.mubr.bf16.mxu0 0
        %1837 = vmatmul.mubr.bf16.gmra.mrb[0].mxu0 %v1802
        %v1838 = vpop.f32.mrb[0].mxu0
        %v1839 = vadd.f32 0.0, %v1838
        %v1840 = vpop.f32.mrb[0].mxu0
        %v1841 = vpop.f32.mrb[0].mxu0
        %v1842 = vpop.f32.mrb[0].mxu0
        %1843 = vdwg.mxu0
        %v1844 = vadd.f32 %v1783, %v1839
        %v1845 = vadd.f32 %v1844, %v1672
        %v1846 = vtanh.pop %v1845
        %v1847 = vpack.c.bf16 %v1675, %v1675
        %v1848 = vld [vmem:[#allocation8] sm:$0xf]
        %v1849 = vld [vmem:[#allocation8 + $0x4] sm:$0xf]
        %v1850 = vld [vmem:[#allocation8 + $0x8] sm:$0xf]
        %v1851 = vld [vmem:[#allocation8 + $0xc] sm:$0xf]
        %v1852 = vld [vmem:[#allocation8 + $0x10] sm:$0xf]
        %v1853 = vld [vmem:[#allocation8 + $0x14] sm:$0xf]
        %v1854 = vld [vmem:[#allocation8 + $0x18] sm:$0xf]
        %v1855 = vld [vmem:[#allocation8 + $0x1c] sm:$0xf]
        %v1856 = vld [vmem:[#allocation8 + $0x20] sm:$0xf]
        %v1857 = vld [vmem:[#allocation8 + $0x24] sm:$0xf]
        %v1858 = vld [vmem:[#allocation8 + $0x28] sm:$0xf]
        %v1859 = vld [vmem:[#allocation8 + $0x2c] sm:$0xf]
        %v1860 = vld [vmem:[#allocation8 + $0x30] sm:$0xf]
        %v1861 = vld [vmem:[#allocation8 + $0x34] sm:$0xf]
        %v1862 = vld [vmem:[#allocation8 + $0x38] sm:$0xf]
        %v1863 = vld [vmem:[#allocation8 + $0x3c] sm:$0xf]
        %v1864 = vpack.c.bf16 %v1846, %v1846
        %v1865 = vld [vmem:[#allocation8 + $0x40] sm:$0xf]
        %v1866 = vld [vmem:[#allocation8 + $0x44] sm:$0xf]
        %v1867 = vld [vmem:[#allocation8 + $0x48] sm:$0xf]
        %v1868 = vld [vmem:[#allocation8 + $0x4c] sm:$0xf]
        %v1869 = vld [vmem:[#allocation8 + $0x50] sm:$0xf]
        %v1870 = vld [vmem:[#allocation8 + $0x54] sm:$0xf]
        %v1871 = vld [vmem:[#allocation8 + $0x58] sm:$0xf]
        %v1872 = vld [vmem:[#allocation8 + $0x5c] sm:$0xf]
        %v1873 = vld [vmem:[#allocation8 + $0x60] sm:$0xf]
        %v1874 = vld [vmem:[#allocation8 + $0x64] sm:$0xf]
        %v1875 = vld [vmem:[#allocation8 + $0x68] sm:$0xf]
        %v1876 = vld [vmem:[#allocation8 + $0x6c] sm:$0xf]
        %v1877 = vld [vmem:[#allocation8 + $0x70] sm:$0xf]
        %v1878 = vld [vmem:[#allocation8 + $0x74] sm:$0xf]
        %v1879 = vld [vmem:[#allocation8 + $0x78] sm:$0xf]
        %v1880 = vld [vmem:[#allocation8 + $0x7c] sm:$0xf]
        %v1897 = vunpack.c.l.b16 %v1865
        %v1898 = vunpack.c.l.b16 %v1866
        %v1899 = vunpack.c.l.b16 %v1867
        %v1900 = vunpack.c.l.b16 %v1868
        %v1901 = vunpack.c.l.b16 %v1869
        %v1902 = vunpack.c.l.b16 %v1870
        %v1903 = vunpack.c.l.b16 %v1871
        %v1904 = vunpack.c.l.b16 %v1872
        %v1905 = vunpack.c.l.b16 %v1873
        %v1906 = vunpack.c.l.b16 %v1874
        %v1907 = vunpack.c.l.b16 %v1875
        %v1908 = vunpack.c.l.b16 %v1876
        %v1909 = vunpack.c.l.b16 %v1877
        %v1910 = vunpack.c.l.b16 %v1878
        %v1911 = vunpack.c.l.b16 %v1879
        %v1912 = vunpack.c.l.b16 %v1880
        %v1913 = vpack.c.b16 %v1898, %v1897
        %v1914 = vpack.c.b16 %v1900, %v1899
        %v1915 = vpack.c.b16 %v1902, %v1901
        %v1916 = vpack.c.b16 %v1904, %v1903
        %v1917 = vpack.c.b16 %v1906, %v1905
        %v1918 = vpack.c.b16 %v1908, %v1907
        %v1919 = vpack.c.b16 %v1910, %v1909
        %v1920 = vpack.c.b16 %v1912, %v1911
        %1929 = vmatprep.subr.bf16.mxu0 0
        %1930 = vmatpush1.bf16.msra.mxu0 %v1913
        %1931 = vmatprep.subr.bf16.mxu0 0
        %1932 = vmatpush1.bf16.msra.mxu0 %v1914
        %1933 = vmatprep.subr.bf16.mxu0 0
        %1934 = vmatpush1.bf16.msra.mxu0 %v1915
        %1935 = vmatprep.subr.bf16.mxu0 0
        %1936 = vmatpush1.bf16.msra.mxu0 %v1916
        %1937 = vmatprep.subr.bf16.mxu0 0
        %1938 = vmatpush1.bf16.msra.mxu0 %v1917
        %1939 = vmatprep.subr.bf16.mxu0 0
        %1940 = vmatpush1.bf16.msra.mxu0 %v1918
        %1941 = vmatprep.subr.bf16.mxu0 0
        %1942 = vmatpush1.bf16.msra.mxu0 %v1919
        %1943 = vmatprep.subr.bf16.mxu0 0
        %1944 = vmatpush1.bf16.msra.mxu0 %v1920
        %1945 = vmatprep.subr.bf16.mxu0 0
        %1946 = vmatpush1.bf16.msra.mxu0 0
        %1947 = vmatprep.subr.bf16.mxu0 0
        %1948 = vmatpush1.bf16.msra.mxu0 0
        %1949 = vmatprep.subr.bf16.mxu0 0
        %1950 = vmatpush1.bf16.msra.mxu0 0
        %1951 = vmatprep.subr.bf16.mxu0 0
        %1952 = vmatpush1.bf16.msra.mxu0 0
        %1953 = vmatprep.subr.bf16.mxu0 0
        %1954 = vmatpush1.bf16.msra.mxu0 0
        %1955 = vmatprep.subr.bf16.mxu0 0
        %1956 = vmatpush1.bf16.msra.mxu0 0
        %1957 = vmatprep.subr.bf16.mxu0 0
        %1958 = vmatpush1.bf16.msra.mxu0 0
        %1959 = vmatprep.subr.bf16.mxu0 0
        %1960 = vmatpush1.bf16.msra.mxu0 0
        %1961 = vmatprep.mubr.bf16.mxu0 0
        %1962 = vmatmul.mubr.bf16.gmra.mrb[0].mxu0 %v1864
        %v1963 = vpop.f32.mrb[0].mxu0
        %v1964 = vadd.f32 0.0, %v1963
        %v1965 = vpop.f32.mrb[0].mxu0
        %v1966 = vpop.f32.mrb[0].mxu0
        %v1967 = vpop.f32.mrb[0].mxu0
        %1968 = vdwg.mxu0
        %v1985 = vunpack.c.l.b16 %v1848
        %v1986 = vunpack.c.l.b16 %v1849
        %v1987 = vunpack.c.l.b16 %v1850
        %v1988 = vunpack.c.l.b16 %v1851
        %v1989 = vunpack.c.l.b16 %v1852
        %v1990 = vunpack.c.l.b16 %v1853
        %v1991 = vunpack.c.l.b16 %v1854
        %v1992 = vunpack.c.l.b16 %v1855
        %v1993 = vunpack.c.l.b16 %v1856
        %v1994 = vunpack.c.l.b16 %v1857
        %v1995 = vunpack.c.l.b16 %v1858
        %v1996 = vunpack.c.l.b16 %v1859
        %v1997 = vunpack.c.l.b16 %v1860
        %v1998 = vunpack.c.l.b16 %v1861
        %v1999 = vunpack.c.l.b16 %v1862
        %v2000 = vunpack.c.l.b16 %v1863
        %v2001 = vpack.c.b16 %v1986, %v1985
        %v2002 = vpack.c.b16 %v1988, %v1987
        %v2003 = vpack.c.b16 %v1990, %v1989
        %v2004 = vpack.c.b16 %v1992, %v1991
        %v2005 = vpack.c.b16 %v1994, %v1993
        %v2006 = vpack.c.b16 %v1996, %v1995
        %v2007 = vpack.c.b16 %v1998, %v1997
        %v2008 = vpack.c.b16 %v2000, %v1999
        %2017 = vmatprep.subr.bf16.mxu0 0
        %2018 = vmatpush1.bf16.msra.mxu0 %v2001
        %2019 = vmatprep.subr.bf16.mxu0 0
        %2020 = vmatpush1.bf16.msra.mxu0 %v2002
        %2021 = vmatprep.subr.bf16.mxu0 0
        %2022 = vmatpush1.bf16.msra.mxu0 %v2003
        %2023 = vmatprep.subr.bf16.mxu0 0
        %2024 = vmatpush1.bf16.msra.mxu0 %v2004
        %2025 = vmatprep.subr.bf16.mxu0 0
        %2026 = vmatpush1.bf16.msra.mxu0 %v2005
        %2027 = vmatprep.subr.bf16.mxu0 0
        %2028 = vmatpush1.bf16.msra.mxu0 %v2006
        %2029 = vmatprep.subr.bf16.mxu0 0
        %2030 = vmatpush1.bf16.msra.mxu0 %v2007
        %2031 = vmatprep.subr.bf16.mxu0 0
        %2032 = vmatpush1.bf16.msra.mxu0 %v2008
        %2033 = vmatprep.subr.bf16.mxu0 0
        %2034 = vmatpush1.bf16.msra.mxu0 0
        %2035 = vmatprep.subr.bf16.mxu0 0
        %2036 = vmatpush1.bf16.msra.mxu0 0
        %2037 = vmatprep.subr.bf16.mxu0 0
        %2038 = vmatpush1.bf16.msra.mxu0 0
        %2039 = vmatprep.subr.bf16.mxu0 0
        %2040 = vmatpush1.bf16.msra.mxu0 0
        %2041 = vmatprep.subr.bf16.mxu0 0
        %2042 = vmatpush1.bf16.msra.mxu0 0
        %2043 = vmatprep.subr.bf16.mxu0 0
        %2044 = vmatpush1.bf16.msra.mxu0 0
        %2045 = vmatprep.subr.bf16.mxu0 0
        %2046 = vmatpush1.bf16.msra.mxu0 0
        %2047 = vmatprep.subr.bf16.mxu0 0
        %2048 = vmatpush1.bf16.msra.mxu0 0
        %2049 = vmatprep.mubr.bf16.mxu0 0
        %2050 = vmatmul.mubr.bf16.gmra.mrb[0].mxu0 %v1847
        %v2051 = vpop.f32.mrb[0].mxu0
        %v2052 = vadd.f32 %v1964, %v2051
        %v2053 = vpop.f32.mrb[0].mxu0
        %v2054 = vpop.f32.mrb[0].mxu0
        %v2055 = vpop.f32.mrb[0].mxu0
        %2056 = vdwg.mxu0
        %v2057 = vld [vmem:[%s5] sm:$0x1]
        %v2059 = vlaneseq
        %v2060 = vshrl.u32 %v2059, 7
        %v2061 = vsub.s32 0, %v2060
        %v2062 = vrot.slane %v2057, %v2061
        %v2064 = vadd.f32 %v2052, %v2062
        %v2065 = vtanh.pop %v2064
        %v2066 = vpack.c.bf16 %v2065, %v2065
        %v2067 = vld [vmem:[#allocation10] sm:$0xf]
        %v2068 = vld [vmem:[#allocation10 + $0x4] sm:$0xf]
        %v2069 = vld [vmem:[#allocation10 + $0x8] sm:$0xf]
        %v2070 = vld [vmem:[#allocation10 + $0xc] sm:$0xf]
        %v2071 = vld [vmem:[#allocation10 + $0x10] sm:$0xf]
        %v2072 = vld [vmem:[#allocation10 + $0x14] sm:$0xf]
        %v2073 = vld [vmem:[#allocation10 + $0x18] sm:$0xf]
        %v2074 = vld [vmem:[#allocation10 + $0x1c] sm:$0xf]
        %v2075 = vld [vmem:[#allocation10 + $0x20] sm:$0xf]
        %v2076 = vld [vmem:[#allocation10 + $0x24] sm:$0xf]
        %v2077 = vld [vmem:[#allocation10 + $0x28] sm:$0xf]
        %v2078 = vld [vmem:[#allocation10 + $0x2c] sm:$0xf]
        %v2079 = vld [vmem:[#allocation10 + $0x30] sm:$0xf]
        %v2080 = vld [vmem:[#allocation10 + $0x34] sm:$0xf]
        %v2081 = vld [vmem:[#allocation10 + $0x38] sm:$0xf]
        %v2082 = vld [vmem:[#allocation10 + $0x3c] sm:$0xf]
        %v2083 = vld [vmem:[%s7] sm:$0x1]
        %v2085 = vlaneseq
        %v2086 = vshrl.u32 %v2085, 7
        %v2087 = vsub.s32 0, %v2086
        %v2088 = vrot.slane %v2083, %v2087
        %v2106 = vunpack.c.l.b16 %v2067
        %v2107 = vunpack.c.l.b16 %v2068
        %v2108 = vunpack.c.l.b16 %v2069
        %v2109 = vunpack.c.l.b16 %v2070
        %v2110 = vunpack.c.l.b16 %v2071
        %v2111 = vunpack.c.l.b16 %v2072
        %v2112 = vunpack.c.l.b16 %v2073
        %v2113 = vunpack.c.l.b16 %v2074
        %v2114 = vunpack.c.l.b16 %v2075
        %v2115 = vunpack.c.l.b16 %v2076
        %v2116 = vunpack.c.l.b16 %v2077
        %v2117 = vunpack.c.l.b16 %v2078
        %v2118 = vunpack.c.l.b16 %v2079
        %v2119 = vunpack.c.l.b16 %v2080
        %v2120 = vunpack.c.l.b16 %v2081
        %v2121 = vunpack.c.l.b16 %v2082
        %v2122 = vpack.c.b16 %v2107, %v2106
        %v2123 = vpack.c.b16 %v2109, %v2108
        %v2124 = vpack.c.b16 %v2111, %v2110
        %v2125 = vpack.c.b16 %v2113, %v2112
        %v2126 = vpack.c.b16 %v2115, %v2114
        %v2127 = vpack.c.b16 %v2117, %v2116
        %v2128 = vpack.c.b16 %v2119, %v2118
        %v2129 = vpack.c.b16 %v2121, %v2120
        %2138 = vmatprep.subr.bf16.mxu0 0
        %2139 = vmatpush1.bf16.msra.mxu0 %v2122
        %2140 = vmatprep.subr.bf16.mxu0 0
        %2141 = vmatpush1.bf16.msra.mxu0 %v2123
        %2142 = vmatprep.subr.bf16.mxu0 0
        %2143 = vmatpush1.bf16.msra.mxu0 %v2124
        %2144 = vmatprep.subr.bf16.mxu0 0
        %2145 = vmatpush1.bf16.msra.mxu0 %v2125
        %2146 = vmatprep.subr.bf16.mxu0 0
        %2147 = vmatpush1.bf16.msra.mxu0 %v2126
        %2148 = vmatprep.subr.bf16.mxu0 0
        %2149 = vmatpush1.bf16.msra.mxu0 %v2127
        %2150 = vmatprep.subr.bf16.mxu0 0
        %2151 = vmatpush1.bf16.msra.mxu0 %v2128
        %2152 = vmatprep.subr.bf16.mxu0 0
        %2153 = vmatpush1.bf16.msra.mxu0 %v2129
        %2154 = vmatprep.subr.bf16.mxu0 0
        %2155 = vmatpush1.bf16.msra.mxu0 0
        %2156 = vmatprep.subr.bf16.mxu0 0
        %2157 = vmatpush1.bf16.msra.mxu0 0
        %2158 = vmatprep.subr.bf16.mxu0 0
        %2159 = vmatpush1.bf16.msra.mxu0 0
        %2160 = vmatprep.subr.bf16.mxu0 0
        %2161 = vmatpush1.bf16.msra.mxu0 0
        %2162 = vmatprep.subr.bf16.mxu0 0
        %2163 = vmatpush1.bf16.msra.mxu0 0
        %2164 = vmatprep.subr.bf16.mxu0 0
        %2165 = vmatpush1.bf16.msra.mxu0 0
        %2166 = vmatprep.subr.bf16.mxu0 0
        %2167 = vmatpush1.bf16.msra.mxu0 0
        %2168 = vmatprep.subr.bf16.mxu0 0
        %2169 = vmatpush1.bf16.msra.mxu0 0
        %2170 = vmatprep.mubr.bf16.mxu0 0
        %2171 = vmatmul.mubr.bf16.gmra.mrb[0].mxu0 %v2066
        %v2172 = vpop.f32.mrb[0].mxu0
        %v2173 = vadd.f32 %v2088, %v2172
        %v2174 = vpop.f32.mrb[0].mxu0
        %v2175 = vpop.f32.mrb[0].mxu0
        %v2176 = vpop.f32.mrb[0].mxu0
        %2177 = vdwg.mxu0
        %v2178 = vtanh.pop %v2173
        %v2179 = vpack.c.bf16 %v2178, %v2178
        %v2180 = vld [vmem:[#allocation11] sm:$0xf]
        %v2181 = vld [vmem:[#allocation11 + $0x4] sm:$0xf]
        %v2182 = vld [vmem:[#allocation11 + $0x8] sm:$0xf]
        %v2183 = vld [vmem:[#allocation11 + $0xc] sm:$0xf]
        %v2184 = vld [vmem:[#allocation11 + $0x10] sm:$0xf]
        %v2185 = vld [vmem:[#allocation11 + $0x14] sm:$0xf]
        %v2186 = vld [vmem:[#allocation11 + $0x18] sm:$0xf]
        %v2187 = vld [vmem:[#allocation11 + $0x1c] sm:$0xf]
        %v2188 = vld [vmem:[#allocation11 + $0x20] sm:$0xf]
        %v2189 = vld [vmem:[#allocation11 + $0x24] sm:$0xf]
        %v2190 = vld [vmem:[#allocation11 + $0x28] sm:$0xf]
        %v2191 = vld [vmem:[#allocation11 + $0x2c] sm:$0xf]
        %v2192 = vld [vmem:[#allocation11 + $0x30] sm:$0xf]
        %v2193 = vld [vmem:[#allocation11 + $0x34] sm:$0xf]
        %v2194 = vld [vmem:[#allocation11 + $0x38] sm:$0xf]
        %v2195 = vld [vmem:[#allocation11 + $0x3c] sm:$0xf]
        %v2196 = vld [vmem:[%s9] sm:$0x1]
        %v2198 = vlaneseq
        %v2199 = vshrl.u32 %v2198, 7
        %v2200 = vsub.s32 0, %v2199
        %v2201 = vrot.slane %v2196, %v2200
        %v2219 = vunpack.c.l.b16 %v2180
        %v2220 = vunpack.c.l.b16 %v2181
        %v2221 = vunpack.c.l.b16 %v2182
        %v2222 = vunpack.c.l.b16 %v2183
        %v2223 = vunpack.c.l.b16 %v2184
        %v2224 = vunpack.c.l.b16 %v2185
        %v2225 = vunpack.c.l.b16 %v2186
        %v2226 = vunpack.c.l.b16 %v2187
        %v2227 = vunpack.c.l.b16 %v2188
        %v2228 = vunpack.c.l.b16 %v2189
        %v2229 = vunpack.c.l.b16 %v2190
        %v2230 = vunpack.c.l.b16 %v2191
        %v2231 = vunpack.c.l.b16 %v2192
        %v2232 = vunpack.c.l.b16 %v2193
        %v2233 = vunpack.c.l.b16 %v2194
        %v2234 = vunpack.c.l.b16 %v2195
        %v2235 = vpack.c.b16 %v2220, %v2219
        %v2236 = vpack.c.b16 %v2222, %v2221
        %v2237 = vpack.c.b16 %v2224, %v2223
        %v2238 = vpack.c.b16 %v2226, %v2225
        %v2239 = vpack.c.b16 %v2228, %v2227
        %v2240 = vpack.c.b16 %v2230, %v2229
        %v2241 = vpack.c.b16 %v2232, %v2231
        %v2242 = vpack.c.b16 %v2234, %v2233
        %2251 = vmatprep.subr.bf16.mxu0 0
        %2252 = vmatpush1.bf16.msra.mxu0 %v2235
        %2253 = vmatprep.subr.bf16.mxu0 0
        %2254 = vmatpush1.bf16.msra.mxu0 %v2236
        %2255 = vmatprep.subr.bf16.mxu0 0
        %2256 = vmatpush1.bf16.msra.mxu0 %v2237
        %2257 = vmatprep.subr.bf16.mxu0 0
        %2258 = vmatpush1.bf16.msra.mxu0 %v2238
        %2259 = vmatprep.subr.bf16.mxu0 0
        %2260 = vmatpush1.bf16.msra.mxu0 %v2239
        %2261 = vmatprep.subr.bf16.mxu0 0
        %2262 = vmatpush1.bf16.msra.mxu0 %v2240
        %2263 = vmatprep.subr.bf16.mxu0 0
        %2264 = vmatpush1.bf16.msra.mxu0 %v2241
        %2265 = vmatprep.subr.bf16.mxu0 0
        %2266 = vmatpush1.bf16.msra.mxu0 %v2242
        %2267 = vmatprep.subr.bf16.mxu0 0
        %2268 = vmatpush1.bf16.msra.mxu0 0
        %2269 = vmatprep.subr.bf16.mxu0 0
        %2270 = vmatpush1.bf16.msra.mxu0 0
        %2271 = vmatprep.subr.bf16.mxu0 0
        %2272 = vmatpush1.bf16.msra.mxu0 0
        %2273 = vmatprep.subr.bf16.mxu0 0
        %2274 = vmatpush1.bf16.msra.mxu0 0
        %2275 = vmatprep.subr.bf16.mxu0 0
        %2276 = vmatpush1.bf16.msra.mxu0 0
        %2277 = vmatprep.subr.bf16.mxu0 0
        %2278 = vmatpush1.bf16.msra.mxu0 0
        %2279 = vmatprep.subr.bf16.mxu0 0
        %2280 = vmatpush1.bf16.msra.mxu0 0
        %2281 = vmatprep.subr.bf16.mxu0 0
        %2282 = vmatpush1.bf16.msra.mxu0 0
        %2283 = vmatprep.mubr.bf16.mxu0 0
        %2284 = vmatmul.mubr.bf16.gmra.mrb[0].mxu0 %v2179
        %v2285 = vpop.f32.mrb[0].mxu0
        %v2286 = vadd.f32 %v2201, %v2285
        %v2287 = vpop.f32.mrb[0].mxu0
        %v2288 = vpop.f32.mrb[0].mxu0
        %v2289 = vpop.f32.mrb[0].mxu0
        %2290 = vdwg.mxu0
        %v2291 = vtanh.pop %v2286
        %v2292 = vpack.c.bf16 %v2291, %v2291
        %v2293 = vld [vmem:[#allocation13] sm:$0xf]
        %v2294 = vld [vmem:[#allocation13 + $0x4] sm:$0xf]
        %v2295 = vld [vmem:[#allocation13 + $0x8] sm:$0xf]
        %v2296 = vld [vmem:[#allocation13 + $0xc] sm:$0xf]
        %v2297 = vld [vmem:[#allocation13 + $0x10] sm:$0xf]
        %v2298 = vld [vmem:[#allocation13 + $0x14] sm:$0xf]
        %v2299 = vld [vmem:[#allocation13 + $0x18] sm:$0xf]
        %v2300 = vld [vmem:[#allocation13 + $0x1c] sm:$0xf]
        %v2301 = vld [vmem:[#allocation13 + $0x20] sm:$0xf]
        %v2302 = vld [vmem:[#allocation13 + $0x24] sm:$0xf]
        %v2303 = vld [vmem:[#allocation13 + $0x28] sm:$0xf]
        %v2304 = vld [vmem:[#allocation13 + $0x2c] sm:$0xf]
        %v2305 = vld [vmem:[#allocation13 + $0x30] sm:$0xf]
        %v2306 = vld [vmem:[#allocation13 + $0x34] sm:$0xf]
        %v2307 = vld [vmem:[#allocation13 + $0x38] sm:$0xf]
        %v2308 = vld [vmem:[#allocation13 + $0x3c] sm:$0xf]
        %v2309 = vld [vmem:[%s11] sm:$0x1]
        %v2311 = vlaneseq
        %v2312 = vshrl.u32 %v2311, 7
        %v2313 = vsub.s32 0, %v2312
        %v2314 = vrot.slane %v2309, %v2313
        %v2332 = vunpack.c.l.b16 %v2293
        %v2333 = vunpack.c.l.b16 %v2294
        %v2334 = vunpack.c.l.b16 %v2295
        %v2335 = vunpack.c.l.b16 %v2296
        %v2336 = vunpack.c.l.b16 %v2297
        %v2337 = vunpack.c.l.b16 %v2298
        %v2338 = vunpack.c.l.b16 %v2299
        %v2339 = vunpack.c.l.b16 %v2300
        %v2340 = vunpack.c.l.b16 %v2301
        %v2341 = vunpack.c.l.b16 %v2302
        %v2342 = vunpack.c.l.b16 %v2303
        %v2343 = vunpack.c.l.b16 %v2304
        %v2344 = vunpack.c.l.b16 %v2305
        %v2345 = vunpack.c.l.b16 %v2306
        %v2346 = vunpack.c.l.b16 %v2307
        %v2347 = vunpack.c.l.b16 %v2308
        %v2348 = vpack.c.b16 %v2333, %v2332
        %v2349 = vpack.c.b16 %v2335, %v2334
        %v2350 = vpack.c.b16 %v2337, %v2336
        %v2351 = vpack.c.b16 %v2339, %v2338
        %v2352 = vpack.c.b16 %v2341, %v2340
        %v2353 = vpack.c.b16 %v2343, %v2342
        %v2354 = vpack.c.b16 %v2345, %v2344
        %v2355 = vpack.c.b16 %v2347, %v2346
        %2364 = vmatprep.subr.bf16.mxu0 0
        %2365 = vmatpush1.bf16.msra.mxu0 %v2348
        %2366 = vmatprep.subr.bf16.mxu0 0
        %2367 = vmatpush1.bf16.msra.mxu0 %v2349
        %2368 = vmatprep.subr.bf16.mxu0 0
        %2369 = vmatpush1.bf16.msra.mxu0 %v2350
        %2370 = vmatprep.subr.bf16.mxu0 0
        %2371 = vmatpush1.bf16.msra.mxu0 %v2351
        %2372 = vmatprep.subr.bf16.mxu0 0
        %2373 = vmatpush1.bf16.msra.mxu0 %v2352
        %2374 = vmatprep.subr.bf16.mxu0 0
        %2375 = vmatpush1.bf16.msra.mxu0 %v2353
        %2376 = vmatprep.subr.bf16.mxu0 0
        %2377 = vmatpush1.bf16.msra.mxu0 %v2354
        %2378 = vmatprep.subr.bf16.mxu0 0
        %2379 = vmatpush1.bf16.msra.mxu0 %v2355
        %2380 = vmatprep.subr.bf16.mxu0 0
        %2381 = vmatpush1.bf16.msra.mxu0 0
        %2382 = vmatprep.subr.bf16.mxu0 0
        %2383 = vmatpush1.bf16.msra.mxu0 0
        %2384 = vmatprep.subr.bf16.mxu0 0
        %2385 = vmatpush1.bf16.msra.mxu0 0
        %2386 = vmatprep.subr.bf16.mxu0 0
        %2387 = vmatpush1.bf16.msra.mxu0 0
        %2388 = vmatprep.subr.bf16.mxu0 0
        %2389 = vmatpush1.bf16.msra.mxu0 0
        %2390 = vmatprep.subr.bf16.mxu0 0
        %2391 = vmatpush1.bf16.msra.mxu0 0
        %2392 = vmatprep.subr.bf16.mxu0 0
        %2393 = vmatpush1.bf16.msra.mxu0 0
        %2394 = vmatprep.subr.bf16.mxu0 0
        %2395 = vmatpush1.bf16.msra.mxu0 0
        %2396 = vmatprep.mubr.bf16.mxu0 0
        %2397 = vmatmul.mubr.bf16.gmra.mrb[0].mxu0 %v2292
        %v2398 = vpop.f32.mrb[0].mxu0
        %v2399 = vadd.f32 %v2314, %v2398
        %v2400 = vpop.f32.mrb[0].mxu0
        %v2401 = vpop.f32.mrb[0].mxu0
        %v2402 = vpop.f32.mrb[0].mxu0
        %2403 = vdwg.mxu0
        %2404 = vst [vmem:[%s543] sm:$0xff] %v2399
        %s2405 = sand.u32 %s304, 1
        %s2406 = scalar_lea.sflag [#allocation4], %s2405
        %s2407 = sand.u32 %s304, 1
        %s2408 = smul.addr %s2407, 8
        %s2409 = scalar_lea.vmem [#allocation14], %s2408
        // Predicated region
        $region97: #{tpu_custom_call.1} parent=67 // pred_check
          %p2410 = pneg %p314
        $region98: #{tpu_custom_call.1} parent=67 // pred_check_branch
          %2412 = sbr.rel (%p2410) target = $region100
        $region99: #{tpu_custom_call.1} parent=67 // pred_region
          %s2414 = ssub.s32 128, 128
          %2415 = vsyncadd %s2406, %s2414
          %s2416 = smul.addr %s34, 128
          %s2417 = scalar_lea.hbm %s12, %s2416
          %s2419 = sshll.u32 %s2409, 4
          %s2420 = int_to_ptr.vmem [resolvable:$true] %s2419
          %2422 = dma.vmem_to_hbm [thread:$0]  %s2420, 128, %s2417, %s2406
        $region100: #{tpu_custom_call.1} parent=67 // pred_fallthru
          _
      $region68: #{tpu_custom_call.1} parent=5 // pred_fallthru
        _
      %p2423 = scmp.le.s32.totalorder 2, %s29
      // Predicated region
      $region101: #{tpu_custom_call.1} parent=5 // pred_check
        %p2424 = pneg %p2423
      $region102: #{tpu_custom_call.1} parent=5 // pred_check_branch
        %2426 = sbr.rel (%p2424) target = $region104
      $region103: #{tpu_custom_call.1} parent=5 // pred_region
        %s2427 = ssub.s32 %s29, 2
        // Predicated region
        $region105: #{tpu_custom_call.1} parent=103 // pred_check
          %p2428 = pneg %p320
        $region106: #{tpu_custom_call.1} parent=103 // pred_check_branch
          %2430 = sbr.rel (%p2428) target = $region108
        $region107: #{tpu_custom_call.1} parent=103 // pred_region
          %s2431 = sand.u32 %s305, 1
          %s2432 = scalar_lea.sflag [#allocation4], %s2431
          %s2433 = sand.u32 %s305, 1
          %s2434 = smul.addr %s2433, 8
          %s2435 = scalar_lea.vmem [#allocation14], %s2434
          %2436 = dma.done %s2432, 128
        $region108: #{tpu_custom_call.1} parent=103 // pred_fallthru
          _
      $region104: #{tpu_custom_call.1} parent=5 // pred_fallthru
        _
    $region6: #{tpu_custom_call.1} parent=1 // loop_footer
      %s33 = sadd.s32 1, %s29
    $region7: #{tpu_custom_call.1} parent=1 // loop_footer_branch
      %28 = sbr.rel target = $region3
    $region8: #{tpu_custom_call.1} parent=1 // loop_exit
      _
    %2437 = vsyncpa [#allocation3], 1
    %s2438 = scalar_lea.sflag [#allocation3], 1
    %2439 = vsyncpa %s2438, 1
    %2440 = vsyncpa [#allocation6], 1
    %s2441 = scalar_lea.sflag [#allocation6], 1
    %2442 = vsyncpa %s2441, 1
    %2443 = vsyncpa [#allocation9], 1
    %2444 = vsyncpa [#allocation12], 1
    %2445 = vsyncpa [#allocation4], 1
    %s2446 = scalar_lea.sflag [#allocation4], 1
    %2447 = vsyncpa %s2446, 1

</llo_original>
